<compile_context>
chip_gen: v6e
topology: v6e:2x2x1
jax: 0.10.0
libtpu: 0.0.40
codegen_flags: <defaults>
</compile_context>

<pallas_src>
import jax
import jax.numpy as jnp
from jax.experimental import pallas as pl
from jax.experimental.pallas import tpu as pltpu

NEG_INF = jnp.float32(-1e9)


# ----------------------------- Pallas kernel -------------------------------

def _decoder_block_kernel(gx_ref, enc_ref, bias_ref, h0_ref, c0_ref,
                          w_in_ref, w_hh_ref, b_ref,
                          w_ain_ref, w_actx_ref, w_ahid_ref,
                          y_ref, h_sc, c_sc, feed_sc):
    """Processes T_BLK decoder timesteps per grid step.

    Recurrent state (per-layer h/c and the attention input-feed) is carried
    across grid steps in VMEM scratch.  gx_ref holds the pre-computed
    x_t @ W_x + b for layer 0 (gates packed as i, f, o, g).
    """
    L, _, H = h_sc.shape
    t_blk = gx_ref.shape[0]

    @pl.when(pl.program_id(0) == 0)
    def _():
        h_sc[...] = h0_ref[...]                      # prev_hiddens <- encoder_hiddens
        c_sc[...] = c0_ref[...]                      # prev_cells   <- encoder_cells
        feed_sc[...] = jnp.zeros_like(feed_sc)       # input_feed   <- 0

    enc = enc_ref[...]                               # (bsz, srclen, H) VMEM resident
    attn_bias = bias_ref[...]                        # (bsz, srclen)  0 / -1e9

    # Static unroll over the timestep block (amortizes grid-step + DMA overhead).
    for tt in range(t_blk):
        inp = feed_sc[...]                           # layer-0 extra input = input_feed
        gx_t = gx_ref[tt]                            # (bsz, 4H)

        for l in range(L):
            base = gx_t if l == 0 else b_ref[l]      # layer-0 bias folded into gx
            h_prev = h_sc[l]
            c_prev = c_sc[l]
            gates = (base
                     + jnp.dot(inp.astype(jnp.bfloat16), w_in_ref[l],
                               preferred_element_type=jnp.float32)
                     + jnp.dot(h_prev.astype(jnp.bfloat16), w_hh_ref[l],
                               preferred_element_type=jnp.float32))   # (bsz, 4H)
            sig = jax.nn.sigmoid(gates[:, :3 * H])   # (i, f, o) contiguous slice
            i_g = sig[:, 0:H]
            f_g = sig[:, H:2 * H]
            o_g = sig[:, 2 * H:3 * H]
            g_g = jnp.tanh(gates[:, 3 * H:])
            c_new = f_g * c_prev + i_g * g_g
            h_new = o_g * jnp.tanh(c_new)
            h_sc[l] = h_new
            c_sc[l] = c_new
            inp = h_new                              # next layer input (dropout_out=0)

        hidden = inp                                 # top-layer hidden state

        # --------------------------- AttentionLayer ------------------------
        s = jnp.dot(hidden.astype(jnp.bfloat16), w_ain_ref[...],
                    preferred_element_type=jnp.float32)               # (bsz, H)
        scores = jnp.sum(enc * s[:, None, :], axis=-1) + attn_bias     # (bsz, srclen)
        m = jnp.max(scores, axis=-1, keepdims=True)
        e = jnp.exp(scores - m)
        p = e / jnp.sum(e, axis=-1, keepdims=True)                     # softmax over src
        ctx = jnp.sum(p[:, :, None] * enc, axis=1)                     # (bsz, H)
        out = jnp.tanh(
            jnp.dot(ctx.astype(jnp.bfloat16), w_actx_ref[...],
                    preferred_element_type=jnp.float32)
            + jnp.dot(hidden.astype(jnp.bfloat16), w_ahid_ref[...],
                      preferred_element_type=jnp.float32))             # (bsz, H)

        feed_sc[...] = out                           # input feeding
        y_ref[tt] = out


def decoder_recurrence(gx0, enc_bmaj, attn_bias, enc_h, enc_c, params, *, t_blk=4):
    """Runs the serial decoder recurrence (LSTM stack + attention + input feed)."""
    seq_len, bsz, four_h = gx0.shape
    H = four_h // 4
    L = enc_h.shape[0]
    srclen = enc_bmaj.shape[1]

    t_blk = max(1, min(t_blk, seq_len))
    seq_pad = ((seq_len + t_blk - 1) // t_blk) * t_blk
    if seq_pad != seq_len:
        gx0 = jnp.pad(gx0, ((0, seq_pad - seq_len), (0, 0), (0, 0)))
    n_blocks = seq_pad // t_blk

    const3 = lambda b: (0, 0, 0)
    const2 = lambda b: (0, 0)

    grid_spec = pltpu.PrefetchScalarGridSpec(
        num_scalar_prefetch=0,
        grid=(n_blocks,),
        in_specs=[
            pl.BlockSpec((t_blk, bsz, 4 * H), lambda b: (b, 0, 0)),   # hoisted gates_x
            pl.BlockSpec((bsz, srclen, H), const3),                   # encoder outs
            pl.BlockSpec((bsz, srclen), const2),                      # attention bias
            pl.BlockSpec((L, bsz, H), const3),                        # h0
            pl.BlockSpec((L, bsz, H), const3),                        # c0
            pl.BlockSpec((L, H, 4 * H), const3),                      # W_in  (bf16)
            pl.BlockSpec((L, H, 4 * H), const3),                      # W_hh  (bf16)
            pl.BlockSpec((L, 1, 4 * H), const3),                      # biases (f32)
            pl.BlockSpec((H, H), const2),                             # attn input_proj
            pl.BlockSpec((H, H), const2),                             # attn out_proj (ctx)
            pl.BlockSpec((H, H), const2),                             # attn out_proj (hid)
        ],
        out_specs=pl.BlockSpec((t_blk, bsz, H), lambda b: (b, 0, 0)),
        scratch_shapes=[
            pltpu.VMEM((L, bsz, H), jnp.float32),    # h state
            pltpu.VMEM((L, bsz, H), jnp.float32),    # c state
            pltpu.VMEM((bsz, H), jnp.float32),       # input_feed
        ],
    )

    outs = pl.pallas_call(
        _decoder_block_kernel,
        out_shape=jax.ShapeDtypeStruct((seq_pad, bsz, H), jnp.float32),
        grid_spec=grid_spec,
        compiler_params=pltpu.CompilerParams(
            dimension_semantics=("arbitrary",),      # serial recurrent carry
            vmem_limit_bytes=32 * 1024 * 1024),
    )(gx0, enc_bmaj, attn_bias, enc_h, enc_c,
      params['w_in_all'], params['w_hh_all'], params['b_all'],
      params['w_attn_in_t'], params['w_attn_ctx_t'], params['w_attn_hid_t'])
    return outs[:seq_len]


# ---------------------------- parameter setup ------------------------------

def _reorder_ifgo_to_ifog(w, axis=0):
    i, f, g, o = jnp.split(w, 4, axis=axis)
    return jnp.concatenate([i, f, o, g], axis=axis)


def init_params(key, n_words, embed_dim, hidden_size, n_layers, pad_idx):
    E, H, L = embed_dim, hidden_size, n_layers
    assert H != E, "LSTMDecoder.forward requires additional_fc (hidden_size != embed_dim)"
    keys = list(jax.random.split(key, 1 + 4 * L + 4))
    ki = iter(keys)

    emb = jax.random.normal(next(ki), (n_words, E), jnp.float32) * (E ** -0.5)
    emb = emb.at[pad_idx].set(0.0)

    def unif(k, shape):
        return jax.random.uniform(k, shape, jnp.float32, -0.1, 0.1)

    w_in_list, w_hh_list, b_list = [], [], []
    w_x0_t, b0 = None, None
    for l in range(L):
        in_dim = (H + E) if l == 0 else H                    # cat(x, input_feed) for layer 0
        w_ih = _reorder_ifgo_to_ifog(unif(next(ki), (4 * H, in_dim)))
        w_hh = _reorder_ifgo_to_ifog(unif(next(ki), (4 * H, H)))
        b_ih = unif(next(ki), (4 * H,))
        b_hh = unif(next(ki), (4 * H,))
        bias = _reorder_ifgo_to_ifog(b_ih + b_hh)
        if l == 0:
            # Split layer-0 input weight: x part is hoisted out of the recurrence
            # (bias folded into the hoisted GEMM), input-feed part stays in-kernel.
            w_x0_t = w_ih[:, :E].T.astype(jnp.bfloat16)      # (E, 4H)
            w_in_list.append(w_ih[:, E:].T)                  # (H, 4H)
            b0 = bias
            b_list.append(jnp.zeros((1, 4 * H), jnp.float32))
        else:
            w_in_list.append(w_ih.T)
            b_list.append(bias[None, :])
        w_hh_list.append(w_hh.T)

    w_attn_in = unif(next(ki), (H, H))        # AttentionLayer.input_proj.weight
    w_attn_out = unif(next(ki), (H, 2 * H))   # AttentionLayer.output_proj.weight
    w_fc = unif(next(ki), (E, H))             # additional_fc.weight
    b_fc = unif(next(ki), (E,))               # additional_fc.bias

    return {
        'emb': emb,
        'w_x0_t': w_x0_t,                                         # (E, 4H) bf16
        'b0': b0,                                                 # (4H,)   f32
        'w_in_all': jnp.stack(w_in_list).astype(jnp.bfloat16),    # (L, H, 4H)
        'w_hh_all': jnp.stack(w_hh_list).astype(jnp.bfloat16),    # (L, H, 4H)
        'b_all': jnp.stack(b_list),                               # (L, 1, 4H) f32
        'w_attn_in_t': w_attn_in.T.astype(jnp.bfloat16),          # (H, H)
        'w_attn_ctx_t': w_attn_out[:, :H].T.astype(jnp.bfloat16), # (H, H)
        'w_attn_hid_t': w_attn_out[:, H:].T.astype(jnp.bfloat16), # (H, H)
        'w_fc_t': w_fc.T,                                         # (H, E) f32
        'b_fc': b_fc,                                             # (E,)   f32
    }


# ------------------------------ forward pass -------------------------------

def _bf16_dot(a, b):
    return jnp.dot(a.astype(jnp.bfloat16), b.astype(jnp.bfloat16),
                   preferred_element_type=jnp.float32)


def lstm_decoder_forward(params, encoder_out, encoder_padding_mask,
                         prev_output_tokens, *, t_blk=4):
    encoder_outs, encoder_hiddens, encoder_cells = encoder_out
    seq_len, bsz = prev_output_tokens.shape
    H = encoder_hiddens.shape[-1]

    x = params['emb'][prev_output_tokens]                          # (seq, bsz, E)
    # TODO(synk): F.dropout (dropout_in / dropout_out) omitted (eval mode, p = 0).

    # Hoisted layer-0 input projection: one big GEMM over the whole sequence.
    gx0 = (_bf16_dot(x.reshape(seq_len * bsz, -1), params['w_x0_t'])
           .reshape(seq_len, bsz, 4 * H) + params['b0'])

    enc_bmaj = jnp.transpose(encoder_outs, (1, 0, 2)).astype(jnp.float32)   # (bsz, srclen, H)
    attn_bias = jnp.where(encoder_padding_mask, NEG_INF, jnp.float32(0.0))  # masked_fill(-inf)

    outs = decoder_recurrence(gx0, enc_bmaj, attn_bias,
                              encoder_hiddens.astype(jnp.float32),
                              encoder_cells.astype(jnp.float32),
                              params, t_blk=t_blk)                 # (seq, bsz, H)

    # additional_fc + projection onto the embedding matrix (large non-recurrent GEMMs).
    xf = outs @ params['w_fc_t'] + params['b_fc']                  # (seq, bsz, E)
    logits = xf @ params['emb'].T                                  # (seq, bsz, n_words)
    return logits


# -------------------------- pure-JAX reference -----------------------------

def reference_forward(params, encoder_out, encoder_padding_mask, prev_output_tokens):
    encoder_outs, encoder_hiddens, encoder_cells = encoder_out
    seq_len, bsz = prev_output_tokens.shape
    H = encoder_hiddens.shape[-1]
    L = encoder_hiddens.shape[0]

    x = params['emb'][prev_output_tokens]
    gx0 = (_bf16_dot(x.reshape(seq_len * bsz, -1), params['w_x0_t'])
           .reshape(seq_len, bsz, 4 * H) + params['b0'])
    enc_bmaj = jnp.transpose(encoder_outs, (1, 0, 2)).astype(jnp.float32)
    attn_bias = jnp.where(encoder_padding_mask, NEG_INF, jnp.float32(0.0))

    w_in, w_hh, b_all = params['w_in_all'], params['w_hh_all'], params['b_all']

    def step(carry, gx_t):
        h, c, feed = carry
        inp = feed
        hs, cs = [], []
        for l in range(L):
            base = gx_t if l == 0 else b_all[l]
            gates = base + _bf16_dot(inp, w_in[l]) + _bf16_dot(h[l], w_hh[l])
            sig = jax.nn.sigmoid(gates[:, :3 * H])
            i_g, f_g, o_g = sig[:, :H], sig[:, H:2 * H], sig[:, 2 * H:3 * H]
            g_g = jnp.tanh(gates[:, 3 * H:])
            c_new = f_g * c[l] + i_g * g_g
            h_new = o_g * jnp.tanh(c_new)
            hs.append(h_new)
            cs.append(c_new)
            inp = h_new
        hidden = inp
        s = _bf16_dot(hidden, params['w_attn_in_t'])
        scores = jnp.sum(enc_bmaj * s[:, None, :], axis=-1) + attn_bias
        p = jax.nn.softmax(scores, axis=-1)
        ctx = jnp.sum(p[:, :, None] * enc_bmaj, axis=1)
        out = jnp.tanh(_bf16_dot(ctx, params['w_attn_ctx_t'])
                       + _bf16_dot(hidden, params['w_attn_hid_t']))
        return (jnp.stack(hs), jnp.stack(cs), out), out

    init = (encoder_hiddens.astype(jnp.float32),
            encoder_cells.astype(jnp.float32),
            jnp.zeros((bsz, H), jnp.float32))
    _, outs = jax.lax.scan(step, init, gx0)
    xf = outs @ params['w_fc_t'] + params['b_fc']
    return xf @ params['emb'].T


# ---------------------------------- main ------------------------------------

if __name__ == "__main__":
    n_words, embed_dim, hidden_dim, n_layers, pad_idx = 50, 16, 16, 2, 1
    hidden_size = 2 * hidden_dim                     # args.hidden_dim * 2
    seq_len, bsz, srclen = 8, 2, 8

    key = jax.random.PRNGKey(0)
    k_par, k_tok, k_eo, k_eh, k_ec = jax.random.split(key, 5)

    params = init_params(k_par, n_words, embed_dim, hidden_size, n_layers, pad_idx)

    prev_output_tokens = jax.random.randint(k_tok, (seq_len, bsz), 2, n_words,
                                            dtype=jnp.int32)

    # Synthetic encoder outputs (encoder_output_units == hidden_size in this model).
    encoder_outs = jax.random.normal(k_eo, (srclen, bsz, hidden_size), jnp.float32) * 0.5
    encoder_hiddens = jax.random.normal(k_eh, (n_layers, bsz, hidden_size), jnp.float32) * 0.5
    encoder_cells = jax.random.normal(k_ec, (n_layers, bsz, hidden_size), jnp.float32) * 0.5
    src_lengths = jnp.array([srclen, 5], dtype=jnp.int32)
    encoder_padding_mask = jnp.arange(srclen)[None, :] >= src_lengths[:, None]   # (bsz, srclen)
    encoder_out = (encoder_outs, encoder_hiddens, encoder_cells)

    logits = lstm_decoder_forward(params, encoder_out, encoder_padding_mask,
                                  prev_output_tokens, t_blk=4)
    jax.block_until_ready(logits)

    ref = reference_forward(params, encoder_out, encoder_padding_mask, prev_output_tokens)
    md = float(jnp.max(jnp.abs(logits - ref)))
    assert logits.shape == (seq_len, bsz, n_words)
    assert md < 2e-2, f"mismatch vs lax.scan reference, max abs diff = {md}"

    print("KERNEL_OK")
</pallas_src>

<mosaic_0001>
module attributes {stable_mosaic.version = 11 : i64} {
  func.func @_decoder_block_kernel(%arg0: i32, %arg1: memref<4x2x128xf32, #tpu.memory_space<vmem>>, %arg2: memref<2x8x32xf32, #tpu.memory_space<vmem>>, %arg3: memref<2x8xf32, #tpu.memory_space<vmem>>, %arg4: memref<2x2x32xf32, #tpu.memory_space<vmem>>, %arg5: memref<2x2x32xf32, #tpu.memory_space<vmem>>, %arg6: memref<2x32x128xbf16, #tpu.memory_space<vmem>>, %arg7: memref<2x32x128xbf16, #tpu.memory_space<vmem>>, %arg8: memref<2x1x128xf32, #tpu.memory_space<vmem>>, %arg9: memref<32x32xbf16, #tpu.memory_space<vmem>>, %arg10: memref<32x32xbf16, #tpu.memory_space<vmem>>, %arg11: memref<32x32xbf16, #tpu.memory_space<vmem>>, %arg12: memref<4x2x32xf32, #tpu.memory_space<vmem>>, %arg13: memref<2x2x32xf32, #tpu.memory_space<vmem>>, %arg14: memref<2x2x32xf32, #tpu.memory_space<vmem>>, %arg15: memref<2x32xf32, #tpu.memory_space<vmem>>) attributes {dimension_semantics = [#tpu.dimension_semantics<arbitrary>], iteration_bounds = array<i64: 2>, scalar_prefetch = 0 : i64, scratch_operands = 3 : i64, tpu.core_type = #tpu.core_type<tc>, window_params = [{transform_indices = @transform_0, window_bounds = array<i64: 4, 2, 128>}, {pipeline_mode = #tpu.pipeline_mode<synchronous>, transform_indices = @transform_1, window_bounds = array<i64: 2, 8, 32>}, {pipeline_mode = #tpu.pipeline_mode<synchronous>, transform_indices = @transform_2, window_bounds = array<i64: 2, 8>}, {pipeline_mode = #tpu.pipeline_mode<synchronous>, transform_indices = @transform_3, window_bounds = array<i64: 2, 2, 32>}, {pipeline_mode = #tpu.pipeline_mode<synchronous>, transform_indices = @transform_4, window_bounds = array<i64: 2, 2, 32>}, {pipeline_mode = #tpu.pipeline_mode<synchronous>, transform_indices = @transform_5, window_bounds = array<i64: 2, 32, 128>}, {pipeline_mode = #tpu.pipeline_mode<synchronous>, transform_indices = @transform_6, window_bounds = array<i64: 2, 32, 128>}, {pipeline_mode = #tpu.pipeline_mode<synchronous>, transform_indices = @transform_7, window_bounds = array<i64: 2, 1, 128>}, {pipeline_mode = #tpu.pipeline_mode<synchronous>, transform_indices = @transform_8, window_bounds = array<i64: 32, 32>}, {pipeline_mode = #tpu.pipeline_mode<synchronous>, transform_indices = @transform_9, window_bounds = array<i64: 32, 32>}, {pipeline_mode = #tpu.pipeline_mode<synchronous>, transform_indices = @transform_10, window_bounds = array<i64: 32, 32>}, {transform_indices = @transform_11, window_bounds = array<i64: 4, 2, 32>}]} {
    %c0_i32 = arith.constant 0 : i32
    %0 = arith.cmpi eq, %arg0, %c0_i32 : i32
    %1 = arith.extui %0 : i1 to i32
    %c0_i32_0 = arith.constant 0 : i32
    %2 = arith.cmpi ne, %1, %c0_i32_0 : i32
    scf.if %2 {
      %c0_273 = arith.constant 0 : index
      %c0_274 = arith.constant 0 : index
      %c0_275 = arith.constant 0 : index
      %449 = vector.load %arg4[%c0_273, %c0_274, %c0_275] : memref<2x2x32xf32, #tpu.memory_space<vmem>>, vector<2x2x32xf32>
      %c0_276 = arith.constant 0 : index
      %c0_277 = arith.constant 0 : index
      %c0_278 = arith.constant 0 : index
      %450 = vector.load %arg13[%c0_276, %c0_277, %c0_278] : memref<2x2x32xf32, #tpu.memory_space<vmem>>, vector<2x2x32xf32>
      tpu.vector_store %arg13[%c0_276, %c0_277, %c0_278], %449 {strides = array<i32>} : memref<2x2x32xf32, #tpu.memory_space<vmem>>, vector<2x2x32xf32>,
      %c0_279 = arith.constant 0 : index
      %c0_280 = arith.constant 0 : index
      %c0_281 = arith.constant 0 : index
      %451 = vector.load %arg5[%c0_279, %c0_280, %c0_281] : memref<2x2x32xf32, #tpu.memory_space<vmem>>, vector<2x2x32xf32>
      %c0_282 = arith.constant 0 : index
      %c0_283 = arith.constant 0 : index
      %c0_284 = arith.constant 0 : index
      %452 = vector.load %arg14[%c0_282, %c0_283, %c0_284] : memref<2x2x32xf32, #tpu.memory_space<vmem>>, vector<2x2x32xf32>
      tpu.vector_store %arg14[%c0_282, %c0_283, %c0_284], %451 {strides = array<i32>} : memref<2x2x32xf32, #tpu.memory_space<vmem>>, vector<2x2x32xf32>,
      %cst_285 = arith.constant 0.000000e+00 : f32
      %453 = vector.broadcast %cst_285 : f32 to vector<2x32xf32>
      %c0_286 = arith.constant 0 : index
      %c0_287 = arith.constant 0 : index
      %454 = vector.load %arg15[%c0_286, %c0_287] : memref<2x32xf32, #tpu.memory_space<vmem>>, vector<2x32xf32>
      tpu.vector_store %arg15[%c0_286, %c0_287], %453 {strides = array<i32>} : memref<2x32xf32, #tpu.memory_space<vmem>>, vector<2x32xf32>,
    } else {
    }
    %c0 = arith.constant 0 : index
    %c0_1 = arith.constant 0 : index
    %c0_2 = arith.constant 0 : index
    %3 = vector.load %arg2[%c0, %c0_1, %c0_2] : memref<2x8x32xf32, #tpu.memory_space<vmem>>, vector<2x8x32xf32>
    %c0_3 = arith.constant 0 : index
    %c0_4 = arith.constant 0 : index
    %4 = vector.load %arg3[%c0_3, %c0_4] : memref<2x8xf32, #tpu.memory_space<vmem>>, vector<2x8xf32>
    %c0_5 = arith.constant 0 : index
    %c0_6 = arith.constant 0 : index
    %5 = vector.load %arg15[%c0_5, %c0_6] : memref<2x32xf32, #tpu.memory_space<vmem>>, vector<2x32xf32>
    %c0_7 = arith.constant 0 : index
    %c0_8 = arith.constant 0 : index
    %c0_9 = arith.constant 0 : index
    %6 = vector.load %arg1[%c0_7, %c0_8, %c0_9] : memref<4x2x128xf32, #tpu.memory_space<vmem>>, vector<1x2x128xf32>
    %7 = vector.shape_cast %6 : vector<1x2x128xf32> to vector<2x128xf32>
    %c0_10 = arith.constant 0 : index
    %c0_11 = arith.constant 0 : index
    %c0_12 = arith.constant 0 : index
    %8 = vector.load %arg13[%c0_10, %c0_11, %c0_12] : memref<2x2x32xf32, #tpu.memory_space<vmem>>, vector<1x2x32xf32>
    %9 = vector.shape_cast %8 : vector<1x2x32xf32> to vector<2x32xf32>
    %c0_13 = arith.constant 0 : index
    %c0_14 = arith.constant 0 : index
    %c0_15 = arith.constant 0 : index
    %10 = vector.load %arg14[%c0_13, %c0_14, %c0_15] : memref<2x2x32xf32, #tpu.memory_space<vmem>>, vector<1x2x32xf32>
    %11 = vector.shape_cast %10 : vector<1x2x32xf32> to vector<2x32xf32>
    %12 = arith.truncf %5 : vector<2x32xf32> to vector<2x32xbf16>
    %c0_16 = arith.constant 0 : index
    %c0_17 = arith.constant 0 : index
    %c0_18 = arith.constant 0 : index
    %13 = vector.load %arg6[%c0_16, %c0_17, %c0_18] : memref<2x32x128xbf16, #tpu.memory_space<vmem>>, vector<1x32x128xbf16>
    %14 = vector.shape_cast %13 : vector<1x32x128xbf16> to vector<32x128xbf16>
    %cst = arith.constant dense<0.000000e+00> : vector<2x128xf32>
    %15 = tpu.matmul %12, %14, %cst {dimension_numbers = #tpu.dot_dimension_numbers<[1], [0], [0], [1], [0, 0, 1, 1], [], []>} : vector<2x32xbf16>, vector<32x128xbf16>, vector<2x128xf32> -> vector<2x128xf32>
    %16 = arith.addf %7, %15 : vector<2x128xf32>
    %17 = arith.truncf %9 : vector<2x32xf32> to vector<2x32xbf16>
    %c0_19 = arith.constant 0 : index
    %c0_20 = arith.constant 0 : index
    %c0_21 = arith.constant 0 : index
    %18 = vector.load %arg7[%c0_19, %c0_20, %c0_21] : memref<2x32x128xbf16, #tpu.memory_space<vmem>>, vector<1x32x128xbf16>
    %19 = vector.shape_cast %18 : vector<1x32x128xbf16> to vector<32x128xbf16>
    %cst_22 = arith.constant dense<0.000000e+00> : vector<2x128xf32>
    %20 = tpu.matmul %17, %19, %cst_22 {dimension_numbers = #tpu.dot_dimension_numbers<[1], [0], [0], [1], [0, 0, 1, 1], [], []>} : vector<2x32xbf16>, vector<32x128xbf16>, vector<2x128xf32> -> vector<2x128xf32>
    %21 = arith.addf %16, %20 : vector<2x128xf32>
    %22 = vector.extract_strided_slice %21 {offsets = [0, 0], sizes = [2, 96], strides = [1, 1]} : vector<2x128xf32> to vector<2x96xf32>
    %23 = arith.negf %22 : vector<2x96xf32>
    %24 = math.exp %23 : vector<2x96xf32>
    %cst_23 = arith.constant 1.000000e+00 : f32
    %25 = vector.broadcast %cst_23 : f32 to vector<2x96xf32>
    %26 = arith.addf %25, %24 : vector<2x96xf32>
    %27 = arith.divf %25, %26 : vector<2x96xf32>
    %28 = vector.extract_strided_slice %27 {offsets = [0, 0], sizes = [2, 32], strides = [1, 1]} : vector<2x96xf32> to vector<2x32xf32>
    %29 = vector.extract_strided_slice %27 {offsets = [0, 32], sizes = [2, 32], strides = [1, 1]} : vector<2x96xf32> to vector<2x32xf32>
    %30 = vector.extract_strided_slice %27 {offsets = [0, 64], sizes = [2, 32], strides = [1, 1]} : vector<2x96xf32> to vector<2x32xf32>
    %31 = vector.extract_strided_slice %21 {offsets = [0, 96], sizes = [2, 32], strides = [1, 1]} : vector<2x128xf32> to vector<2x32xf32>
    %32 = math.tanh %31 : vector<2x32xf32>
    %33 = arith.mulf %29, %11 : vector<2x32xf32>
    %34 = arith.mulf %28, %32 : vector<2x32xf32>
    %35 = arith.addf %33, %34 : vector<2x32xf32>
    %36 = math.tanh %35 : vector<2x32xf32>
    %37 = arith.mulf %30, %36 : vector<2x32xf32>
    %c0_24 = arith.constant 0 : index
    %c0_25 = arith.constant 0 : index
    %c0_26 = arith.constant 0 : index
    %38 = vector.load %arg13[%c0_24, %c0_25, %c0_26] : memref<2x2x32xf32, #tpu.memory_space<vmem>>, vector<1x2x32xf32>
    %39 = vector.shape_cast %38 : vector<1x2x32xf32> to vector<2x32xf32>
    %40 = vector.shape_cast %37 : vector<2x32xf32> to vector<1x2x32xf32>
    tpu.vector_store %arg13[%c0_24, %c0_25, %c0_26], %40 {strides = array<i32>} : memref<2x2x32xf32, #tpu.memory_space<vmem>>, vector<1x2x32xf32>,
    %c0_27 = arith.constant 0 : index
    %c0_28 = arith.constant 0 : index
    %c0_29 = arith.constant 0 : index
    %41 = vector.load %arg14[%c0_27, %c0_28, %c0_29] : memref<2x2x32xf32, #tpu.memory_space<vmem>>, vector<1x2x32xf32>
    %42 = vector.shape_cast %41 : vector<1x2x32xf32> to vector<2x32xf32>
    %43 = vector.shape_cast %35 : vector<2x32xf32> to vector<1x2x32xf32>
    tpu.vector_store %arg14[%c0_27, %c0_28, %c0_29], %43 {strides = array<i32>} : memref<2x2x32xf32, #tpu.memory_space<vmem>>, vector<1x2x32xf32>,
    %c1 = arith.constant 1 : index
    %c0_30 = arith.constant 0 : index
    %c0_31 = arith.constant 0 : index
    %44 = vector.load %arg8[%c1, %c0_30, %c0_31] : memref<2x1x128xf32, #tpu.memory_space<vmem>>, vector<1x1x128xf32>
    %45 = vector.shape_cast %44 : vector<1x1x128xf32> to vector<1x128xf32>
    %c1_32 = arith.constant 1 : index
    %c0_33 = arith.constant 0 : index
    %c0_34 = arith.constant 0 : index
    %46 = vector.load %arg13[%c1_32, %c0_33, %c0_34] : memref<2x2x32xf32, #tpu.memory_space<vmem>>, vector<1x2x32xf32>
    %47 = vector.shape_cast %46 : vector<1x2x32xf32> to vector<2x32xf32>
    %c1_35 = arith.constant 1 : index
    %c0_36 = arith.constant 0 : index
    %c0_37 = arith.constant 0 : index
    %48 = vector.load %arg14[%c1_35, %c0_36, %c0_37] : memref<2x2x32xf32, #tpu.memory_space<vmem>>, vector<1x2x32xf32>
    %49 = vector.shape_cast %48 : vector<1x2x32xf32> to vector<2x32xf32>
    %50 = arith.truncf %37 : vector<2x32xf32> to vector<2x32xbf16>
    %c1_38 = arith.constant 1 : index
    %c0_39 = arith.constant 0 : index
    %c0_40 = arith.constant 0 : index
    %51 = vector.load %arg6[%c1_38, %c0_39, %c0_40] : memref<2x32x128xbf16, #tpu.memory_space<vmem>>, vector<1x32x128xbf16>
    %52 = vector.shape_cast %51 : vector<1x32x128xbf16> to vector<32x128xbf16>
    %cst_41 = arith.constant dense<0.000000e+00> : vector<2x128xf32>
    %53 = tpu.matmul %50, %52, %cst_41 {dimension_numbers = #tpu.dot_dimension_numbers<[1], [0], [0], [1], [0, 0, 1, 1], [], []>} : vector<2x32xbf16>, vector<32x128xbf16>, vector<2x128xf32> -> vector<2x128xf32>
    %54 = vector.broadcast %45 : vector<1x128xf32> to vector<2x128xf32>
    %55 = arith.addf %54, %53 : vector<2x128xf32>
    %56 = arith.truncf %47 : vector<2x32xf32> to vector<2x32xbf16>
    %c1_42 = arith.constant 1 : index
    %c0_43 = arith.constant 0 : index
    %c0_44 = arith.constant 0 : index
    %57 = vector.load %arg7[%c1_42, %c0_43, %c0_44] : memref<2x32x128xbf16, #tpu.memory_space<vmem>>, vector<1x32x128xbf16>
    %58 = vector.shape_cast %57 : vector<1x32x128xbf16> to vector<32x128xbf16>
    %cst_45 = arith.constant dense<0.000000e+00> : vector<2x128xf32>
    %59 = tpu.matmul %56, %58, %cst_45 {dimension_numbers = #tpu.dot_dimension_numbers<[1], [0], [0], [1], [0, 0, 1, 1], [], []>} : vector<2x32xbf16>, vector<32x128xbf16>, vector<2x128xf32> -> vector<2x128xf32>
    %60 = arith.addf %55, %59 : vector<2x128xf32>
    %61 = vector.extract_strided_slice %60 {offsets = [0, 0], sizes = [2, 96], strides = [1, 1]} : vector<2x128xf32> to vector<2x96xf32>
    %62 = arith.negf %61 : vector<2x96xf32>
    %63 = math.exp %62 : vector<2x96xf32>
    %cst_46 = arith.constant 1.000000e+00 : f32
    %64 = vector.broadcast %cst_46 : f32 to vector<2x96xf32>
    %65 = arith.addf %64, %63 : vector<2x96xf32>
    %66 = arith.divf %64, %65 : vector<2x96xf32>
    %67 = vector.extract_strided_slice %66 {offsets = [0, 0], sizes = [2, 32], strides = [1, 1]} : vector<2x96xf32> to vector<2x32xf32>
    %68 = vector.extract_strided_slice %66 {offsets = [0, 32], sizes = [2, 32], strides = [1, 1]} : vector<2x96xf32> to vector<2x32xf32>
    %69 = vector.extract_strided_slice %66 {offsets = [0, 64], sizes = [2, 32], strides = [1, 1]} : vector<2x96xf32> to vector<2x32xf32>
    %70 = vector.extract_strided_slice %60 {offsets = [0, 96], sizes = [2, 32], strides = [1, 1]} : vector<2x128xf32> to vector<2x32xf32>
    %71 = math.tanh %70 : vector<2x32xf32>
    %72 = arith.mulf %68, %49 : vector<2x32xf32>
    %73 = arith.mulf %67, %71 : vector<2x32xf32>
    %74 = arith.addf %72, %73 : vector<2x32xf32>
    %75 = math.tanh %74 : vector<2x32xf32>
    %76 = arith.mulf %69, %75 : vector<2x32xf32>
    %c1_47 = arith.constant 1 : index
    %c0_48 = arith.constant 0 : index
    %c0_49 = arith.constant 0 : index
    %77 = vector.load %arg13[%c1_47, %c0_48, %c0_49] : memref<2x2x32xf32, #tpu.memory_space<vmem>>, vector<1x2x32xf32>
    %78 = vector.shape_cast %77 : vector<1x2x32xf32> to vector<2x32xf32>
    %79 = vector.shape_cast %76 : vector<2x32xf32> to vector<1x2x32xf32>
    tpu.vector_store %arg13[%c1_47, %c0_48, %c0_49], %79 {strides = array<i32>} : memref<2x2x32xf32, #tpu.memory_space<vmem>>, vector<1x2x32xf32>,
    %c1_50 = arith.constant 1 : index
    %c0_51 = arith.constant 0 : index
    %c0_52 = arith.constant 0 : index
    %80 = vector.load %arg14[%c1_50, %c0_51, %c0_52] : memref<2x2x32xf32, #tpu.memory_space<vmem>>, vector<1x2x32xf32>
    %81 = vector.shape_cast %80 : vector<1x2x32xf32> to vector<2x32xf32>
    %82 = vector.shape_cast %74 : vector<2x32xf32> to vector<1x2x32xf32>
    tpu.vector_store %arg14[%c1_50, %c0_51, %c0_52], %82 {strides = array<i32>} : memref<2x2x32xf32, #tpu.memory_space<vmem>>, vector<1x2x32xf32>,
    %83 = arith.truncf %76 : vector<2x32xf32> to vector<2x32xbf16>
    %c0_53 = arith.constant 0 : index
    %c0_54 = arith.constant 0 : index
    %84 = vector.load %arg9[%c0_53, %c0_54] : memref<32x32xbf16, #tpu.memory_space<vmem>>, vector<32x32xbf16>
    %cst_55 = arith.constant dense<0.000000e+00> : vector<2x32xf32>
    %85 = tpu.matmul %83, %84, %cst_55 {dimension_numbers = #tpu.dot_dimension_numbers<[1], [0], [0], [1], [0, 0, 1, 1], [], []>} : vector<2x32xbf16>, vector<32x32xbf16>, vector<2x32xf32> -> vector<2x32xf32>
    %86 = vector.shape_cast %85 : vector<2x32xf32> to vector<2x1x32xf32>
    %87 = vector.broadcast %86 : vector<2x1x32xf32> to vector<2x8x32xf32>
    %88 = arith.mulf %3, %87 : vector<2x8x32xf32>
    %cst_56 = arith.constant dense<0.000000e+00> : vector<2x8xf32>
    %89 = vector.multi_reduction <add>, %88, %cst_56 [2] : vector<2x8x32xf32> to vector<2x8xf32>
    %90 = arith.addf %89, %4 : vector<2x8xf32>
    %cst_57 = arith.constant dense<0xFF800000> : vector<2xf32>
    %91 = vector.multi_reduction <maximumf>, %90, %cst_57 [1] : vector<2x8xf32> to vector<2xf32>
    %92 = vector.shape_cast %91 : vector<2xf32> to vector<2x1xf32>
    %93 = vector.broadcast %92 : vector<2x1xf32> to vector<2x8xf32>
    %94 = arith.subf %90, %93 : vector<2x8xf32>
    %95 = math.exp %94 : vector<2x8xf32>
    %cst_58 = arith.constant dense<0.000000e+00> : vector<2xf32>
    %96 = vector.multi_reduction <add>, %95, %cst_58 [1] : vector<2x8xf32> to vector<2xf32>
    %97 = vector.shape_cast %96 : vector<2xf32> to vector<2x1xf32>
    %98 = vector.broadcast %97 : vector<2x1xf32> to vector<2x8xf32>
    %99 = arith.divf %95, %98 : vector<2x8xf32>
    %100 = vector.shape_cast %99 : vector<2x8xf32> to vector<2x8x1xf32>
    %101 = vector.broadcast %100 : vector<2x8x1xf32> to vector<2x8x32xf32>
    %102 = arith.mulf %101, %3 : vector<2x8x32xf32>
    %cst_59 = arith.constant dense<0.000000e+00> : vector<2x32xf32>
    %103 = vector.multi_reduction <add>, %102, %cst_59 [1] : vector<2x8x32xf32> to vector<2x32xf32>
    %104 = arith.truncf %103 : vector<2x32xf32> to vector<2x32xbf16>
    %c0_60 = arith.constant 0 : index
    %c0_61 = arith.constant 0 : index
    %105 = vector.load %arg10[%c0_60, %c0_61] : memref<32x32xbf16, #tpu.memory_space<vmem>>, vector<32x32xbf16>
    %cst_62 = arith.constant dense<0.000000e+00> : vector<2x32xf32>
    %106 = tpu.matmul %104, %105, %cst_62 {dimension_numbers = #tpu.dot_dimension_numbers<[1], [0], [0], [1], [0, 0, 1, 1], [], []>} : vector<2x32xbf16>, vector<32x32xbf16>, vector<2x32xf32> -> vector<2x32xf32>
    %107 = arith.truncf %76 : vector<2x32xf32> to vector<2x32xbf16>
    %c0_63 = arith.constant 0 : index
    %c0_64 = arith.constant 0 : index
    %108 = vector.load %arg11[%c0_63, %c0_64] : memref<32x32xbf16, #tpu.memory_space<vmem>>, vector<32x32xbf16>
    %cst_65 = arith.constant dense<0.000000e+00> : vector<2x32xf32>
    %109 = tpu.matmul %107, %108, %cst_65 {dimension_numbers = #tpu.dot_dimension_numbers<[1], [0], [0], [1], [0, 0, 1, 1], [], []>} : vector<2x32xbf16>, vector<32x32xbf16>, vector<2x32xf32> -> vector<2x32xf32>
    %110 = arith.addf %106, %109 : vector<2x32xf32>
    %111 = math.tanh %110 : vector<2x32xf32>
    %c0_66 = arith.constant 0 : index
    %c0_67 = arith.constant 0 : index
    %112 = vector.load %arg15[%c0_66, %c0_67] : memref<2x32xf32, #tpu.memory_space<vmem>>, vector<2x32xf32>
    tpu.vector_store %arg15[%c0_66, %c0_67], %111 {strides = array<i32>} : memref<2x32xf32, #tpu.memory_space<vmem>>, vector<2x32xf32>,
    %c0_68 = arith.constant 0 : index
    %c0_69 = arith.constant 0 : index
    %c0_70 = arith.constant 0 : index
    %113 = vector.load %arg12[%c0_68, %c0_69, %c0_70] : memref<4x2x32xf32, #tpu.memory_space<vmem>>, vector<1x2x32xf32>
    %114 = vector.shape_cast %113 : vector<1x2x32xf32> to vector<2x32xf32>
    %115 = vector.shape_cast %111 : vector<2x32xf32> to vector<1x2x32xf32>
    tpu.vector_store %arg12[%c0_68, %c0_69, %c0_70], %115 {strides = array<i32>} : memref<4x2x32xf32, #tpu.memory_space<vmem>>, vector<1x2x32xf32>,
    %c0_71 = arith.constant 0 : index
    %c0_72 = arith.constant 0 : index
    %116 = vector.load %arg15[%c0_71, %c0_72] : memref<2x32xf32, #tpu.memory_space<vmem>>, vector<2x32xf32>
    %c1_73 = arith.constant 1 : index
    %c0_74 = arith.constant 0 : index
    %c0_75 = arith.constant 0 : index
    %117 = vector.load %arg1[%c1_73, %c0_74, %c0_75] : memref<4x2x128xf32, #tpu.memory_space<vmem>>, vector<1x2x128xf32>
    %118 = vector.shape_cast %117 : vector<1x2x128xf32> to vector<2x128xf32>
    %c0_76 = arith.constant 0 : index
    %c0_77 = arith.constant 0 : index
    %c0_78 = arith.constant 0 : index
    %119 = vector.load %arg13[%c0_76, %c0_77, %c0_78] : memref<2x2x32xf32, #tpu.memory_space<vmem>>, vector<1x2x32xf32>
    %120 = vector.shape_cast %119 : vector<1x2x32xf32> to vector<2x32xf32>
    %c0_79 = arith.constant 0 : index
    %c0_80 = arith.constant 0 : index
    %c0_81 = arith.constant 0 : index
    %121 = vector.load %arg14[%c0_79, %c0_80, %c0_81] : memref<2x2x32xf32, #tpu.memory_space<vmem>>, vector<1x2x32xf32>
    %122 = vector.shape_cast %121 : vector<1x2x32xf32> to vector<2x32xf32>
    %123 = arith.truncf %116 : vector<2x32xf32> to vector<2x32xbf16>
    %c0_82 = arith.constant 0 : index
    %c0_83 = arith.constant 0 : index
    %c0_84 = arith.constant 0 : index
    %124 = vector.load %arg6[%c0_82, %c0_83, %c0_84] : memref<2x32x128xbf16, #tpu.memory_space<vmem>>, vector<1x32x128xbf16>
    %125 = vector.shape_cast %124 : vector<1x32x128xbf16> to vector<32x128xbf16>
    %cst_85 = arith.constant dense<0.000000e+00> : vector<2x128xf32>
    %126 = tpu.matmul %123, %125, %cst_85 {dimension_numbers = #tpu.dot_dimension_numbers<[1], [0], [0], [1], [0, 0, 1, 1], [], []>} : vector<2x32xbf16>, vector<32x128xbf16>, vector<2x128xf32> -> vector<2x128xf32>
    %127 = arith.addf %118, %126 : vector<2x128xf32>
    %128 = arith.truncf %120 : vector<2x32xf32> to vector<2x32xbf16>
    %c0_86 = arith.constant 0 : index
    %c0_87 = arith.constant 0 : index
    %c0_88 = arith.constant 0 : index
    %129 = vector.load %arg7[%c0_86, %c0_87, %c0_88] : memref<2x32x128xbf16, #tpu.memory_space<vmem>>, vector<1x32x128xbf16>
    %130 = vector.shape_cast %129 : vector<1x32x128xbf16> to vector<32x128xbf16>
    %cst_89 = arith.constant dense<0.000000e+00> : vector<2x128xf32>
    %131 = tpu.matmul %128, %130, %cst_89 {dimension_numbers = #tpu.dot_dimension_numbers<[1], [0], [0], [1], [0, 0, 1, 1], [], []>} : vector<2x32xbf16>, vector<32x128xbf16>, vector<2x128xf32> -> vector<2x128xf32>
    %132 = arith.addf %127, %131 : vector<2x128xf32>
    %133 = vector.extract_strided_slice %132 {offsets = [0, 0], sizes = [2, 96], strides = [1, 1]} : vector<2x128xf32> to vector<2x96xf32>
    %134 = arith.negf %133 : vector<2x96xf32>
    %135 = math.exp %134 : vector<2x96xf32>
    %cst_90 = arith.constant 1.000000e+00 : f32
    %136 = vector.broadcast %cst_90 : f32 to vector<2x96xf32>
    %137 = arith.addf %136, %135 : vector<2x96xf32>
    %138 = arith.divf %136, %137 : vector<2x96xf32>
    %139 = vector.extract_strided_slice %138 {offsets = [0, 0], sizes = [2, 32], strides = [1, 1]} : vector<2x96xf32> to vector<2x32xf32>
    %140 = vector.extract_strided_slice %138 {offsets = [0, 32], sizes = [2, 32], strides = [1, 1]} : vector<2x96xf32> to vector<2x32xf32>
    %141 = vector.extract_strided_slice %138 {offsets = [0, 64], sizes = [2, 32], strides = [1, 1]} : vector<2x96xf32> to vector<2x32xf32>
    %142 = vector.extract_strided_slice %132 {offsets = [0, 96], sizes = [2, 32], strides = [1, 1]} : vector<2x128xf32> to vector<2x32xf32>
    %143 = math.tanh %142 : vector<2x32xf32>
    %144 = arith.mulf %140, %122 : vector<2x32xf32>
    %145 = arith.mulf %139, %143 : vector<2x32xf32>
    %146 = arith.addf %144, %145 : vector<2x32xf32>
    %147 = math.tanh %146 : vector<2x32xf32>
    %148 = arith.mulf %141, %147 : vector<2x32xf32>
    %c0_91 = arith.constant 0 : index
    %c0_92 = arith.constant 0 : index
    %c0_93 = arith.constant 0 : index
    %149 = vector.load %arg13[%c0_91, %c0_92, %c0_93] : memref<2x2x32xf32, #tpu.memory_space<vmem>>, vector<1x2x32xf32>
    %150 = vector.shape_cast %149 : vector<1x2x32xf32> to vector<2x32xf32>
    %151 = vector.shape_cast %148 : vector<2x32xf32> to vector<1x2x32xf32>
    tpu.vector_store %arg13[%c0_91, %c0_92, %c0_93], %151 {strides = array<i32>} : memref<2x2x32xf32, #tpu.memory_space<vmem>>, vector<1x2x32xf32>,
    %c0_94 = arith.constant 0 : index
    %c0_95 = arith.constant 0 : index
    %c0_96 = arith.constant 0 : index
    %152 = vector.load %arg14[%c0_94, %c0_95, %c0_96] : memref<2x2x32xf32, #tpu.memory_space<vmem>>, vector<1x2x32xf32>
    %153 = vector.shape_cast %152 : vector<1x2x32xf32> to vector<2x32xf32>
    %154 = vector.shape_cast %146 : vector<2x32xf32> to vector<1x2x32xf32>
    tpu.vector_store %arg14[%c0_94, %c0_95, %c0_96], %154 {strides = array<i32>} : memref<2x2x32xf32, #tpu.memory_space<vmem>>, vector<1x2x32xf32>,
    %c1_97 = arith.constant 1 : index
    %c0_98 = arith.constant 0 : index
    %c0_99 = arith.constant 0 : index
    %155 = vector.load %arg8[%c1_97, %c0_98, %c0_99] : memref<2x1x128xf32, #tpu.memory_space<vmem>>, vector<1x1x128xf32>
    %156 = vector.shape_cast %155 : vector<1x1x128xf32> to vector<1x128xf32>
    %c1_100 = arith.constant 1 : index
    %c0_101 = arith.constant 0 : index
    %c0_102 = arith.constant 0 : index
    %157 = vector.load %arg13[%c1_100, %c0_101, %c0_102] : memref<2x2x32xf32, #tpu.memory_space<vmem>>, vector<1x2x32xf32>
    %158 = vector.shape_cast %157 : vector<1x2x32xf32> to vector<2x32xf32>
    %c1_103 = arith.constant 1 : index
    %c0_104 = arith.constant 0 : index
    %c0_105 = arith.constant 0 : index
    %159 = vector.load %arg14[%c1_103, %c0_104, %c0_105] : memref<2x2x32xf32, #tpu.memory_space<vmem>>, vector<1x2x32xf32>
    %160 = vector.shape_cast %159 : vector<1x2x32xf32> to vector<2x32xf32>
    %161 = arith.truncf %148 : vector<2x32xf32> to vector<2x32xbf16>
    %c1_106 = arith.constant 1 : index
    %c0_107 = arith.constant 0 : index
    %c0_108 = arith.constant 0 : index
    %162 = vector.load %arg6[%c1_106, %c0_107, %c0_108] : memref<2x32x128xbf16, #tpu.memory_space<vmem>>, vector<1x32x128xbf16>
    %163 = vector.shape_cast %162 : vector<1x32x128xbf16> to vector<32x128xbf16>
    %cst_109 = arith.constant dense<0.000000e+00> : vector<2x128xf32>
    %164 = tpu.matmul %161, %163, %cst_109 {dimension_numbers = #tpu.dot_dimension_numbers<[1], [0], [0], [1], [0, 0, 1, 1], [], []>} : vector<2x32xbf16>, vector<32x128xbf16>, vector<2x128xf32> -> vector<2x128xf32>
    %165 = vector.broadcast %156 : vector<1x128xf32> to vector<2x128xf32>
    %166 = arith.addf %165, %164 : vector<2x128xf32>
    %167 = arith.truncf %158 : vector<2x32xf32> to vector<2x32xbf16>
    %c1_110 = arith.constant 1 : index
    %c0_111 = arith.constant 0 : index
    %c0_112 = arith.constant 0 : index
    %168 = vector.load %arg7[%c1_110, %c0_111, %c0_112] : memref<2x32x128xbf16, #tpu.memory_space<vmem>>, vector<1x32x128xbf16>
    %169 = vector.shape_cast %168 : vector<1x32x128xbf16> to vector<32x128xbf16>
    %cst_113 = arith.constant dense<0.000000e+00> : vector<2x128xf32>
    %170 = tpu.matmul %167, %169, %cst_113 {dimension_numbers = #tpu.dot_dimension_numbers<[1], [0], [0], [1], [0, 0, 1, 1], [], []>} : vector<2x32xbf16>, vector<32x128xbf16>, vector<2x128xf32> -> vector<2x128xf32>
    %171 = arith.addf %166, %170 : vector<2x128xf32>
    %172 = vector.extract_strided_slice %171 {offsets = [0, 0], sizes = [2, 96], strides = [1, 1]} : vector<2x128xf32> to vector<2x96xf32>
    %173 = arith.negf %172 : vector<2x96xf32>
    %174 = math.exp %173 : vector<2x96xf32>
    %cst_114 = arith.constant 1.000000e+00 : f32
    %175 = vector.broadcast %cst_114 : f32 to vector<2x96xf32>
    %176 = arith.addf %175, %174 : vector<2x96xf32>
    %177 = arith.divf %175, %176 : vector<2x96xf32>
    %178 = vector.extract_strided_slice %177 {offsets = [0, 0], sizes = [2, 32], strides = [1, 1]} : vector<2x96xf32> to vector<2x32xf32>
    %179 = vector.extract_strided_slice %177 {offsets = [0, 32], sizes = [2, 32], strides = [1, 1]} : vector<2x96xf32> to vector<2x32xf32>
    %180 = vector.extract_strided_slice %177 {offsets = [0, 64], sizes = [2, 32], strides = [1, 1]} : vector<2x96xf32> to vector<2x32xf32>
    %181 = vector.extract_strided_slice %171 {offsets = [0, 96], sizes = [2, 32], strides = [1, 1]} : vector<2x128xf32> to vector<2x32xf32>
    %182 = math.tanh %181 : vector<2x32xf32>
    %183 = arith.mulf %179, %160 : vector<2x32xf32>
    %184 = arith.mulf %178, %182 : vector<2x32xf32>
    %185 = arith.addf %183, %184 : vector<2x32xf32>
    %186 = math.tanh %185 : vector<2x32xf32>
    %187 = arith.mulf %180, %186 : vector<2x32xf32>
    %c1_115 = arith.constant 1 : index
    %c0_116 = arith.constant 0 : index
    %c0_117 = arith.constant 0 : index
    %188 = vector.load %arg13[%c1_115, %c0_116, %c0_117] : memref<2x2x32xf32, #tpu.memory_space<vmem>>, vector<1x2x32xf32>
    %189 = vector.shape_cast %188 : vector<1x2x32xf32> to vector<2x32xf32>
    %190 = vector.shape_cast %187 : vector<2x32xf32> to vector<1x2x32xf32>
    tpu.vector_store %arg13[%c1_115, %c0_116, %c0_117], %190 {strides = array<i32>} : memref<2x2x32xf32, #tpu.memory_space<vmem>>, vector<1x2x32xf32>,
    %c1_118 = arith.constant 1 : index
    %c0_119 = arith.constant 0 : index
    %c0_120 = arith.constant 0 : index
    %191 = vector.load %arg14[%c1_118, %c0_119, %c0_120] : memref<2x2x32xf32, #tpu.memory_space<vmem>>, vector<1x2x32xf32>
    %192 = vector.shape_cast %191 : vector<1x2x32xf32> to vector<2x32xf32>
    %193 = vector.shape_cast %185 : vector<2x32xf32> to vector<1x2x32xf32>
    tpu.vector_store %arg14[%c1_118, %c0_119, %c0_120], %193 {strides = array<i32>} : memref<2x2x32xf32, #tpu.memory_space<vmem>>, vector<1x2x32xf32>,
    %194 = arith.truncf %187 : vector<2x32xf32> to vector<2x32xbf16>
    %c0_121 = arith.constant 0 : index
    %c0_122 = arith.constant 0 : index
    %195 = vector.load %arg9[%c0_121, %c0_122] : memref<32x32xbf16, #tpu.memory_space<vmem>>, vector<32x32xbf16>
    %cst_123 = arith.constant dense<0.000000e+00> : vector<2x32xf32>
    %196 = tpu.matmul %194, %195, %cst_123 {dimension_numbers = #tpu.dot_dimension_numbers<[1], [0], [0], [1], [0, 0, 1, 1], [], []>} : vector<2x32xbf16>, vector<32x32xbf16>, vector<2x32xf32> -> vector<2x32xf32>
    %197 = vector.shape_cast %196 : vector<2x32xf32> to vector<2x1x32xf32>
    %198 = vector.broadcast %197 : vector<2x1x32xf32> to vector<2x8x32xf32>
    %199 = arith.mulf %3, %198 : vector<2x8x32xf32>
    %cst_124 = arith.constant dense<0.000000e+00> : vector<2x8xf32>
    %200 = vector.multi_reduction <add>, %199, %cst_124 [2] : vector<2x8x32xf32> to vector<2x8xf32>
    %201 = arith.addf %200, %4 : vector<2x8xf32>
    %cst_125 = arith.constant dense<0xFF800000> : vector<2xf32>
    %202 = vector.multi_reduction <maximumf>, %201, %cst_125 [1] : vector<2x8xf32> to vector<2xf32>
    %203 = vector.shape_cast %202 : vector<2xf32> to vector<2x1xf32>
    %204 = vector.broadcast %203 : vector<2x1xf32> to vector<2x8xf32>
    %205 = arith.subf %201, %204 : vector<2x8xf32>
    %206 = math.exp %205 : vector<2x8xf32>
    %cst_126 = arith.constant dense<0.000000e+00> : vector<2xf32>
    %207 = vector.multi_reduction <add>, %206, %cst_126 [1] : vector<2x8xf32> to vector<2xf32>
    %208 = vector.shape_cast %207 : vector<2xf32> to vector<2x1xf32>
    %209 = vector.broadcast %208 : vector<2x1xf32> to vector<2x8xf32>
    %210 = arith.divf %206, %209 : vector<2x8xf32>
    %211 = vector.shape_cast %210 : vector<2x8xf32> to vector<2x8x1xf32>
    %212 = vector.broadcast %211 : vector<2x8x1xf32> to vector<2x8x32xf32>
    %213 = arith.mulf %212, %3 : vector<2x8x32xf32>
    %cst_127 = arith.constant dense<0.000000e+00> : vector<2x32xf32>
    %214 = vector.multi_reduction <add>, %213, %cst_127 [1] : vector<2x8x32xf32> to vector<2x32xf32>
    %215 = arith.truncf %214 : vector<2x32xf32> to vector<2x32xbf16>
    %c0_128 = arith.constant 0 : index
    %c0_129 = arith.constant 0 : index
    %216 = vector.load %arg10[%c0_128, %c0_129] : memref<32x32xbf16, #tpu.memory_space<vmem>>, vector<32x32xbf16>
    %cst_130 = arith.constant dense<0.000000e+00> : vector<2x32xf32>
    %217 = tpu.matmul %215, %216, %cst_130 {dimension_numbers = #tpu.dot_dimension_numbers<[1], [0], [0], [1], [0, 0, 1, 1], [], []>} : vector<2x32xbf16>, vector<32x32xbf16>, vector<2x32xf32> -> vector<2x32xf32>
    %218 = arith.truncf %187 : vector<2x32xf32> to vector<2x32xbf16>
    %c0_131 = arith.constant 0 : index
    %c0_132 = arith.constant 0 : index
    %219 = vector.load %arg11[%c0_131, %c0_132] : memref<32x32xbf16, #tpu.memory_space<vmem>>, vector<32x32xbf16>
    %cst_133 = arith.constant dense<0.000000e+00> : vector<2x32xf32>
    %220 = tpu.matmul %218, %219, %cst_133 {dimension_numbers = #tpu.dot_dimension_numbers<[1], [0], [0], [1], [0, 0, 1, 1], [], []>} : vector<2x32xbf16>, vector<32x32xbf16>, vector<2x32xf32> -> vector<2x32xf32>
    %221 = arith.addf %217, %220 : vector<2x32xf32>
    %222 = math.tanh %221 : vector<2x32xf32>
    %c0_134 = arith.constant 0 : index
    %c0_135 = arith.constant 0 : index
    %223 = vector.load %arg15[%c0_134, %c0_135] : memref<2x32xf32, #tpu.memory_space<vmem>>, vector<2x32xf32>
    tpu.vector_store %arg15[%c0_134, %c0_135], %222 {strides = array<i32>} : memref<2x32xf32, #tpu.memory_space<vmem>>, vector<2x32xf32>,
    %c1_136 = arith.constant 1 : index
    %c0_137 = arith.constant 0 : index
    %c0_138 = arith.constant 0 : index
    %224 = vector.load %arg12[%c1_136, %c0_137, %c0_138] : memref<4x2x32xf32, #tpu.memory_space<vmem>>, vector<1x2x32xf32>
    %225 = vector.shape_cast %224 : vector<1x2x32xf32> to vector<2x32xf32>
    %226 = vector.shape_cast %222 : vector<2x32xf32> to vector<1x2x32xf32>
    tpu.vector_store %arg12[%c1_136, %c0_137, %c0_138], %226 {strides = array<i32>} : memref<4x2x32xf32, #tpu.memory_space<vmem>>, vector<1x2x32xf32>,
    %c0_139 = arith.constant 0 : index
    %c0_140 = arith.constant 0 : index
    %227 = vector.load %arg15[%c0_139, %c0_140] : memref<2x32xf32, #tpu.memory_space<vmem>>, vector<2x32xf32>
    %c2 = arith.constant 2 : index
    %c0_141 = arith.constant 0 : index
    %c0_142 = arith.constant 0 : index
    %228 = vector.load %arg1[%c2, %c0_141, %c0_142] : memref<4x2x128xf32, #tpu.memory_space<vmem>>, vector<1x2x128xf32>
    %229 = vector.shape_cast %228 : vector<1x2x128xf32> to vector<2x128xf32>
    %c0_143 = arith.constant 0 : index
    %c0_144 = arith.constant 0 : index
    %c0_145 = arith.constant 0 : index
    %230 = vector.load %arg13[%c0_143, %c0_144, %c0_145] : memref<2x2x32xf32, #tpu.memory_space<vmem>>, vector<1x2x32xf32>
    %231 = vector.shape_cast %230 : vector<1x2x32xf32> to vector<2x32xf32>
    %c0_146 = arith.constant 0 : index
    %c0_147 = arith.constant 0 : index
    %c0_148 = arith.constant 0 : index
    %232 = vector.load %arg14[%c0_146, %c0_147, %c0_148] : memref<2x2x32xf32, #tpu.memory_space<vmem>>, vector<1x2x32xf32>
    %233 = vector.shape_cast %232 : vector<1x2x32xf32> to vector<2x32xf32>
    %234 = arith.truncf %227 : vector<2x32xf32> to vector<2x32xbf16>
    %c0_149 = arith.constant 0 : index
    %c0_150 = arith.constant 0 : index
    %c0_151 = arith.constant 0 : index
    %235 = vector.load %arg6[%c0_149, %c0_150, %c0_151] : memref<2x32x128xbf16, #tpu.memory_space<vmem>>, vector<1x32x128xbf16>
    %236 = vector.shape_cast %235 : vector<1x32x128xbf16> to vector<32x128xbf16>
    %cst_152 = arith.constant dense<0.000000e+00> : vector<2x128xf32>
    %237 = tpu.matmul %234, %236, %cst_152 {dimension_numbers = #tpu.dot_dimension_numbers<[1], [0], [0], [1], [0, 0, 1, 1], [], []>} : vector<2x32xbf16>, vector<32x128xbf16>, vector<2x128xf32> -> vector<2x128xf32>
    %238 = arith.addf %229, %237 : vector<2x128xf32>
    %239 = arith.truncf %231 : vector<2x32xf32> to vector<2x32xbf16>
    %c0_153 = arith.constant 0 : index
    %c0_154 = arith.constant 0 : index
    %c0_155 = arith.constant 0 : index
    %240 = vector.load %arg7[%c0_153, %c0_154, %c0_155] : memref<2x32x128xbf16, #tpu.memory_space<vmem>>, vector<1x32x128xbf16>
    %241 = vector.shape_cast %240 : vector<1x32x128xbf16> to vector<32x128xbf16>
    %cst_156 = arith.constant dense<0.000000e+00> : vector<2x128xf32>
    %242 = tpu.matmul %239, %241, %cst_156 {dimension_numbers = #tpu.dot_dimension_numbers<[1], [0], [0], [1], [0, 0, 1, 1], [], []>} : vector<2x32xbf16>, vector<32x128xbf16>, vector<2x128xf32> -> vector<2x128xf32>
    %243 = arith.addf %238, %242 : vector<2x128xf32>
    %244 = vector.extract_strided_slice %243 {offsets = [0, 0], sizes = [2, 96], strides = [1, 1]} : vector<2x128xf32> to vector<2x96xf32>
    %245 = arith.negf %244 : vector<2x96xf32>
    %246 = math.exp %245 : vector<2x96xf32>
    %cst_157 = arith.constant 1.000000e+00 : f32
    %247 = vector.broadcast %cst_157 : f32 to vector<2x96xf32>
    %248 = arith.addf %247, %246 : vector<2x96xf32>
    %249 = arith.divf %247, %248 : vector<2x96xf32>
    %250 = vector.extract_strided_slice %249 {offsets = [0, 0], sizes = [2, 32], strides = [1, 1]} : vector<2x96xf32> to vector<2x32xf32>
    %251 = vector.extract_strided_slice %249 {offsets = [0, 32], sizes = [2, 32], strides = [1, 1]} : vector<2x96xf32> to vector<2x32xf32>
    %252 = vector.extract_strided_slice %249 {offsets = [0, 64], sizes = [2, 32], strides = [1, 1]} : vector<2x96xf32> to vector<2x32xf32>
    %253 = vector.extract_strided_slice %243 {offsets = [0, 96], sizes = [2, 32], strides = [1, 1]} : vector<2x128xf32> to vector<2x32xf32>
    %254 = math.tanh %253 : vector<2x32xf32>
    %255 = arith.mulf %251, %233 : vector<2x32xf32>
    %256 = arith.mulf %250, %254 : vector<2x32xf32>
    %257 = arith.addf %255, %256 : vector<2x32xf32>
    %258 = math.tanh %257 : vector<2x32xf32>
    %259 = arith.mulf %252, %258 : vector<2x32xf32>
    %c0_158 = arith.constant 0 : index
    %c0_159 = arith.constant 0 : index
    %c0_160 = arith.constant 0 : index
    %260 = vector.load %arg13[%c0_158, %c0_159, %c0_160] : memref<2x2x32xf32, #tpu.memory_space<vmem>>, vector<1x2x32xf32>
    %261 = vector.shape_cast %260 : vector<1x2x32xf32> to vector<2x32xf32>
    %262 = vector.shape_cast %259 : vector<2x32xf32> to vector<1x2x32xf32>
    tpu.vector_store %arg13[%c0_158, %c0_159, %c0_160], %262 {strides = array<i32>} : memref<2x2x32xf32, #tpu.memory_space<vmem>>, vector<1x2x32xf32>,
    %c0_161 = arith.constant 0 : index
    %c0_162 = arith.constant 0 : index
    %c0_163 = arith.constant 0 : index
    %263 = vector.load %arg14[%c0_161, %c0_162, %c0_163] : memref<2x2x32xf32, #tpu.memory_space<vmem>>, vector<1x2x32xf32>
    %264 = vector.shape_cast %263 : vector<1x2x32xf32> to vector<2x32xf32>
    %265 = vector.shape_cast %257 : vector<2x32xf32> to vector<1x2x32xf32>
    tpu.vector_store %arg14[%c0_161, %c0_162, %c0_163], %265 {strides = array<i32>} : memref<2x2x32xf32, #tpu.memory_space<vmem>>, vector<1x2x32xf32>,
    %c1_164 = arith.constant 1 : index
    %c0_165 = arith.constant 0 : index
    %c0_166 = arith.constant 0 : index
    %266 = vector.load %arg8[%c1_164, %c0_165, %c0_166] : memref<2x1x128xf32, #tpu.memory_space<vmem>>, vector<1x1x128xf32>
    %267 = vector.shape_cast %266 : vector<1x1x128xf32> to vector<1x128xf32>
    %c1_167 = arith.constant 1 : index
    %c0_168 = arith.constant 0 : index
    %c0_169 = arith.constant 0 : index
    %268 = vector.load %arg13[%c1_167, %c0_168, %c0_169] : memref<2x2x32xf32, #tpu.memory_space<vmem>>, vector<1x2x32xf32>
    %269 = vector.shape_cast %268 : vector<1x2x32xf32> to vector<2x32xf32>
    %c1_170 = arith.constant 1 : index
    %c0_171 = arith.constant 0 : index
    %c0_172 = arith.constant 0 : index
    %270 = vector.load %arg14[%c1_170, %c0_171, %c0_172] : memref<2x2x32xf32, #tpu.memory_space<vmem>>, vector<1x2x32xf32>
    %271 = vector.shape_cast %270 : vector<1x2x32xf32> to vector<2x32xf32>
    %272 = arith.truncf %259 : vector<2x32xf32> to vector<2x32xbf16>
    %c1_173 = arith.constant 1 : index
    %c0_174 = arith.constant 0 : index
    %c0_175 = arith.constant 0 : index
    %273 = vector.load %arg6[%c1_173, %c0_174, %c0_175] : memref<2x32x128xbf16, #tpu.memory_space<vmem>>, vector<1x32x128xbf16>
    %274 = vector.shape_cast %273 : vector<1x32x128xbf16> to vector<32x128xbf16>
    %cst_176 = arith.constant dense<0.000000e+00> : vector<2x128xf32>
    %275 = tpu.matmul %272, %274, %cst_176 {dimension_numbers = #tpu.dot_dimension_numbers<[1], [0], [0], [1], [0, 0, 1, 1], [], []>} : vector<2x32xbf16>, vector<32x128xbf16>, vector<2x128xf32> -> vector<2x128xf32>
    %276 = vector.broadcast %267 : vector<1x128xf32> to vector<2x128xf32>
    %277 = arith.addf %276, %275 : vector<2x128xf32>
    %278 = arith.truncf %269 : vector<2x32xf32> to vector<2x32xbf16>
    %c1_177 = arith.constant 1 : index
    %c0_178 = arith.constant 0 : index
    %c0_179 = arith.constant 0 : index
    %279 = vector.load %arg7[%c1_177, %c0_178, %c0_179] : memref<2x32x128xbf16, #tpu.memory_space<vmem>>, vector<1x32x128xbf16>
    %280 = vector.shape_cast %279 : vector<1x32x128xbf16> to vector<32x128xbf16>
    %cst_180 = arith.constant dense<0.000000e+00> : vector<2x128xf32>
    %281 = tpu.matmul %278, %280, %cst_180 {dimension_numbers = #tpu.dot_dimension_numbers<[1], [0], [0], [1], [0, 0, 1, 1], [], []>} : vector<2x32xbf16>, vector<32x128xbf16>, vector<2x128xf32> -> vector<2x128xf32>
    %282 = arith.addf %277, %281 : vector<2x128xf32>
    %283 = vector.extract_strided_slice %282 {offsets = [0, 0], sizes = [2, 96], strides = [1, 1]} : vector<2x128xf32> to vector<2x96xf32>
    %284 = arith.negf %283 : vector<2x96xf32>
    %285 = math.exp %284 : vector<2x96xf32>
    %cst_181 = arith.constant 1.000000e+00 : f32
    %286 = vector.broadcast %cst_181 : f32 to vector<2x96xf32>
    %287 = arith.addf %286, %285 : vector<2x96xf32>
    %288 = arith.divf %286, %287 : vector<2x96xf32>
    %289 = vector.extract_strided_slice %288 {offsets = [0, 0], sizes = [2, 32], strides = [1, 1]} : vector<2x96xf32> to vector<2x32xf32>
    %290 = vector.extract_strided_slice %288 {offsets = [0, 32], sizes = [2, 32], strides = [1, 1]} : vector<2x96xf32> to vector<2x32xf32>
    %291 = vector.extract_strided_slice %288 {offsets = [0, 64], sizes = [2, 32], strides = [1, 1]} : vector<2x96xf32> to vector<2x32xf32>
    %292 = vector.extract_strided_slice %282 {offsets = [0, 96], sizes = [2, 32], strides = [1, 1]} : vector<2x128xf32> to vector<2x32xf32>
    %293 = math.tanh %292 : vector<2x32xf32>
    %294 = arith.mulf %290, %271 : vector<2x32xf32>
    %295 = arith.mulf %289, %293 : vector<2x32xf32>
    %296 = arith.addf %294, %295 : vector<2x32xf32>
    %297 = math.tanh %296 : vector<2x32xf32>
    %298 = arith.mulf %291, %297 : vector<2x32xf32>
    %c1_182 = arith.constant 1 : index
    %c0_183 = arith.constant 0 : index
    %c0_184 = arith.constant 0 : index
    %299 = vector.load %arg13[%c1_182, %c0_183, %c0_184] : memref<2x2x32xf32, #tpu.memory_space<vmem>>, vector<1x2x32xf32>
    %300 = vector.shape_cast %299 : vector<1x2x32xf32> to vector<2x32xf32>
    %301 = vector.shape_cast %298 : vector<2x32xf32> to vector<1x2x32xf32>
    tpu.vector_store %arg13[%c1_182, %c0_183, %c0_184], %301 {strides = array<i32>} : memref<2x2x32xf32, #tpu.memory_space<vmem>>, vector<1x2x32xf32>,
    %c1_185 = arith.constant 1 : index
    %c0_186 = arith.constant 0 : index
    %c0_187 = arith.constant 0 : index
    %302 = vector.load %arg14[%c1_185, %c0_186, %c0_187] : memref<2x2x32xf32, #tpu.memory_space<vmem>>, vector<1x2x32xf32>
    %303 = vector.shape_cast %302 : vector<1x2x32xf32> to vector<2x32xf32>
    %304 = vector.shape_cast %296 : vector<2x32xf32> to vector<1x2x32xf32>
    tpu.vector_store %arg14[%c1_185, %c0_186, %c0_187], %304 {strides = array<i32>} : memref<2x2x32xf32, #tpu.memory_space<vmem>>, vector<1x2x32xf32>,
    %305 = arith.truncf %298 : vector<2x32xf32> to vector<2x32xbf16>
    %c0_188 = arith.constant 0 : index
    %c0_189 = arith.constant 0 : index
    %306 = vector.load %arg9[%c0_188, %c0_189] : memref<32x32xbf16, #tpu.memory_space<vmem>>, vector<32x32xbf16>
    %cst_190 = arith.constant dense<0.000000e+00> : vector<2x32xf32>
    %307 = tpu.matmul %305, %306, %cst_190 {dimension_numbers = #tpu.dot_dimension_numbers<[1], [0], [0], [1], [0, 0, 1, 1], [], []>} : vector<2x32xbf16>, vector<32x32xbf16>, vector<2x32xf32> -> vector<2x32xf32>
    %308 = vector.shape_cast %307 : vector<2x32xf32> to vector<2x1x32xf32>
    %309 = vector.broadcast %308 : vector<2x1x32xf32> to vector<2x8x32xf32>
    %310 = arith.mulf %3, %309 : vector<2x8x32xf32>
    %cst_191 = arith.constant dense<0.000000e+00> : vector<2x8xf32>
    %311 = vector.multi_reduction <add>, %310, %cst_191 [2] : vector<2x8x32xf32> to vector<2x8xf32>
    %312 = arith.addf %311, %4 : vector<2x8xf32>
    %cst_192 = arith.constant dense<0xFF800000> : vector<2xf32>
    %313 = vector.multi_reduction <maximumf>, %312, %cst_192 [1] : vector<2x8xf32> to vector<2xf32>
    %314 = vector.shape_cast %313 : vector<2xf32> to vector<2x1xf32>
    %315 = vector.broadcast %314 : vector<2x1xf32> to vector<2x8xf32>
    %316 = arith.subf %312, %315 : vector<2x8xf32>
    %317 = math.exp %316 : vector<2x8xf32>
    %cst_193 = arith.constant dense<0.000000e+00> : vector<2xf32>
    %318 = vector.multi_reduction <add>, %317, %cst_193 [1] : vector<2x8xf32> to vector<2xf32>
    %319 = vector.shape_cast %318 : vector<2xf32> to vector<2x1xf32>
    %320 = vector.broadcast %319 : vector<2x1xf32> to vector<2x8xf32>
    %321 = arith.divf %317, %320 : vector<2x8xf32>
    %322 = vector.shape_cast %321 : vector<2x8xf32> to vector<2x8x1xf32>
    %323 = vector.broadcast %322 : vector<2x8x1xf32> to vector<2x8x32xf32>
    %324 = arith.mulf %323, %3 : vector<2x8x32xf32>
    %cst_194 = arith.constant dense<0.000000e+00> : vector<2x32xf32>
    %325 = vector.multi_reduction <add>, %324, %cst_194 [1] : vector<2x8x32xf32> to vector<2x32xf32>
    %326 = arith.truncf %325 : vector<2x32xf32> to vector<2x32xbf16>
    %c0_195 = arith.constant 0 : index
    %c0_196 = arith.constant 0 : index
    %327 = vector.load %arg10[%c0_195, %c0_196] : memref<32x32xbf16, #tpu.memory_space<vmem>>, vector<32x32xbf16>
    %cst_197 = arith.constant dense<0.000000e+00> : vector<2x32xf32>
    %328 = tpu.matmul %326, %327, %cst_197 {dimension_numbers = #tpu.dot_dimension_numbers<[1], [0], [0], [1], [0, 0, 1, 1], [], []>} : vector<2x32xbf16>, vector<32x32xbf16>, vector<2x32xf32> -> vector<2x32xf32>
    %329 = arith.truncf %298 : vector<2x32xf32> to vector<2x32xbf16>
    %c0_198 = arith.constant 0 : index
    %c0_199 = arith.constant 0 : index
    %330 = vector.load %arg11[%c0_198, %c0_199] : memref<32x32xbf16, #tpu.memory_space<vmem>>, vector<32x32xbf16>
    %cst_200 = arith.constant dense<0.000000e+00> : vector<2x32xf32>
    %331 = tpu.matmul %329, %330, %cst_200 {dimension_numbers = #tpu.dot_dimension_numbers<[1], [0], [0], [1], [0, 0, 1, 1], [], []>} : vector<2x32xbf16>, vector<32x32xbf16>, vector<2x32xf32> -> vector<2x32xf32>
    %332 = arith.addf %328, %331 : vector<2x32xf32>
    %333 = math.tanh %332 : vector<2x32xf32>
    %c0_201 = arith.constant 0 : index
    %c0_202 = arith.constant 0 : index
    %334 = vector.load %arg15[%c0_201, %c0_202] : memref<2x32xf32, #tpu.memory_space<vmem>>, vector<2x32xf32>
    tpu.vector_store %arg15[%c0_201, %c0_202], %333 {strides = array<i32>} : memref<2x32xf32, #tpu.memory_space<vmem>>, vector<2x32xf32>,
    %c2_203 = arith.constant 2 : index
    %c0_204 = arith.constant 0 : index
    %c0_205 = arith.constant 0 : index
    %335 = vector.load %arg12[%c2_203, %c0_204, %c0_205] : memref<4x2x32xf32, #tpu.memory_space<vmem>>, vector<1x2x32xf32>
    %336 = vector.shape_cast %335 : vector<1x2x32xf32> to vector<2x32xf32>
    %337 = vector.shape_cast %333 : vector<2x32xf32> to vector<1x2x32xf32>
    tpu.vector_store %arg12[%c2_203, %c0_204, %c0_205], %337 {strides = array<i32>} : memref<4x2x32xf32, #tpu.memory_space<vmem>>, vector<1x2x32xf32>,
    %c0_206 = arith.constant 0 : index
    %c0_207 = arith.constant 0 : index
    %338 = vector.load %arg15[%c0_206, %c0_207] : memref<2x32xf32, #tpu.memory_space<vmem>>, vector<2x32xf32>
    %c3 = arith.constant 3 : index
    %c0_208 = arith.constant 0 : index
    %c0_209 = arith.constant 0 : index
    %339 = vector.load %arg1[%c3, %c0_208, %c0_209] : memref<4x2x128xf32, #tpu.memory_space<vmem>>, vector<1x2x128xf32>
    %340 = vector.shape_cast %339 : vector<1x2x128xf32> to vector<2x128xf32>
    %c0_210 = arith.constant 0 : index
    %c0_211 = arith.constant 0 : index
    %c0_212 = arith.constant 0 : index
    %341 = vector.load %arg13[%c0_210, %c0_211, %c0_212] : memref<2x2x32xf32, #tpu.memory_space<vmem>>, vector<1x2x32xf32>
    %342 = vector.shape_cast %341 : vector<1x2x32xf32> to vector<2x32xf32>
    %c0_213 = arith.constant 0 : index
    %c0_214 = arith.constant 0 : index
    %c0_215 = arith.constant 0 : index
    %343 = vector.load %arg14[%c0_213, %c0_214, %c0_215] : memref<2x2x32xf32, #tpu.memory_space<vmem>>, vector<1x2x32xf32>
    %344 = vector.shape_cast %343 : vector<1x2x32xf32> to vector<2x32xf32>
    %345 = arith.truncf %338 : vector<2x32xf32> to vector<2x32xbf16>
    %c0_216 = arith.constant 0 : index
    %c0_217 = arith.constant 0 : index
    %c0_218 = arith.constant 0 : index
    %346 = vector.load %arg6[%c0_216, %c0_217, %c0_218] : memref<2x32x128xbf16, #tpu.memory_space<vmem>>, vector<1x32x128xbf16>
    %347 = vector.shape_cast %346 : vector<1x32x128xbf16> to vector<32x128xbf16>
    %cst_219 = arith.constant dense<0.000000e+00> : vector<2x128xf32>
    %348 = tpu.matmul %345, %347, %cst_219 {dimension_numbers = #tpu.dot_dimension_numbers<[1], [0], [0], [1], [0, 0, 1, 1], [], []>} : vector<2x32xbf16>, vector<32x128xbf16>, vector<2x128xf32> -> vector<2x128xf32>
    %349 = arith.addf %340, %348 : vector<2x128xf32>
    %350 = arith.truncf %342 : vector<2x32xf32> to vector<2x32xbf16>
    %c0_220 = arith.constant 0 : index
    %c0_221 = arith.constant 0 : index
    %c0_222 = arith.constant 0 : index
    %351 = vector.load %arg7[%c0_220, %c0_221, %c0_222] : memref<2x32x128xbf16, #tpu.memory_space<vmem>>, vector<1x32x128xbf16>
    %352 = vector.shape_cast %351 : vector<1x32x128xbf16> to vector<32x128xbf16>
    %cst_223 = arith.constant dense<0.000000e+00> : vector<2x128xf32>
    %353 = tpu.matmul %350, %352, %cst_223 {dimension_numbers = #tpu.dot_dimension_numbers<[1], [0], [0], [1], [0, 0, 1, 1], [], []>} : vector<2x32xbf16>, vector<32x128xbf16>, vector<2x128xf32> -> vector<2x128xf32>
    %354 = arith.addf %349, %353 : vector<2x128xf32>
    %355 = vector.extract_strided_slice %354 {offsets = [0, 0], sizes = [2, 96], strides = [1, 1]} : vector<2x128xf32> to vector<2x96xf32>
    %356 = arith.negf %355 : vector<2x96xf32>
    %357 = math.exp %356 : vector<2x96xf32>
    %cst_224 = arith.constant 1.000000e+00 : f32
    %358 = vector.broadcast %cst_224 : f32 to vector<2x96xf32>
    %359 = arith.addf %358, %357 : vector<2x96xf32>
    %360 = arith.divf %358, %359 : vector<2x96xf32>
    %361 = vector.extract_strided_slice %360 {offsets = [0, 0], sizes = [2, 32], strides = [1, 1]} : vector<2x96xf32> to vector<2x32xf32>
    %362 = vector.extract_strided_slice %360 {offsets = [0, 32], sizes = [2, 32], strides = [1, 1]} : vector<2x96xf32> to vector<2x32xf32>
    %363 = vector.extract_strided_slice %360 {offsets = [0, 64], sizes = [2, 32], strides = [1, 1]} : vector<2x96xf32> to vector<2x32xf32>
    %364 = vector.extract_strided_slice %354 {offsets = [0, 96], sizes = [2, 32], strides = [1, 1]} : vector<2x128xf32> to vector<2x32xf32>
    %365 = math.tanh %364 : vector<2x32xf32>
    %366 = arith.mulf %362, %344 : vector<2x32xf32>
    %367 = arith.mulf %361, %365 : vector<2x32xf32>
    %368 = arith.addf %366, %367 : vector<2x32xf32>
    %369 = math.tanh %368 : vector<2x32xf32>
    %370 = arith.mulf %363, %369 : vector<2x32xf32>
    %c0_225 = arith.constant 0 : index
    %c0_226 = arith.constant 0 : index
    %c0_227 = arith.constant 0 : index
    %371 = vector.load %arg13[%c0_225, %c0_226, %c0_227] : memref<2x2x32xf32, #tpu.memory_space<vmem>>, vector<1x2x32xf32>
    %372 = vector.shape_cast %371 : vector<1x2x32xf32> to vector<2x32xf32>
    %373 = vector.shape_cast %370 : vector<2x32xf32> to vector<1x2x32xf32>
    tpu.vector_store %arg13[%c0_225, %c0_226, %c0_227], %373 {strides = array<i32>} : memref<2x2x32xf32, #tpu.memory_space<vmem>>, vector<1x2x32xf32>,
    %c0_228 = arith.constant 0 : index
    %c0_229 = arith.constant 0 : index
    %c0_230 = arith.constant 0 : index
    %374 = vector.load %arg14[%c0_228, %c0_229, %c0_230] : memref<2x2x32xf32, #tpu.memory_space<vmem>>, vector<1x2x32xf32>
    %375 = vector.shape_cast %374 : vector<1x2x32xf32> to vector<2x32xf32>
    %376 = vector.shape_cast %368 : vector<2x32xf32> to vector<1x2x32xf32>
    tpu.vector_store %arg14[%c0_228, %c0_229, %c0_230], %376 {strides = array<i32>} : memref<2x2x32xf32, #tpu.memory_space<vmem>>, vector<1x2x32xf32>,
    %c1_231 = arith.constant 1 : index
    %c0_232 = arith.constant 0 : index
    %c0_233 = arith.constant 0 : index
    %377 = vector.load %arg8[%c1_231, %c0_232, %c0_233] : memref<2x1x128xf32, #tpu.memory_space<vmem>>, vector<1x1x128xf32>
    %378 = vector.shape_cast %377 : vector<1x1x128xf32> to vector<1x128xf32>
    %c1_234 = arith.constant 1 : index
    %c0_235 = arith.constant 0 : index
    %c0_236 = arith.constant 0 : index
    %379 = vector.load %arg13[%c1_234, %c0_235, %c0_236] : memref<2x2x32xf32, #tpu.memory_space<vmem>>, vector<1x2x32xf32>
    %380 = vector.shape_cast %379 : vector<1x2x32xf32> to vector<2x32xf32>
    %c1_237 = arith.constant 1 : index
    %c0_238 = arith.constant 0 : index
    %c0_239 = arith.constant 0 : index
    %381 = vector.load %arg14[%c1_237, %c0_238, %c0_239] : memref<2x2x32xf32, #tpu.memory_space<vmem>>, vector<1x2x32xf32>
    %382 = vector.shape_cast %381 : vector<1x2x32xf32> to vector<2x32xf32>
    %383 = arith.truncf %370 : vector<2x32xf32> to vector<2x32xbf16>
    %c1_240 = arith.constant 1 : index
    %c0_241 = arith.constant 0 : index
    %c0_242 = arith.constant 0 : index
    %384 = vector.load %arg6[%c1_240, %c0_241, %c0_242] : memref<2x32x128xbf16, #tpu.memory_space<vmem>>, vector<1x32x128xbf16>
    %385 = vector.shape_cast %384 : vector<1x32x128xbf16> to vector<32x128xbf16>
    %cst_243 = arith.constant dense<0.000000e+00> : vector<2x128xf32>
    %386 = tpu.matmul %383, %385, %cst_243 {dimension_numbers = #tpu.dot_dimension_numbers<[1], [0], [0], [1], [0, 0, 1, 1], [], []>} : vector<2x32xbf16>, vector<32x128xbf16>, vector<2x128xf32> -> vector<2x128xf32>
    %387 = vector.broadcast %378 : vector<1x128xf32> to vector<2x128xf32>
    %388 = arith.addf %387, %386 : vector<2x128xf32>
    %389 = arith.truncf %380 : vector<2x32xf32> to vector<2x32xbf16>
    %c1_244 = arith.constant 1 : index
    %c0_245 = arith.constant 0 : index
    %c0_246 = arith.constant 0 : index
    %390 = vector.load %arg7[%c1_244, %c0_245, %c0_246] : memref<2x32x128xbf16, #tpu.memory_space<vmem>>, vector<1x32x128xbf16>
    %391 = vector.shape_cast %390 : vector<1x32x128xbf16> to vector<32x128xbf16>
    %cst_247 = arith.constant dense<0.000000e+00> : vector<2x128xf32>
    %392 = tpu.matmul %389, %391, %cst_247 {dimension_numbers = #tpu.dot_dimension_numbers<[1], [0], [0], [1], [0, 0, 1, 1], [], []>} : vector<2x32xbf16>, vector<32x128xbf16>, vector<2x128xf32> -> vector<2x128xf32>
    %393 = arith.addf %388, %392 : vector<2x128xf32>
    %394 = vector.extract_strided_slice %393 {offsets = [0, 0], sizes = [2, 96], strides = [1, 1]} : vector<2x128xf32> to vector<2x96xf32>
    %395 = arith.negf %394 : vector<2x96xf32>
    %396 = math.exp %395 : vector<2x96xf32>
    %cst_248 = arith.constant 1.000000e+00 : f32
    %397 = vector.broadcast %cst_248 : f32 to vector<2x96xf32>
    %398 = arith.addf %397, %396 : vector<2x96xf32>
    %399 = arith.divf %397, %398 : vector<2x96xf32>
    %400 = vector.extract_strided_slice %399 {offsets = [0, 0], sizes = [2, 32], strides = [1, 1]} : vector<2x96xf32> to vector<2x32xf32>
    %401 = vector.extract_strided_slice %399 {offsets = [0, 32], sizes = [2, 32], strides = [1, 1]} : vector<2x96xf32> to vector<2x32xf32>
    %402 = vector.extract_strided_slice %399 {offsets = [0, 64], sizes = [2, 32], strides = [1, 1]} : vector<2x96xf32> to vector<2x32xf32>
    %403 = vector.extract_strided_slice %393 {offsets = [0, 96], sizes = [2, 32], strides = [1, 1]} : vector<2x128xf32> to vector<2x32xf32>
    %404 = math.tanh %403 : vector<2x32xf32>
    %405 = arith.mulf %401, %382 : vector<2x32xf32>
    %406 = arith.mulf %400, %404 : vector<2x32xf32>
    %407 = arith.addf %405, %406 : vector<2x32xf32>
    %408 = math.tanh %407 : vector<2x32xf32>
    %409 = arith.mulf %402, %408 : vector<2x32xf32>
    %c1_249 = arith.constant 1 : index
    %c0_250 = arith.constant 0 : index
    %c0_251 = arith.constant 0 : index
    %410 = vector.load %arg13[%c1_249, %c0_250, %c0_251] : memref<2x2x32xf32, #tpu.memory_space<vmem>>, vector<1x2x32xf32>
    %411 = vector.shape_cast %410 : vector<1x2x32xf32> to vector<2x32xf32>
    %412 = vector.shape_cast %409 : vector<2x32xf32> to vector<1x2x32xf32>
    tpu.vector_store %arg13[%c1_249, %c0_250, %c0_251], %412 {strides = array<i32>} : memref<2x2x32xf32, #tpu.memory_space<vmem>>, vector<1x2x32xf32>,
    %c1_252 = arith.constant 1 : index
    %c0_253 = arith.constant 0 : index
    %c0_254 = arith.constant 0 : index
    %413 = vector.load %arg14[%c1_252, %c0_253, %c0_254] : memref<2x2x32xf32, #tpu.memory_space<vmem>>, vector<1x2x32xf32>
    %414 = vector.shape_cast %413 : vector<1x2x32xf32> to vector<2x32xf32>
    %415 = vector.shape_cast %407 : vector<2x32xf32> to vector<1x2x32xf32>
    tpu.vector_store %arg14[%c1_252, %c0_253, %c0_254], %415 {strides = array<i32>} : memref<2x2x32xf32, #tpu.memory_space<vmem>>, vector<1x2x32xf32>,
    %416 = arith.truncf %409 : vector<2x32xf32> to vector<2x32xbf16>
    %c0_255 = arith.constant 0 : index
    %c0_256 = arith.constant 0 : index
    %417 = vector.load %arg9[%c0_255, %c0_256] : memref<32x32xbf16, #tpu.memory_space<vmem>>, vector<32x32xbf16>
    %cst_257 = arith.constant dense<0.000000e+00> : vector<2x32xf32>
    %418 = tpu.matmul %416, %417, %cst_257 {dimension_numbers = #tpu.dot_dimension_numbers<[1], [0], [0], [1], [0, 0, 1, 1], [], []>} : vector<2x32xbf16>, vector<32x32xbf16>, vector<2x32xf32> -> vector<2x32xf32>
    %419 = vector.shape_cast %418 : vector<2x32xf32> to vector<2x1x32xf32>
    %420 = vector.broadcast %419 : vector<2x1x32xf32> to vector<2x8x32xf32>
    %421 = arith.mulf %3, %420 : vector<2x8x32xf32>
    %cst_258 = arith.constant dense<0.000000e+00> : vector<2x8xf32>
    %422 = vector.multi_reduction <add>, %421, %cst_258 [2] : vector<2x8x32xf32> to vector<2x8xf32>
    %423 = arith.addf %422, %4 : vector<2x8xf32>
    %cst_259 = arith.constant dense<0xFF800000> : vector<2xf32>
    %424 = vector.multi_reduction <maximumf>, %423, %cst_259 [1] : vector<2x8xf32> to vector<2xf32>
    %425 = vector.shape_cast %424 : vector<2xf32> to vector<2x1xf32>
    %426 = vector.broadcast %425 : vector<2x1xf32> to vector<2x8xf32>
    %427 = arith.subf %423, %426 : vector<2x8xf32>
    %428 = math.exp %427 : vector<2x8xf32>
    %cst_260 = arith.constant dense<0.000000e+00> : vector<2xf32>
    %429 = vector.multi_reduction <add>, %428, %cst_260 [1] : vector<2x8xf32> to vector<2xf32>
    %430 = vector.shape_cast %429 : vector<2xf32> to vector<2x1xf32>
    %431 = vector.broadcast %430 : vector<2x1xf32> to vector<2x8xf32>
    %432 = arith.divf %428, %431 : vector<2x8xf32>
    %433 = vector.shape_cast %432 : vector<2x8xf32> to vector<2x8x1xf32>
    %434 = vector.broadcast %433 : vector<2x8x1xf32> to vector<2x8x32xf32>
    %435 = arith.mulf %434, %3 : vector<2x8x32xf32>
    %cst_261 = arith.constant dense<0.000000e+00> : vector<2x32xf32>
    %436 = vector.multi_reduction <add>, %435, %cst_261 [1] : vector<2x8x32xf32> to vector<2x32xf32>
    %437 = arith.truncf %436 : vector<2x32xf32> to vector<2x32xbf16>
    %c0_262 = arith.constant 0 : index
    %c0_263 = arith.constant 0 : index
    %438 = vector.load %arg10[%c0_262, %c0_263] : memref<32x32xbf16, #tpu.memory_space<vmem>>, vector<32x32xbf16>
    %cst_264 = arith.constant dense<0.000000e+00> : vector<2x32xf32>
    %439 = tpu.matmul %437, %438, %cst_264 {dimension_numbers = #tpu.dot_dimension_numbers<[1], [0], [0], [1], [0, 0, 1, 1], [], []>} : vector<2x32xbf16>, vector<32x32xbf16>, vector<2x32xf32> -> vector<2x32xf32>
    %440 = arith.truncf %409 : vector<2x32xf32> to vector<2x32xbf16>
    %c0_265 = arith.constant 0 : index
    %c0_266 = arith.constant 0 : index
    %441 = vector.load %arg11[%c0_265, %c0_266] : memref<32x32xbf16, #tpu.memory_space<vmem>>, vector<32x32xbf16>
    %cst_267 = arith.constant dense<0.000000e+00> : vector<2x32xf32>
    %442 = tpu.matmul %440, %441, %cst_267 {dimension_numbers = #tpu.dot_dimension_numbers<[1], [0], [0], [1], [0, 0, 1, 1], [], []>} : vector<2x32xbf16>, vector<32x32xbf16>, vector<2x32xf32> -> vector<2x32xf32>
    %443 = arith.addf %439, %442 : vector<2x32xf32>
    %444 = math.tanh %443 : vector<2x32xf32>
    %c0_268 = arith.constant 0 : index
    %c0_269 = arith.constant 0 : index
    %445 = vector.load %arg15[%c0_268, %c0_269] : memref<2x32xf32, #tpu.memory_space<vmem>>, vector<2x32xf32>
    tpu.vector_store %arg15[%c0_268, %c0_269], %444 {strides = array<i32>} : memref<2x32xf32, #tpu.memory_space<vmem>>, vector<2x32xf32>,
    %c3_270 = arith.constant 3 : index
    %c0_271 = arith.constant 0 : index
    %c0_272 = arith.constant 0 : index
    %446 = vector.load %arg12[%c3_270, %c0_271, %c0_272] : memref<4x2x32xf32, #tpu.memory_space<vmem>>, vector<1x2x32xf32>
    %447 = vector.shape_cast %446 : vector<1x2x32xf32> to vector<2x32xf32>
    %448 = vector.shape_cast %444 : vector<2x32xf32> to vector<1x2x32xf32>
    tpu.vector_store %arg12[%c3_270, %c0_271, %c0_272], %448 {strides = array<i32>} : memref<4x2x32xf32, #tpu.memory_space<vmem>>, vector<1x2x32xf32>,
    return
  }
  func.func @transform_0(%arg0: i32) -> (i32, i32, i32) {
    %c0_i32 = arith.constant 0 : i32
    %c0_i32_0 = arith.constant 0 : i32
    %c0_i32_1 = arith.constant 0 : i32
    return %arg0, %c0_i32, %c0_i32_0 : i32, i32, i32
  }
  func.func @transform_1(%arg0: i32) -> (i32, i32, i32) {
    %c0_i32 = arith.constant 0 : i32
    %c0_i32_0 = arith.constant 0 : i32
    %c0_i32_1 = arith.constant 0 : i32
    %c0_i32_2 = arith.constant 0 : i32
    return %c0_i32, %c0_i32_0, %c0_i32_1 : i32, i32, i32
  }
  func.func @transform_2(%arg0: i32) -> (i32, i32) {
    %c0_i32 = arith.constant 0 : i32
    %c0_i32_0 = arith.constant 0 : i32
    %c0_i32_1 = arith.constant 0 : i32
    return %c0_i32, %c0_i32_0 : i32, i32
  }
  func.func @transform_3(%arg0: i32) -> (i32, i32, i32) {
    %c0_i32 = arith.constant 0 : i32
    %c0_i32_0 = arith.constant 0 : i32
    %c0_i32_1 = arith.constant 0 : i32
    %c0_i32_2 = arith.constant 0 : i32
    return %c0_i32, %c0_i32_0, %c0_i32_1 : i32, i32, i32
  }
  func.func @transform_4(%arg0: i32) -> (i32, i32, i32) {
    %c0_i32 = arith.constant 0 : i32
    %c0_i32_0 = arith.constant 0 : i32
    %c0_i32_1 = arith.constant 0 : i32
    %c0_i32_2 = arith.constant 0 : i32
    return %c0_i32, %c0_i32_0, %c0_i32_1 : i32, i32, i32
  }
  func.func @transform_5(%arg0: i32) -> (i32, i32, i32) {
    %c0_i32 = arith.constant 0 : i32
    %c0_i32_0 = arith.constant 0 : i32
    %c0_i32_1 = arith.constant 0 : i32
    %c0_i32_2 = arith.constant 0 : i32
    return %c0_i32, %c0_i32_0, %c0_i32_1 : i32, i32, i32
  }
  func.func @transform_6(%arg0: i32) -> (i32, i32, i32) {
    %c0_i32 = arith.constant 0 : i32
    %c0_i32_0 = arith.constant 0 : i32
    %c0_i32_1 = arith.constant 0 : i32
    %c0_i32_2 = arith.constant 0 : i32
    return %c0_i32, %c0_i32_0, %c0_i32_1 : i32, i32, i32
  }
  func.func @transform_7(%arg0: i32) -> (i32, i32, i32) {
    %c0_i32 = arith.constant 0 : i32
    %c0_i32_0 = arith.constant 0 : i32
    %c0_i32_1 = arith.constant 0 : i32
    %c0_i32_2 = arith.constant 0 : i32
    return %c0_i32, %c0_i32_0, %c0_i32_1 : i32, i32, i32
  }
  func.func @transform_8(%arg0: i32) -> (i32, i32) {
    %c0_i32 = arith.constant 0 : i32
    %c0_i32_0 = arith.constant 0 : i32
    %c0_i32_1 = arith.constant 0 : i32
    return %c0_i32, %c0_i32_0 : i32, i32
  }
  func.func @transform_9(%arg0: i32) -> (i32, i32) {
    %c0_i32 = arith.constant 0 : i32
    %c0_i32_0 = arith.constant 0 : i32
    %c0_i32_1 = arith.constant 0 : i32
    return %c0_i32, %c0_i32_0 : i32, i32
  }
  func.func @transform_10(%arg0: i32) -> (i32, i32) {
    %c0_i32 = arith.constant 0 : i32
    %c0_i32_0 = arith.constant 0 : i32
    %c0_i32_1 = arith.constant 0 : i32
    return %c0_i32, %c0_i32_0 : i32, i32
  }
  func.func @transform_11(%arg0: i32) -> (i32, i32, i32) {
    %c0_i32 = arith.constant 0 : i32
    %c0_i32_0 = arith.constant 0 : i32
    %c0_i32_1 = arith.constant 0 : i32
    return %arg0, %c0_i32, %c0_i32_0 : i32, i32, i32
  }
}

</mosaic_0001>

<llo_original>
// kernel: tpu_custom_call.1
$region0: #{tpu_custom_call.1}
  #allocation0 [shape = 'u32[]', space=smem, size = 0x4, offset = 0x4, fixed_abs, tag = 'smem constant byte address 0x4 - core index']
  #allocation1 [shape = 'u32[144,128]{1,0:T(1,128)}', space=vmem, size = 0x12000, scoped, tag = 'internal scratch']
  #allocation2 [shape = 'f32[2,2,32]{2,1,0:T(2,128)}', space=vmem, size = 0x800, scoped, tag = 'scratch operand']
  #allocation3 [shape = 'f32[2,2,32]{2,1,0:T(2,128)}', space=vmem, size = 0x800, scoped, tag = 'scratch operand']
  #allocation4 [shape = 'f32[2,32]{1,0:T(2,128)}', space=vmem, size = 0x400, scoped, tag = 'scratch operand']
  %s0 = inlined_call_operand.hbm [shape: f32[8,2,128], index: 0, kind: input, shape index: {}]
  %s1 = inlined_call_operand.hbm [shape: f32[2,8,32], index: 1, kind: input, shape index: {}]
  %s2 = inlined_call_operand.hbm [shape: f32[2,8], index: 2, kind: input, shape index: {}]
  %s3 = inlined_call_operand.hbm [shape: f32[2,2,32], index: 3, kind: input, shape index: {}]
  %s4 = inlined_call_operand.hbm [shape: f32[2,2,32], index: 4, kind: input, shape index: {}]
  %s5 = inlined_call_operand.hbm [shape: bf16[2,32,128], index: 5, kind: input, shape index: {}]
  %s6 = inlined_call_operand.hbm [shape: bf16[2,32,128], index: 6, kind: input, shape index: {}]
  %s7 = inlined_call_operand.hbm [shape: f32[2,1,128], index: 7, kind: input, shape index: {}]
  %s8 = inlined_call_operand.hbm [shape: bf16[32,32], index: 8, kind: input, shape index: {}]
  %s9 = inlined_call_operand.vmem [shape: bf16[32,32], index: 9, kind: input, shape index: {}]
  %s10 = inlined_call_operand.hbm [shape: bf16[32,32], index: 10, kind: input, shape index: {}]
  %s11 = inlined_call_operand.hbm [shape: f32[8,2,32], index: 11, kind: output, shape index: {}]
  %s12 = sld [smem:[#allocation0]]
  $region121: #{tpu_custom_call.1} parent=0
    _
  %s14 = ssub.s32 1, %s12
  %s15 = scalar_select 0, %s14, %s12
  $region1: #{tpu_custom_call.1} parent=0
    #allocation5 [shape = 'u8[8192]{0}', space=vmem, size = 0x2000, scoped, tag = 'input window, operand 0']
    #allocation6 [shape = 's32[2]{0}', space=sflag, size = 0x8, scoped, tag = 'scoped memory for tpu_custom_call.1']
    #allocation7 [shape = 's32[2]{0}', space=sflag, size = 0x8, scoped, tag = 'scoped memory for tpu_custom_call.1']
    #allocation8 [shape = 'u8[8192]{0}', space=vmem, size = 0x2000, scoped, tag = 'input window, operand 1, single buffered']
    #allocation9 [shape = 's32[1]{0}', space=sflag, size = 0x4, scoped, tag = 'scoped memory for tpu_custom_call.1']
    #allocation10 [shape = 'u8[1024]{0}', space=vmem, size = 0x400, scoped, tag = 'input window, operand 2, single buffered']
    #allocation11 [shape = 'u8[2048]{0}', space=vmem, size = 0x800, scoped, tag = 'input window, operand 3, single buffered']
    #allocation12 [shape = 's32[1]{0}', space=sflag, size = 0x4, scoped, tag = 'scoped memory for tpu_custom_call.1']
    #allocation13 [shape = 'u8[2048]{0}', space=vmem, size = 0x800, scoped, tag = 'input window, operand 4, single buffered']
    #allocation14 [shape = 'u8[16384]{0}', space=vmem, size = 0x4000, scoped, tag = 'input window, operand 5, single buffered']
    #allocation15 [shape = 's32[1]{0}', space=sflag, size = 0x4, scoped, tag = 'scoped memory for tpu_custom_call.1']
    #allocation16 [shape = 'u8[16384]{0}', space=vmem, size = 0x4000, scoped, tag = 'input window, operand 6, single buffered']
    #allocation17 [shape = 'u8[1024]{0}', space=vmem, size = 0x400, scoped, tag = 'input window, operand 7, single buffered']
    #allocation18 [shape = 's32[1]{0}', space=sflag, size = 0x4, scoped, tag = 'scoped memory for tpu_custom_call.1']
    #allocation19 [shape = 'u8[8192]{0}', space=vmem, size = 0x2000, scoped, tag = 'input window, operand 8, single buffered']
    #allocation20 [shape = 'u8[8192]{0}', space=vmem, size = 0x2000, scoped, tag = 'input window, operand 10, single buffered']
    #allocation21 [shape = 's32[1]{0}', space=sflag, size = 0x4, scoped, tag = 'scoped memory for tpu_custom_call.1']
    #allocation22 [shape = 'u8[8192]{0}', space=vmem, size = 0x2000, scoped, tag = 'output window, operand 0']
    %16 = vsyncpa [#allocation6], 0
    %s17 = scalar_lea.sflag [#allocation6], 1
    %18 = vsyncpa %s17, 0
    %19 = vsyncpa [#allocation9], 0
    %20 = vsyncpa [#allocation12], 0
    %21 = vsyncpa [#allocation15], 0
    %22 = vsyncpa [#allocation18], 0
    %23 = vsyncpa [#allocation21], 0
    %24 = vsyncpa [#allocation7], 0
    %s25 = scalar_lea.sflag [#allocation7], 1
    %26 = vsyncpa %s25, 0
    loop: start=0, step=1, limit=4
    $region2: #{tpu_custom_call.1} parent=1 // loop_pre_header
      _
    $region3: #{tpu_custom_call.1} parent=1 // loop_header
      %s28 = sphi 0, %s32
      %p29 = scmp.ge.s32.totalorder %s28, 4
      %s38 = sphi 0, %s40
      %s41 = sphi 0, %s38
      %s42 = sphi 0, %s41
      %s58 = sphi 0, %s42
      %s62 = sphi 0, %s62
      %s64 = sphi 0, %s62
      %s65 = sphi 0, %s64
      %s79 = sphi 0, %s65
      %s83 = sphi 0, %s83
      %s85 = sphi 0, %s83
      %s86 = sphi 0, %s85
      %s100 = sphi 0, %s86
      %s104 = sphi 0, %s104
      %s106 = sphi 0, %s104
      %s107 = sphi 0, %s106
      %s121 = sphi 0, %s107
      %s125 = sphi 0, %s125
      %s127 = sphi 0, %s125
      %s128 = sphi 0, %s127
      %s142 = sphi 0, %s128
      %s146 = sphi 0, %s146
      %s148 = sphi 0, %s146
      %s149 = sphi 0, %s148
      %s163 = sphi 0, %s149
      %s167 = sphi 0, %s167
      %s169 = sphi 0, %s167
      %s170 = sphi 0, %s169
      %s184 = sphi 0, %s170
      %s188 = sphi 0, %s188
      %s190 = sphi 0, %s188
      %s191 = sphi 0, %s190
      %s205 = sphi 0, %s191
      %s209 = sphi 0, %s209
      %s211 = sphi 0, %s209
      %s212 = sphi 0, %s211
      %s226 = sphi 0, %s212
      %s230 = sphi 0, %s230
      %s232 = sphi 0, %s230
      %s233 = sphi 0, %s232
      %s247 = sphi 0, %s233
      %s251 = sphi 0, %s251
      %s253 = sphi 0, %s251
      %s254 = sphi 0, %s253
      %s268 = sphi 0, %s254
      %s274 = sphi 0, %s276
      %s277 = sphi 0, %s274
      %s278 = sphi 0, %s277
      %s294 = sphi 0, %s278
    $region4: #{tpu_custom_call.1} parent=1 // loop_header_branch
      %31 = sbr.rel (%p29) target = $region8
    $region5: #{tpu_custom_call.1} parent=1 // loop_body
      %s33 = ssub.s32 %s28, 1
      %s34 = ssub.s32 %s28, 2
      %s35 = sadd.s32 %s28, 1
      %s36 = ssub.s32 %s28, %s35
      %p37 = scmp.eq.s32.totalorder %s36, 0
      %s39 = sadd.s32 %s38, 1
      %s40 = scalar_select %p37, %s38, %s39
      %p43 = pneg %p37
      %p44 = scmp.eq.s32.totalorder %s28, 1
      %p45 = por %p43, %p44
      %p46 = scmp.ne.s32.totalorder %s38, %s41
      %p47 = scmp.eq.s32.totalorder %s28, 0
      %p48 = por %p46, %p47
      %p49 = scmp.ne.s32.totalorder %s38, %s41
      %p50 = scmp.eq.s32.totalorder %s33, 1
      %p51 = por %p49, %p50
      %p52 = scmp.ne.s32.totalorder %s41, %s42
      %p53 = scmp.eq.s32.totalorder %s33, 0
      %p54 = por %p52, %p53
      %p55 = scmp.ne.s32.totalorder %s41, %s42
      %p56 = scmp.eq.s32.totalorder %s34, 1
      %p57 = por %p55, %p56
      %p59 = scmp.ne.s32.totalorder %s42, %s58
      %p60 = scmp.eq.s32.totalorder %s34, 0
      %p61 = por %p59, %p60
      %s63 = sadd.s32 %s62, 1
      %p66 = scmp.eq.s32.totalorder %s28, 1
      %p67 = scmp.ne.s32.totalorder %s62, %s64
      %p68 = scmp.eq.s32.totalorder %s28, 0
      %p69 = por %p67, %p68
      %p70 = scmp.ne.s32.totalorder %s62, %s64
      %p71 = scmp.eq.s32.totalorder %s33, 1
      %p72 = por %p70, %p71
      %p73 = scmp.ne.s32.totalorder %s64, %s65
      %p74 = scmp.eq.s32.totalorder %s33, 0
      %p75 = por %p73, %p74
      %p76 = scmp.ne.s32.totalorder %s64, %s65
      %p77 = scmp.eq.s32.totalorder %s34, 1
      %p78 = por %p76, %p77
      %p80 = scmp.ne.s32.totalorder %s65, %s79
      %p81 = scmp.eq.s32.totalorder %s34, 0
      %p82 = por %p80, %p81
      %s84 = sadd.s32 %s83, 1
      %p87 = scmp.eq.s32.totalorder %s28, 1
      %p88 = scmp.ne.s32.totalorder %s83, %s85
      %p89 = scmp.eq.s32.totalorder %s28, 0
      %p90 = por %p88, %p89
      %p91 = scmp.ne.s32.totalorder %s83, %s85
      %p92 = scmp.eq.s32.totalorder %s33, 1
      %p93 = por %p91, %p92
      %p94 = scmp.ne.s32.totalorder %s85, %s86
      %p95 = scmp.eq.s32.totalorder %s33, 0
      %p96 = por %p94, %p95
      %p97 = scmp.ne.s32.totalorder %s85, %s86
      %p98 = scmp.eq.s32.totalorder %s34, 1
      %p99 = por %p97, %p98
      %p101 = scmp.ne.s32.totalorder %s86, %s100
      %p102 = scmp.eq.s32.totalorder %s34, 0
      %p103 = por %p101, %p102
      %s105 = sadd.s32 %s104, 1
      %p108 = scmp.eq.s32.totalorder %s28, 1
      %p109 = scmp.ne.s32.totalorder %s104, %s106
      %p110 = scmp.eq.s32.totalorder %s28, 0
      %p111 = por %p109, %p110
      %p112 = scmp.ne.s32.totalorder %s104, %s106
      %p113 = scmp.eq.s32.totalorder %s33, 1
      %p114 = por %p112, %p113
      %p115 = scmp.ne.s32.totalorder %s106, %s107
      %p116 = scmp.eq.s32.totalorder %s33, 0
      %p117 = por %p115, %p116
      %p118 = scmp.ne.s32.totalorder %s106, %s107
      %p119 = scmp.eq.s32.totalorder %s34, 1
      %p120 = por %p118, %p119
      %p122 = scmp.ne.s32.totalorder %s107, %s121
      %p123 = scmp.eq.s32.totalorder %s34, 0
      %p124 = por %p122, %p123
      %s126 = sadd.s32 %s125, 1
      %p129 = scmp.eq.s32.totalorder %s28, 1
      %p130 = scmp.ne.s32.totalorder %s125, %s127
      %p131 = scmp.eq.s32.totalorder %s28, 0
      %p132 = por %p130, %p131
      %p133 = scmp.ne.s32.totalorder %s125, %s127
      %p134 = scmp.eq.s32.totalorder %s33, 1
      %p135 = por %p133, %p134
      %p136 = scmp.ne.s32.totalorder %s127, %s128
      %p137 = scmp.eq.s32.totalorder %s33, 0
      %p138 = por %p136, %p137
      %p139 = scmp.ne.s32.totalorder %s127, %s128
      %p140 = scmp.eq.s32.totalorder %s34, 1
      %p141 = por %p139, %p140
      %p143 = scmp.ne.s32.totalorder %s128, %s142
      %p144 = scmp.eq.s32.totalorder %s34, 0
      %p145 = por %p143, %p144
      %s147 = sadd.s32 %s146, 1
      %p150 = scmp.eq.s32.totalorder %s28, 1
      %p151 = scmp.ne.s32.totalorder %s146, %s148
      %p152 = scmp.eq.s32.totalorder %s28, 0
      %p153 = por %p151, %p152
      %p154 = scmp.ne.s32.totalorder %s146, %s148
      %p155 = scmp.eq.s32.totalorder %s33, 1
      %p156 = por %p154, %p155
      %p157 = scmp.ne.s32.totalorder %s148, %s149
      %p158 = scmp.eq.s32.totalorder %s33, 0
      %p159 = por %p157, %p158
      %p160 = scmp.ne.s32.totalorder %s148, %s149
      %p161 = scmp.eq.s32.totalorder %s34, 1
      %p162 = por %p160, %p161
      %p164 = scmp.ne.s32.totalorder %s149, %s163
      %p165 = scmp.eq.s32.totalorder %s34, 0
      %p166 = por %p164, %p165
      %s168 = sadd.s32 %s167, 1
      %p171 = scmp.eq.s32.totalorder %s28, 1
      %p172 = scmp.ne.s32.totalorder %s167, %s169
      %p173 = scmp.eq.s32.totalorder %s28, 0
      %p174 = por %p172, %p173
      %p175 = scmp.ne.s32.totalorder %s167, %s169
      %p176 = scmp.eq.s32.totalorder %s33, 1
      %p177 = por %p175, %p176
      %p178 = scmp.ne.s32.totalorder %s169, %s170
      %p179 = scmp.eq.s32.totalorder %s33, 0
      %p180 = por %p178, %p179
      %p181 = scmp.ne.s32.totalorder %s169, %s170
      %p182 = scmp.eq.s32.totalorder %s34, 1
      %p183 = por %p181, %p182
      %p185 = scmp.ne.s32.totalorder %s170, %s184
      %p186 = scmp.eq.s32.totalorder %s34, 0
      %p187 = por %p185, %p186
      %s189 = sadd.s32 %s188, 1
      %p192 = scmp.eq.s32.totalorder %s28, 1
      %p193 = scmp.ne.s32.totalorder %s188, %s190
      %p194 = scmp.eq.s32.totalorder %s28, 0
      %p195 = por %p193, %p194
      %p196 = scmp.ne.s32.totalorder %s188, %s190
      %p197 = scmp.eq.s32.totalorder %s33, 1
      %p198 = por %p196, %p197
      %p199 = scmp.ne.s32.totalorder %s190, %s191
      %p200 = scmp.eq.s32.totalorder %s33, 0
      %p201 = por %p199, %p200
      %p202 = scmp.ne.s32.totalorder %s190, %s191
      %p203 = scmp.eq.s32.totalorder %s34, 1
      %p204 = por %p202, %p203
      %p206 = scmp.ne.s32.totalorder %s191, %s205
      %p207 = scmp.eq.s32.totalorder %s34, 0
      %p208 = por %p206, %p207
      %s210 = sadd.s32 %s209, 1
      %p213 = scmp.eq.s32.totalorder %s28, 1
      %p214 = scmp.ne.s32.totalorder %s209, %s211
      %p215 = scmp.eq.s32.totalorder %s28, 0
      %p216 = por %p214, %p215
      %p217 = scmp.ne.s32.totalorder %s209, %s211
      %p218 = scmp.eq.s32.totalorder %s33, 1
      %p219 = por %p217, %p218
      %p220 = scmp.ne.s32.totalorder %s211, %s212
      %p221 = scmp.eq.s32.totalorder %s33, 0
      %p222 = por %p220, %p221
      %p223 = scmp.ne.s32.totalorder %s211, %s212
      %p224 = scmp.eq.s32.totalorder %s34, 1
      %p225 = por %p223, %p224
      %p227 = scmp.ne.s32.totalorder %s212, %s226
      %p228 = scmp.eq.s32.totalorder %s34, 0
      %p229 = por %p227, %p228
      %s231 = sadd.s32 %s230, 1
      %p234 = scmp.eq.s32.totalorder %s28, 1
      %p235 = scmp.ne.s32.totalorder %s230, %s232
      %p236 = scmp.eq.s32.totalorder %s28, 0
      %p237 = por %p235, %p236
      %p238 = scmp.ne.s32.totalorder %s230, %s232
      %p239 = scmp.eq.s32.totalorder %s33, 1
      %p240 = por %p238, %p239
      %p241 = scmp.ne.s32.totalorder %s232, %s233
      %p242 = scmp.eq.s32.totalorder %s33, 0
      %p243 = por %p241, %p242
      %p244 = scmp.ne.s32.totalorder %s232, %s233
      %p245 = scmp.eq.s32.totalorder %s34, 1
      %p246 = por %p244, %p245
      %p248 = scmp.ne.s32.totalorder %s233, %s247
      %p249 = scmp.eq.s32.totalorder %s34, 0
      %p250 = por %p248, %p249
      %s252 = sadd.s32 %s251, 1
      %p255 = scmp.eq.s32.totalorder %s28, 1
      %p256 = scmp.ne.s32.totalorder %s251, %s253
      %p257 = scmp.eq.s32.totalorder %s28, 0
      %p258 = por %p256, %p257
      %p259 = scmp.ne.s32.totalorder %s251, %s253
      %p260 = scmp.eq.s32.totalorder %s33, 1
      %p261 = por %p259, %p260
      %p262 = scmp.ne.s32.totalorder %s253, %s254
      %p263 = scmp.eq.s32.totalorder %s33, 0
      %p264 = por %p262, %p263
      %p265 = scmp.ne.s32.totalorder %s253, %s254
      %p266 = scmp.eq.s32.totalorder %s34, 1
      %p267 = por %p265, %p266
      %p269 = scmp.ne.s32.totalorder %s254, %s268
      %p270 = scmp.eq.s32.totalorder %s34, 0
      %p271 = por %p269, %p270
      %s272 = ssub.s32 %s28, %s35
      %p273 = scmp.eq.s32.totalorder %s272, 0
      %s275 = sadd.s32 %s274, 1
      %s276 = scalar_select %p273, %s274, %s275
      %p279 = pneg %p273
      %p280 = scmp.eq.s32.totalorder %s28, 1
      %p281 = por %p279, %p280
      %p282 = scmp.ne.s32.totalorder %s274, %s277
      %p283 = scmp.eq.s32.totalorder %s28, 0
      %p284 = por %p282, %p283
      %p285 = scmp.ne.s32.totalorder %s274, %s277
      %p286 = scmp.eq.s32.totalorder %s33, 1
      %p287 = por %p285, %p286
      %p288 = scmp.ne.s32.totalorder %s277, %s278
      %p289 = scmp.eq.s32.totalorder %s33, 0
      %p290 = por %p288, %p289
      %p291 = scmp.ne.s32.totalorder %s277, %s278
      %p292 = scmp.eq.s32.totalorder %s34, 1
      %p293 = por %p291, %p292
      %p295 = scmp.ne.s32.totalorder %s278, %s294
      %p296 = scmp.eq.s32.totalorder %s34, 0
      %p297 = por %p295, %p296
      %p298 = scmp.le.s32.totalorder 1, %s28
      %p299 = scmp.lt.s32.totalorder %s28, 3
      %p300 = pnand %p298, %p299
      %p301 = pneg %p300
      // Predicated region
      $region9: #{tpu_custom_call.1} parent=5 // pred_check
        _
      $region10: #{tpu_custom_call.1} parent=5 // pred_check_branch
        %303 = sbr.rel (%p300) target = $region12
      $region11: #{tpu_custom_call.1} parent=5 // pred_region
        %s304 = ssub.s32 %s28, 1
        // Predicated region
        $region13: #{tpu_custom_call.1} parent=11 // pred_check
          %p305 = pneg %p75
        $region14: #{tpu_custom_call.1} parent=11 // pred_check_branch
          %307 = sbr.rel (%p305) target = $region16
        $region15: #{tpu_custom_call.1} parent=11 // pred_region
          %s309 = ssub.s32 256, 256
          %310 = vsyncadd [#allocation9], %s309
          %s311 = sshll.u32 [#allocation8], 4
          %s312 = int_to_ptr.vmem [resolvable:$true] %s311
          %317 = dma.hbm_to_vmem [thread:$0]  %s1, 256, %s312, [#allocation9], 128, 128, 8
        $region16: #{tpu_custom_call.1} parent=11 // pred_fallthru
          _
        // Predicated region
        $region17: #{tpu_custom_call.1} parent=11 // pred_check
          %p318 = pneg %p96
        $region18: #{tpu_custom_call.1} parent=11 // pred_check_branch
          %320 = sbr.rel (%p318) target = $region20
        $region19: #{tpu_custom_call.1} parent=11 // pred_region
          %s322 = ssub.s32 32, 32
          %323 = vsyncadd [#allocation9], %s322
          %s325 = sshll.u32 [#allocation10], 4
          %s326 = int_to_ptr.vmem [resolvable:$true] %s325
          %328 = dma.hbm_to_vmem [thread:$0]  %s2, 32, %s326, [#allocation9]
        $region20: #{tpu_custom_call.1} parent=11 // pred_fallthru
          _
        // Predicated region
        $region21: #{tpu_custom_call.1} parent=11 // pred_check
          %p329 = pneg %p117
        $region22: #{tpu_custom_call.1} parent=11 // pred_check_branch
          %331 = sbr.rel (%p329) target = $region24
        $region23: #{tpu_custom_call.1} parent=11 // pred_region
          %s333 = ssub.s32 64, 64
          %334 = vsyncadd [#allocation12], %s333
          %s335 = sshll.u32 [#allocation11], 4
          %s336 = int_to_ptr.vmem [resolvable:$true] %s335
          %341 = dma.hbm_to_vmem [thread:$0]  %s3, 64, %s336, [#allocation12], 32, 32, 2
        $region24: #{tpu_custom_call.1} parent=11 // pred_fallthru
          _
        // Predicated region
        $region25: #{tpu_custom_call.1} parent=11 // pred_check
          %p342 = pneg %p138
        $region26: #{tpu_custom_call.1} parent=11 // pred_check_branch
          %344 = sbr.rel (%p342) target = $region28
        $region27: #{tpu_custom_call.1} parent=11 // pred_region
          %s346 = ssub.s32 64, 64
          %347 = vsyncadd [#allocation12], %s346
          %s348 = sshll.u32 [#allocation13], 4
          %s349 = int_to_ptr.vmem [resolvable:$true] %s348
          %354 = dma.hbm_to_vmem [thread:$0]  %s4, 64, %s349, [#allocation12], 32, 32, 2
        $region28: #{tpu_custom_call.1} parent=11 // pred_fallthru
          _
        // Predicated region
        $region29: #{tpu_custom_call.1} parent=11 // pred_check
          %p355 = pneg %p159
        $region30: #{tpu_custom_call.1} parent=11 // pred_check_branch
          %357 = sbr.rel (%p355) target = $region32
        $region31: #{tpu_custom_call.1} parent=11 // pred_region
          %s359 = ssub.s32 512, 512
          %360 = vsyncadd [#allocation15], %s359
          %s361 = sshll.u32 [#allocation14], 4
          %s362 = int_to_ptr.vmem [resolvable:$true] %s361
          %367 = dma.hbm_to_vmem [thread:$0]  %s5, 512, %s362, [#allocation15], 64, 64, 4
        $region32: #{tpu_custom_call.1} parent=11 // pred_fallthru
          _
        // Predicated region
        $region33: #{tpu_custom_call.1} parent=11 // pred_check
          %p368 = pneg %p180
        $region34: #{tpu_custom_call.1} parent=11 // pred_check_branch
          %370 = sbr.rel (%p368) target = $region36
        $region35: #{tpu_custom_call.1} parent=11 // pred_region
          %s372 = ssub.s32 512, 512
          %373 = vsyncadd [#allocation15], %s372
          %s374 = sshll.u32 [#allocation16], 4
          %s375 = int_to_ptr.vmem [resolvable:$true] %s374
          %380 = dma.hbm_to_vmem [thread:$0]  %s6, 512, %s375, [#allocation15], 64, 64, 4
        $region36: #{tpu_custom_call.1} parent=11 // pred_fallthru
          _
        // Predicated region
        $region37: #{tpu_custom_call.1} parent=11 // pred_check
          %p381 = pneg %p201
        $region38: #{tpu_custom_call.1} parent=11 // pred_check_branch
          %383 = sbr.rel (%p381) target = $region40
        $region39: #{tpu_custom_call.1} parent=11 // pred_region
          %s385 = ssub.s32 32, 32
          %386 = vsyncadd [#allocation18], %s385
          %s387 = sshll.u32 [#allocation17], 4
          %s388 = int_to_ptr.vmem [resolvable:$true] %s387
          %393 = dma.hbm_to_vmem [thread:$0]  %s7, 32, %s388, [#allocation18], 16, 16, 1
        $region40: #{tpu_custom_call.1} parent=11 // pred_fallthru
          _
        // Predicated region
        $region41: #{tpu_custom_call.1} parent=11 // pred_check
          %p394 = pneg %p222
        $region42: #{tpu_custom_call.1} parent=11 // pred_check_branch
          %396 = sbr.rel (%p394) target = $region44
        $region43: #{tpu_custom_call.1} parent=11 // pred_region
          %s398 = ssub.s32 256, 256
          %399 = vsyncadd [#allocation18], %s398
          %s400 = sshll.u32 [#allocation19], 4
          %s401 = int_to_ptr.vmem [resolvable:$true] %s400
          %406 = dma.hbm_to_vmem [thread:$0]  %s8, 256, %s401, [#allocation18], 64, 64, 4
        $region44: #{tpu_custom_call.1} parent=11 // pred_fallthru
          _
        // Predicated region
        $region45: #{tpu_custom_call.1} parent=11 // pred_check
          %p407 = pneg %p243
        $region46: #{tpu_custom_call.1} parent=11 // pred_check_branch
          %409 = sbr.rel (%p407) target = $region48
        $region47: #{tpu_custom_call.1} parent=11 // pred_region
          _
        $region48: #{tpu_custom_call.1} parent=11 // pred_fallthru
          _
        // Predicated region
        $region49: #{tpu_custom_call.1} parent=11 // pred_check
          %p410 = pneg %p264
        $region50: #{tpu_custom_call.1} parent=11 // pred_check_branch
          %412 = sbr.rel (%p410) target = $region52
        $region51: #{tpu_custom_call.1} parent=11 // pred_region
          %s414 = ssub.s32 256, 256
          %415 = vsyncadd [#allocation21], %s414
          %s416 = sshll.u32 [#allocation20], 4
          %s417 = int_to_ptr.vmem [resolvable:$true] %s416
          %422 = dma.hbm_to_vmem [thread:$0]  %s10, 256, %s417, [#allocation21], 64, 64, 4
        $region52: #{tpu_custom_call.1} parent=11 // pred_fallthru
          _
      $region12: #{tpu_custom_call.1} parent=5 // pred_fallthru
        _
      %p423 = scmp.lt.s32.totalorder %s28, 2
      // Predicated region
      $region53: #{tpu_custom_call.1} parent=5 // pred_check
        %p424 = pneg %p423
      $region54: #{tpu_custom_call.1} parent=5 // pred_check_branch
        %426 = sbr.rel (%p424) target = $region56
      $region55: #{tpu_custom_call.1} parent=5 // pred_region
        // Predicated region
        $region57: #{tpu_custom_call.1} parent=55 // pred_check
          %p427 = pneg %p48
        $region58: #{tpu_custom_call.1} parent=55 // pred_check_branch
          %429 = sbr.rel (%p427) target = $region60
        $region59: #{tpu_custom_call.1} parent=55 // pred_region
          %s430 = sand.u32 %s38, 1
          %s431 = scalar_lea.sflag [#allocation6], %s430
          %s432 = sand.u32 %s38, 1
          %s433 = smul.addr %s432, 8
          %s434 = scalar_lea.vmem [#allocation5], %s433
          %s435 = smul.u32 4, %s28
          %s437 = ssub.s32 128, 128
          %438 = vsyncadd %s431, %s437
          %s439 = smul.addr %s435, 32
          %s440 = scalar_lea.hbm %s0, %s439
          %s441 = sshll.u32 %s434, 4
          %s442 = int_to_ptr.vmem [resolvable:$true] %s441
          %447 = dma.hbm_to_vmem [thread:$0]  %s440, 128, %s442, %s431, 32, 32, 2
        $region60: #{tpu_custom_call.1} parent=55 // pred_fallthru
          _
      $region56: #{tpu_custom_call.1} parent=5 // pred_fallthru
        _
      %p448 = scmp.le.s32.totalorder 1, %s28
      %p449 = scmp.lt.s32.totalorder %s28, 3
      %p450 = pnand %p448, %p449
      %p451 = pneg %p450
      // Predicated region
      $region61: #{tpu_custom_call.1} parent=5 // pred_check
        _
      $region62: #{tpu_custom_call.1} parent=5 // pred_check_branch
        %453 = sbr.rel (%p450) target = $region64
      $region63: #{tpu_custom_call.1} parent=5 // pred_region
        %s454 = ssub.s32 %s28, 1
        %s455 = sand.u32 %s41, 1
        %s456 = scalar_lea.sflag [#allocation6], %s455
        %s457 = sand.u32 %s41, 1
        %s458 = smul.addr %s457, 8
        %s459 = scalar_lea.vmem [#allocation5], %s458
        // Predicated region
        $region65: #{tpu_custom_call.1} parent=63 // pred_check
          %p460 = pneg %p54
        $region66: #{tpu_custom_call.1} parent=63 // pred_check_branch
          %462 = sbr.rel (%p460) target = $region68
        $region67: #{tpu_custom_call.1} parent=63 // pred_region
          %463 = dma.done %s456, 128
        $region68: #{tpu_custom_call.1} parent=63 // pred_fallthru
          _
        // Predicated region
        $region69: #{tpu_custom_call.1} parent=63 // pred_check
          %p464 = pneg %p75
        $region70: #{tpu_custom_call.1} parent=63 // pred_check_branch
          %466 = sbr.rel (%p464) target = $region72
        $region71: #{tpu_custom_call.1} parent=63 // pred_region
          %467 = dma.done [#allocation9], 256
        $region72: #{tpu_custom_call.1} parent=63 // pred_fallthru
          _
        // Predicated region
        $region73: #{tpu_custom_call.1} parent=63 // pred_check
          %p468 = pneg %p96
        $region74: #{tpu_custom_call.1} parent=63 // pred_check_branch
          %470 = sbr.rel (%p468) target = $region76
        $region75: #{tpu_custom_call.1} parent=63 // pred_region
          %471 = dma.done [#allocation9], 32
        $region76: #{tpu_custom_call.1} parent=63 // pred_fallthru
          _
        // Predicated region
        $region77: #{tpu_custom_call.1} parent=63 // pred_check
          %p472 = pneg %p117
        $region78: #{tpu_custom_call.1} parent=63 // pred_check_branch
          %474 = sbr.rel (%p472) target = $region80
        $region79: #{tpu_custom_call.1} parent=63 // pred_region
          %475 = dma.done [#allocation12], 64
        $region80: #{tpu_custom_call.1} parent=63 // pred_fallthru
          _
        // Predicated region
        $region81: #{tpu_custom_call.1} parent=63 // pred_check
          %p476 = pneg %p138
        $region82: #{tpu_custom_call.1} parent=63 // pred_check_branch
          %478 = sbr.rel (%p476) target = $region84
        $region83: #{tpu_custom_call.1} parent=63 // pred_region
          %479 = dma.done [#allocation12], 64
        $region84: #{tpu_custom_call.1} parent=63 // pred_fallthru
          _
        // Predicated region
        $region85: #{tpu_custom_call.1} parent=63 // pred_check
          %p480 = pneg %p159
        $region86: #{tpu_custom_call.1} parent=63 // pred_check_branch
          %482 = sbr.rel (%p480) target = $region88
        $region87: #{tpu_custom_call.1} parent=63 // pred_region
          %483 = dma.done [#allocation15], 512
        $region88: #{tpu_custom_call.1} parent=63 // pred_fallthru
          _
        // Predicated region
        $region89: #{tpu_custom_call.1} parent=63 // pred_check
          %p484 = pneg %p180
        $region90: #{tpu_custom_call.1} parent=63 // pred_check_branch
          %486 = sbr.rel (%p484) target = $region92
        $region91: #{tpu_custom_call.1} parent=63 // pred_region
          %487 = dma.done [#allocation15], 512
        $region92: #{tpu_custom_call.1} parent=63 // pred_fallthru
          _
        // Predicated region
        $region93: #{tpu_custom_call.1} parent=63 // pred_check
          %p488 = pneg %p201
        $region94: #{tpu_custom_call.1} parent=63 // pred_check_branch
          %490 = sbr.rel (%p488) target = $region96
        $region95: #{tpu_custom_call.1} parent=63 // pred_region
          %491 = dma.done [#allocation18], 32
        $region96: #{tpu_custom_call.1} parent=63 // pred_fallthru
          _
        // Predicated region
        $region97: #{tpu_custom_call.1} parent=63 // pred_check
          %p492 = pneg %p222
        $region98: #{tpu_custom_call.1} parent=63 // pred_check_branch
          %494 = sbr.rel (%p492) target = $region100
        $region99: #{tpu_custom_call.1} parent=63 // pred_region
          %495 = dma.done [#allocation18], 256
        $region100: #{tpu_custom_call.1} parent=63 // pred_fallthru
          _
        // Predicated region
        $region101: #{tpu_custom_call.1} parent=63 // pred_check
          %p496 = pneg %p264
        $region102: #{tpu_custom_call.1} parent=63 // pred_check_branch
          %498 = sbr.rel (%p496) target = $region104
        $region103: #{tpu_custom_call.1} parent=63 // pred_region
          %499 = dma.done [#allocation21], 256
        $region104: #{tpu_custom_call.1} parent=63 // pred_fallthru
          _
        %s500 = sand.u32 %s41, 1
        %s501 = scalar_lea.sflag [#allocation6], %s500
        %s502 = sand.u32 %s41, 1
        %s503 = smul.addr %s502, 8
        %s504 = scalar_lea.vmem [#allocation5], %s503
        %p505 = pneg %p54
        %p506 = pneg %p51
        %p507 = pneg %p75
        %p508 = pneg %p72
        %p509 = pneg %p96
        %p510 = pneg %p93
        %p511 = pneg %p117
        %p512 = pneg %p114
        %p513 = pneg %p138
        %p514 = pneg %p135
        %p515 = pneg %p159
        %p516 = pneg %p156
        %p517 = pneg %p180
        %p518 = pneg %p177
        %p519 = pneg %p201
        %p520 = pneg %p198
        %p521 = pneg %p222
        %p522 = pneg %p219
        %p523 = pneg %p243
        %p524 = pneg %p240
        %p525 = pneg %p264
        %p526 = pneg %p261
        %p527 = pneg %p290
        %p528 = pneg %p287
        %s529 = sand.u32 %s277, 1
        %s530 = scalar_lea.sflag [#allocation7], %s529
        %s531 = sand.u32 %s277, 1
        %s532 = smul.addr %s531, 8
        %s533 = scalar_lea.vmem [#allocation22], %s532
        %s534 = smul.u32 4, %s33
        %s535 = smul.u32 4, %s33
        %p537 = scmp.eq.s32.totalorder %s33, 0
        // Predicated region
        $region105: #{tpu_custom_call.1} parent=63 // pred_check
          %p538 = pneg %p537
        $region106: #{tpu_custom_call.1} parent=63 // pred_check_branch
          %540 = sbr.rel (%p538) target = $region108
        $region107: #{tpu_custom_call.1} parent=63 // pred_region
          %v541 = vld [vmem:[#allocation11] sm:$0x3]
          %v542 = vld [vmem:[#allocation11 + $0x2] sm:$0x3]
          %vm543 = vcmask 254976
          %544 = vst.msk [vmem:[#allocation2] sm:$0x3] %vm543, %v541
          %545 = vst.msk [vmem:[#allocation2 + $0x2] sm:$0x3] %vm543, %v542
          %v546 = vld [vmem:[#allocation13] sm:$0x3]
          %v547 = vld [vmem:[#allocation13 + $0x2] sm:$0x3]
          %548 = vst.msk [vmem:[#allocation3] sm:$0x3] %vm543, %v546
          %549 = vst.msk [vmem:[#allocation3 + $0x2] sm:$0x3] %vm543, %v547
          %550 = vst.msk [vmem:[#allocation4] sm:$0x3] %vm543, 0.0
        $region108: #{tpu_custom_call.1} parent=63 // pred_fallthru
          _
        %v551 = vld [vmem:[#allocation8] sm:$0xff]
        %v552 = vld [vmem:[#allocation8 + $0x8] sm:$0xff]
        %v553 = vld [vmem:[#allocation10] sm:$0x3]
        %v554 = vld [vmem:[#allocation4] sm:$0x3]
        %v555 = vld [vmem:[%s459] sm:$0x3]
        %v556 = vld [vmem:[#allocation2] sm:$0x3]
        %v557 = vld [vmem:[#allocation3] sm:$0x3]
        %v558 = vpack.c.bf16 %v554, %v554
        %v559 = vld [vmem:[#allocation14] sm:$0xf]
        %v560 = vld [vmem:[#allocation14 + $0x4] sm:$0xf]
        %v561 = vld [vmem:[#allocation14 + $0x8] sm:$0xf]
        %v562 = vld [vmem:[#allocation14 + $0xc] sm:$0xf]
        %v567 = vunpack.c.l.b16 %v559
        %v568 = vunpack.c.l.b16 %v560
        %v569 = vunpack.c.l.b16 %v561
        %v570 = vunpack.c.l.b16 %v562
        %v571 = vpack.c.b16 %v568, %v567
        %v572 = vpack.c.b16 %v570, %v569
        %vm575 = vcmask 261120
        %v577 = vsel %vm575, %v558, 0
        %579 = vmatprep.subr.bf16.mxu0 0
        %580 = vmatpush1.bf16.msra.mxu0 0
        %581 = vmatprep.subr.bf16.mxu0 0
        %582 = vmatpush1.bf16.msra.mxu0 0
        %583 = vmatprep.subr.bf16.mxu0 0
        %584 = vmatpush1.bf16.msra.mxu0 0
        %585 = vmatprep.subr.bf16.mxu0 0
        %586 = vmatpush1.bf16.msra.mxu0 0
        %587 = vmatprep.subr.bf16.mxu0 0
        %588 = vmatpush1.bf16.msra.mxu0 0
        %589 = vmatprep.subr.bf16.mxu0 0
        %590 = vmatpush1.bf16.msra.mxu0 0
        %591 = vmatprep.subr.bf16.mxu0 0
        %592 = vmatpush1.bf16.msra.mxu0 %v572
        %593 = vmatprep.subr.bf16.mxu0 0
        %594 = vmatpush1.bf16.msra.mxu0 %v571
        %595 = vmatprep.subr.bf16.mxu0 0
        %596 = vmatpush2.bf16.msra.mxu0 0
        %597 = vmatprep.subr.bf16.mxu0 0
        %598 = vmatpush2.bf16.msra.mxu0 0
        %599 = vmatprep.subr.bf16.mxu0 0
        %600 = vmatpush2.bf16.msra.mxu0 0
        %601 = vmatprep.subr.bf16.mxu0 0
        %602 = vmatpush2.bf16.msra.mxu0 0
        %603 = vmatprep.subr.bf16.mxu0 0
        %604 = vmatpush2.bf16.msra.mxu0 0
        %605 = vmatprep.subr.bf16.mxu0 0
        %606 = vmatpush2.bf16.msra.mxu0 0
        %607 = vmatprep.subr.bf16.mxu0 0
        %608 = vmatpush2.bf16.msra.mxu0 0
        %609 = vmatprep.subr.bf16.mxu0 0
        %610 = vmatpush2.bf16.msra.mxu0 0
        %611 = vmatprep.mubr.bf16.mxu0 0
        %612 = vmatmul.mubr.bf16.gmra.mxu0 %v577
        %v613 = vpop.f32.mrf.mxu0
        %v614 = vadd.f32 0.0, %v613
        %v615 = vpop.f32.mrf.mxu0
        %v616 = vpop.f32.mrf.mxu0
        %v617 = vpop.f32.mrf.mxu0
        %618 = vdwg.mxu0
        %v619 = vadd.f32 %v555, %v614
        %v620 = vpack.c.bf16 %v556, %v556
        %v621 = vld [vmem:[#allocation16] sm:$0xf]
        %v622 = vld [vmem:[#allocation16 + $0x4] sm:$0xf]
        %v623 = vld [vmem:[#allocation16 + $0x8] sm:$0xf]
        %v624 = vld [vmem:[#allocation16 + $0xc] sm:$0xf]
        %v629 = vunpack.c.l.b16 %v621
        %v630 = vunpack.c.l.b16 %v622
        %v631 = vunpack.c.l.b16 %v623
        %v632 = vunpack.c.l.b16 %v624
        %v633 = vpack.c.b16 %v630, %v629
        %v634 = vpack.c.b16 %v632, %v631
        %v638 = vsel %vm575, %v620, 0
        %640 = vmatprep.subr.bf16.mxu0 0
        %641 = vmatpush1.bf16.msra.mxu0 0
        %642 = vmatprep.subr.bf16.mxu0 0
        %643 = vmatpush1.bf16.msra.mxu0 0
        %644 = vmatprep.subr.bf16.mxu0 0
        %645 = vmatpush1.bf16.msra.mxu0 0
        %646 = vmatprep.subr.bf16.mxu0 0
        %647 = vmatpush1.bf16.msra.mxu0 0
        %648 = vmatprep.subr.bf16.mxu0 0
        %649 = vmatpush1.bf16.msra.mxu0 0
        %650 = vmatprep.subr.bf16.mxu0 0
        %651 = vmatpush1.bf16.msra.mxu0 0
        %652 = vmatprep.subr.bf16.mxu0 0
        %653 = vmatpush1.bf16.msra.mxu0 %v634
        %654 = vmatprep.subr.bf16.mxu0 0
        %655 = vmatpush1.bf16.msra.mxu0 %v633
        %656 = vmatprep.subr.bf16.mxu0 0
        %657 = vmatpush2.bf16.msra.mxu0 0
        %658 = vmatprep.subr.bf16.mxu0 0
        %659 = vmatpush2.bf16.msra.mxu0 0
        %660 = vmatprep.subr.bf16.mxu0 0
        %661 = vmatpush2.bf16.msra.mxu0 0
        %662 = vmatprep.subr.bf16.mxu0 0
        %663 = vmatpush2.bf16.msra.mxu0 0
        %664 = vmatprep.subr.bf16.mxu0 0
        %665 = vmatpush2.bf16.msra.mxu0 0
        %666 = vmatprep.subr.bf16.mxu0 0
        %667 = vmatpush2.bf16.msra.mxu0 0
        %668 = vmatprep.subr.bf16.mxu0 0
        %669 = vmatpush2.bf16.msra.mxu0 0
        %670 = vmatprep.subr.bf16.mxu0 0
        %671 = vmatpush2.bf16.msra.mxu0 0
        %672 = vmatprep.mubr.bf16.mxu0 0
        %673 = vmatmul.mubr.bf16.gmra.mxu0 %v638
        %v674 = vpop.f32.mrf.mxu0
        %v675 = vadd.f32 0.0, %v674
        %v676 = vpop.f32.mrf.mxu0
        %v677 = vpop.f32.mrf.mxu0
        %v678 = vpop.f32.mrf.mxu0
        %679 = vdwg.mxu0
        %v680 = vadd.f32 %v619, %v675
        %v681 = vxor.u32 %v680, 2147483648
        %v682 = vmul.f32 %v681, 1.442695
        %v683 = vpow.pop %v682
        %v684 = vadd.f32 %v683, 1.0
        %v685 = vrcp.pop %v684
        %v686 = vmul.f32 1.0, %v685
        %v687 = vtanh.pop %v680
        %689 = vrot.lane.b32.xlu0 %v557, 32
        %v690 = vpop.permute.xlu0 %689
        %v692 = vmul.f32 %v686, %v690
        %694 = vrot.lane.b32.xlu0 %v687, 32
        %v695 = vpop.permute.xlu0 %694
        %v697 = vmul.f32 %v686, %v695
        %699 = vrot.lane.b32.xlu0 %v697, 32
        %v700 = vpop.permute.xlu0 %699
        %v702 = vadd.f32 %v692, %v700
        %v703 = vtanh.pop %v702
        %705 = vrot.lane.b32.xlu0 %v703, 32
        %v706 = vpop.permute.xlu0 %705
        %v708 = vmul.f32 %v686, %v706
        %710 = vrot.lane.b32.xlu0 %v708, 64
        %v711 = vpop.permute.xlu0 %710
        %vm713 = vcmask 254976
        %714 = vst.msk [vmem:[#allocation2] sm:$0x3] %vm713, %v711
        %716 = vrot.lane.b32.xlu0 %v702, 96
        %v717 = vpop.permute.xlu0 %716
        %719 = vst.msk [vmem:[#allocation3] sm:$0x3] %vm713, %v717
        %s720 = scalar_lea.vmem [#allocation17], 1
        %v721 = vld [vmem:[%s720] sm:$0x1]
        %s722 = scalar_lea.vmem [#allocation2], 2
        %v723 = vld [vmem:[%s722] sm:$0x3]
        %s724 = scalar_lea.vmem [#allocation3], 2
        %v725 = vld [vmem:[%s724] sm:$0x3]
        %v726 = vpack.c.bf16 %v708, %v708
        %s727 = scalar_lea.vmem [#allocation14], 16
        %v728 = vld [vmem:[%s727] sm:$0xf]
        %v729 = vld [vmem:[%s727 + $0x4] sm:$0xf]
        %v730 = vld [vmem:[%s727 + $0x8] sm:$0xf]
        %v731 = vld [vmem:[%s727 + $0xc] sm:$0xf]
        %733 = vrot.lane.b32.xlu0 %v726, 64
        %v734 = vpop.permute.xlu0 %733
        %v739 = vunpack.c.l.b16 %v728
        %v740 = vunpack.c.l.b16 %v729
        %v741 = vunpack.c.l.b16 %v730
        %v742 = vunpack.c.l.b16 %v731
        %v743 = vpack.c.b16 %v740, %v739
        %v744 = vpack.c.b16 %v742, %v741
        %v748 = vsel %vm575, %v734, 0
        %750 = vmatprep.subr.bf16.mxu0 0
        %751 = vmatpush1.bf16.msra.mxu0 0
        %752 = vmatprep.subr.bf16.mxu0 0
        %753 = vmatpush1.bf16.msra.mxu0 0
        %754 = vmatprep.subr.bf16.mxu0 0
        %755 = vmatpush1.bf16.msra.mxu0 0
        %756 = vmatprep.subr.bf16.mxu0 0
        %757 = vmatpush1.bf16.msra.mxu0 0
        %758 = vmatprep.subr.bf16.mxu0 0
        %759 = vmatpush1.bf16.msra.mxu0 0
        %760 = vmatprep.subr.bf16.mxu0 0
        %761 = vmatpush1.bf16.msra.mxu0 0
        %762 = vmatprep.subr.bf16.mxu0 0
        %763 = vmatpush1.bf16.msra.mxu0 %v744
        %764 = vmatprep.subr.bf16.mxu0 0
        %765 = vmatpush1.bf16.msra.mxu0 %v743
        %766 = vmatprep.subr.bf16.mxu0 0
        %767 = vmatpush2.bf16.msra.mxu0 0
        %768 = vmatprep.subr.bf16.mxu0 0
        %769 = vmatpush2.bf16.msra.mxu0 0
        %770 = vmatprep.subr.bf16.mxu0 0
        %771 = vmatpush2.bf16.msra.mxu0 0
        %772 = vmatprep.subr.bf16.mxu0 0
        %773 = vmatpush2.bf16.msra.mxu0 0
        %774 = vmatprep.subr.bf16.mxu0 0
        %775 = vmatpush2.bf16.msra.mxu0 0
        %776 = vmatprep.subr.bf16.mxu0 0
        %777 = vmatpush2.bf16.msra.mxu0 0
        %778 = vmatprep.subr.bf16.mxu0 0
        %779 = vmatpush2.bf16.msra.mxu0 0
        %780 = vmatprep.subr.bf16.mxu0 0
        %781 = vmatpush2.bf16.msra.mxu0 0
        %782 = vmatprep.mubr.bf16.mxu0 0
        %783 = vmatmul.mubr.bf16.gmra.mxu0 %v748
        %v784 = vpop.f32.mrf.mxu0
        %v785 = vadd.f32 0.0, %v784
        %v786 = vpop.f32.mrf.mxu0
        %v787 = vpop.f32.mrf.mxu0
        %v788 = vpop.f32.mrf.mxu0
        %789 = vdwg.mxu0
        %v791 = vlaneseq
        %v792 = vshrl.u32 %v791, 7
        %v793 = vsub.s32 0, %v792
        %v794 = vrot.slane %v721, %v793
        %v796 = vadd.f32 %v794, %v785
        %v797 = vpack.c.bf16 %v723, %v723
        %s798 = scalar_lea.vmem [#allocation16], 16
        %v799 = vld [vmem:[%s798] sm:$0xf]
        %v800 = vld [vmem:[%s798 + $0x4] sm:$0xf]
        %v801 = vld [vmem:[%s798 + $0x8] sm:$0xf]
        %v802 = vld [vmem:[%s798 + $0xc] sm:$0xf]
        %v807 = vunpack.c.l.b16 %v799
        %v808 = vunpack.c.l.b16 %v800
        %v809 = vunpack.c.l.b16 %v801
        %v810 = vunpack.c.l.b16 %v802
        %v811 = vpack.c.b16 %v808, %v807
        %v812 = vpack.c.b16 %v810, %v809
        %v816 = vsel %vm575, %v797, 0
        %818 = vmatprep.subr.bf16.mxu0 0
        %819 = vmatpush1.bf16.msra.mxu0 0
        %820 = vmatprep.subr.bf16.mxu0 0
        %821 = vmatpush1.bf16.msra.mxu0 0
        %822 = vmatprep.subr.bf16.mxu0 0
        %823 = vmatpush1.bf16.msra.mxu0 0
        %824 = vmatprep.subr.bf16.mxu0 0
        %825 = vmatpush1.bf16.msra.mxu0 0
        %826 = vmatprep.subr.bf16.mxu0 0
        %827 = vmatpush1.bf16.msra.mxu0 0
        %828 = vmatprep.subr.bf16.mxu0 0
        %829 = vmatpush1.bf16.msra.mxu0 0
        %830 = vmatprep.subr.bf16.mxu0 0
        %831 = vmatpush1.bf16.msra.mxu0 %v812
        %832 = vmatprep.subr.bf16.mxu0 0
        %833 = vmatpush1.bf16.msra.mxu0 %v811
        %834 = vmatprep.subr.bf16.mxu0 0
        %835 = vmatpush2.bf16.msra.mxu0 0
        %836 = vmatprep.subr.bf16.mxu0 0
        %837 = vmatpush2.bf16.msra.mxu0 0
        %838 = vmatprep.subr.bf16.mxu0 0
        %839 = vmatpush2.bf16.msra.mxu0 0
        %840 = vmatprep.subr.bf16.mxu0 0
        %841 = vmatpush2.bf16.msra.mxu0 0
        %842 = vmatprep.subr.bf16.mxu0 0
        %843 = vmatpush2.bf16.msra.mxu0 0
        %844 = vmatprep.subr.bf16.mxu0 0
        %845 = vmatpush2.bf16.msra.mxu0 0
        %846 = vmatprep.subr.bf16.mxu0 0
        %847 = vmatpush2.bf16.msra.mxu0 0
        %848 = vmatprep.subr.bf16.mxu0 0
        %849 = vmatpush2.bf16.msra.mxu0 0
        %850 = vmatprep.mubr.bf16.mxu0 0
        %851 = vmatmul.mubr.bf16.gmra.mxu0 %v816
        %v852 = vpop.f32.mrf.mxu0
        %v853 = vadd.f32 0.0, %v852
        %v854 = vpop.f32.mrf.mxu0
        %v855 = vpop.f32.mrf.mxu0
        %v856 = vpop.f32.mrf.mxu0
        %857 = vdwg.mxu0
        %v858 = vadd.f32 %v796, %v853
        %v859 = vxor.u32 %v858, 2147483648
        %v860 = vmul.f32 %v859, 1.442695
        %v861 = vpow.pop %v860
        %v862 = vadd.f32 %v861, 1.0
        %v863 = vrcp.pop %v862
        %v864 = vmul.f32 1.0, %v863
        %v865 = vtanh.pop %v858
        %867 = vrot.lane.b32.xlu0 %v725, 32
        %v868 = vpop.permute.xlu0 %867
        %v870 = vmul.f32 %v864, %v868
        %872 = vrot.lane.b32.xlu0 %v865, 32
        %v873 = vpop.permute.xlu0 %872
        %v875 = vmul.f32 %v864, %v873
        %877 = vrot.lane.b32.xlu0 %v875, 32
        %v878 = vpop.permute.xlu0 %877
        %v880 = vadd.f32 %v870, %v878
        %v881 = vtanh.pop %v880
        %883 = vrot.lane.b32.xlu0 %v881, 32
        %v884 = vpop.permute.xlu0 %883
        %v886 = vmul.f32 %v864, %v884
        %888 = vrot.lane.b32.xlu0 %v886, 64
        %v889 = vpop.permute.xlu0 %888
        %891 = vst.msk [vmem:[%s722] sm:$0x3] %vm713, %v889
        %893 = vrot.lane.b32.xlu0 %v880, 96
        %v894 = vpop.permute.xlu0 %893
        %896 = vst.msk [vmem:[%s724] sm:$0x3] %vm713, %v894
        %v897 = vpack.c.bf16 %v886, %v886
        %v898 = vld [vmem:[#allocation19] sm:$0xf]
        %v899 = vld [vmem:[#allocation19 + $0x4] sm:$0xf]
        %v900 = vld [vmem:[#allocation19 + $0x8] sm:$0xf]
        %v901 = vld [vmem:[#allocation19 + $0xc] sm:$0xf]
        %903 = vrot.lane.b32.xlu0 %v897, 64
        %v904 = vpop.permute.xlu0 %903
        %v909 = vunpack.c.l.b16 %v898
        %v910 = vunpack.c.l.b16 %v899
        %v911 = vunpack.c.l.b16 %v900
        %v912 = vunpack.c.l.b16 %v901
        %v913 = vpack.c.b16 %v910, %v909
        %v914 = vpack.c.b16 %v912, %v911
        %v918 = vsel %vm575, %v904, 0
        %920 = vmatprep.subr.bf16.mxu0 0
        %921 = vmatpush1.bf16.msra.mxu0 0
        %922 = vmatprep.subr.bf16.mxu0 0
        %923 = vmatpush1.bf16.msra.mxu0 0
        %924 = vmatprep.subr.bf16.mxu0 0
        %925 = vmatpush1.bf16.msra.mxu0 0
        %926 = vmatprep.subr.bf16.mxu0 0
        %927 = vmatpush1.bf16.msra.mxu0 0
        %928 = vmatprep.subr.bf16.mxu0 0
        %929 = vmatpush1.bf16.msra.mxu0 0
        %930 = vmatprep.subr.bf16.mxu0 0
        %931 = vmatpush1.bf16.msra.mxu0 0
        %932 = vmatprep.subr.bf16.mxu0 0
        %933 = vmatpush1.bf16.msra.mxu0 %v914
        %934 = vmatprep.subr.bf16.mxu0 0
        %935 = vmatpush1.bf16.msra.mxu0 %v913
        %936 = vmatprep.subr.bf16.mxu0 0
        %937 = vmatpush2.bf16.msra.mxu0 0
        %938 = vmatprep.subr.bf16.mxu0 0
        %939 = vmatpush2.bf16.msra.mxu0 0
        %940 = vmatprep.subr.bf16.mxu0 0
        %941 = vmatpush2.bf16.msra.mxu0 0
        %942 = vmatprep.subr.bf16.mxu0 0
        %943 = vmatpush2.bf16.msra.mxu0 0
        %944 = vmatprep.subr.bf16.mxu0 0
        %945 = vmatpush2.bf16.msra.mxu0 0
        %946 = vmatprep.subr.bf16.mxu0 0
        %947 = vmatpush2.bf16.msra.mxu0 0
        %948 = vmatprep.subr.bf16.mxu0 0
        %949 = vmatpush2.bf16.msra.mxu0 0
        %950 = vmatprep.subr.bf16.mxu0 0
        %951 = vmatpush2.bf16.msra.mxu0 0
        %952 = vmatprep.mubr.bf16.mxu0 0
        %953 = vmatmul.mubr.bf16.gmra.mxu0 %v918
        %v954 = vpop.f32.mrf.mxu0
        %v955 = vadd.f32 0.0, %v954
        %v956 = vpop.f32.mrf.mxu0
        %v957 = vpop.f32.mrf.mxu0
        %v958 = vpop.f32.mrf.mxu0
        %959 = vdwg.mxu0
        %v962 = vunpack.c.l.s4 1966171168
        %v963 = vunpack.c.0.s8 %v962
        %v964 = vlaneseq
        %v965 = vshrl.u32 %v964, 7
        %v966 = vsub.s32 %v963, %v965
        %v967 = vrot.slane %v955, %v966
        %v968 = vcombine.high %v967, %v967
        %v970 = vunpack.c.l.s4 1966171168
        %v971 = vunpack.c.0.s8 %v970
        %v972 = vlaneseq
        %v973 = vshrl.u32 %v972, 7
        %v974 = vsub.s32 %v971, %v973
        %v975 = vrot.slane %v967, %v974
        %v977 = vunpack.c.l.s4 1966171168
        %v978 = vunpack.c.0.s8 %v977
        %v979 = vlaneseq
        %v980 = vshrl.u32 %v979, 7
        %v981 = vsub.s32 %v978, %v980
        %v982 = vrot.slane %v968, %v981
        %v983 = vlaneseq
        %v984 = vshrl.u32 %v983, 7
        %v985 = vsub.s32 0, %v984
        %v986 = vrot.slane %v975, %v985
        %v987 = vlaneseq
        %v988 = vshrl.u32 %v987, 7
        %v989 = vsub.s32 0, %v988
        %v990 = vrot.slane %v982, %v989
        %v993 = vmul.f32 %v551, %v986
        %v994 = vmul.f32 %v552, %v990
        %v995 = vsel %vm575, %v993, 0.0
        %996 = vadd.xlane.f32.xlu0 %v995
        %v997 = vpop.xlane.xlu0 %996
        %v998 = vsel %vm575, %v994, 0.0
        %999 = vadd.xlane.f32.xlu0 %v998
        %v1000 = vpop.xlane.xlu0 %999
        %v1002 = vlaneseq
        %v1003 = vshrl.u32 %v1002, 7
        %v1004 = vsub.s32 0, %v1003
        %v1005 = vrot.slane %v553, %v1004
        %1007 = vbcast.lane.b32.xlu0 %v1005, 256
        %v1008 = vpop.permute.xlu0 %1007
        %v1009 = vlaneseq
        %v1010 = vshrl.u32 %v1009, 7
        %v1011 = vsub.s32 1, %v1010
        %v1012 = vrot.slane %v553, %v1011
        %1014 = vbcast.lane.b32.xlu0 %v1012, 256
        %v1015 = vpop.permute.xlu0 %1014
        %v1018 = vadd.f32 %v997, %v1008
        %v1019 = vadd.f32 %v1000, %v1015
        %1022 = vset.pattern.permute.xlu0 0
        %1023 = vperm.xlu0 %1022, %v1018
        %v1024 = vpop.permute.xlu0 %1023
        %1025 = vset.pattern.permute.xlu0 0
        %1026 = vperm.xlu0 %1025, %v1019
        %v1027 = vpop.permute.xlu0 %1026
        %v1028 = vlaneseq
        %v1029 = vand.u32 %v1028, 127
        %v1030 = vlaneseq
        %v1031 = vshrl.u32 %v1030, 7
        %v1032 = vsub.s32 %v1029, %v1031
        %v1033 = vrot.slane %v1024, %v1032
        %v1034 = vlaneseq
        %v1035 = vshrl.u32 %v1034, 7
        %v1036 = vsub.s32 %v1029, %v1035
        %v1037 = vrot.slane %v1027, %v1036
        %vm1038 = vcmask 1041409
        %v1039 = vsel %vm1038, %v1037, %v1033
        %vm1041 = vcmask 58368
        %v1042 = vsel %vm1041, %v1039, -inf
        %1043 = vmax.xlane.f32.xlu0 %v1042
        %v1044 = vpop.xlane.xlu0 %1043
        %v1046 = vlaneseq
        %v1047 = vshrl.u32 %v1046, 7
        %v1048 = vsub.s32 0, %v1047
        %v1049 = vrot.slane %v1044, %v1048
        %v1050 = vlaneseq
        %v1051 = vshrl.u32 %v1050, 7
        %v1052 = vsub.s32 1, %v1051
        %v1053 = vrot.slane %v1044, %v1052
        %v1056 = vsub.f32 %v1018, %v1049
        %v1057 = vsub.f32 %v1019, %v1053
        %v1058 = vmul.f32 %v1056, 1.442695
        %v1059 = vpow.pop %v1058
        %v1060 = vmul.f32 %v1057, 1.442695
        %v1061 = vpow.pop %v1060
        %1064 = vset.pattern.permute.xlu0 0
        %1065 = vperm.xlu0 %1064, %v1059
        %v1066 = vpop.permute.xlu0 %1065
        %1067 = vset.pattern.permute.xlu0 0
        %1068 = vperm.xlu0 %1067, %v1061
        %v1069 = vpop.permute.xlu0 %1068
        %v1070 = vlaneseq
        %v1071 = vshrl.u32 %v1070, 7
        %v1072 = vsub.s32 %v1029, %v1071
        %v1073 = vrot.slane %v1066, %v1072
        %v1074 = vlaneseq
        %v1075 = vshrl.u32 %v1074, 7
        %v1076 = vsub.s32 %v1029, %v1075
        %v1077 = vrot.slane %v1069, %v1076
        %v1078 = vsel %vm1038, %v1077, %v1073
        %v1080 = vsel %vm1041, %v1078, 0.0
        %1081 = vadd.xlane.f32.xlu0 %v1080
        %v1082 = vpop.xlane.xlu0 %1081
        %v1084 = vlaneseq
        %v1085 = vshrl.u32 %v1084, 7
        %v1086 = vsub.s32 0, %v1085
        %v1087 = vrot.slane %v1082, %v1086
        %v1088 = vlaneseq
        %v1089 = vshrl.u32 %v1088, 7
        %v1090 = vsub.s32 1, %v1089
        %v1091 = vrot.slane %v1082, %v1090
        %v1094 = vrcp.pop %v1087
        %v1095 = vmul.f32 %v1059, %v1094
        %v1096 = vrcp.pop %v1091
        %v1097 = vmul.f32 %v1061, %v1096
        %1099 = vset.pattern.permute.xlu0 0
        %1100 = vperm.xlu0 %1099, %v1095
        %v1101 = vpop.permute.xlu0 %1100
        %1104 = vset.pattern.permute.xlu0 0
        %1105 = vperm.xlu0 %1104, %v1097
        %v1106 = vpop.permute.xlu0 %1105
        %v1108 = vmul.f32 %v1101, %v551
        %v1109 = vmul.f32 %v1106, %v552
        %v1110 = vsel %vm575, %v1108, 0.0
        %v1111 = vrot.slane %v1110, 4
        %v1112 = vadd.f32 %v1110, %v1111
        %v1113 = vrot.slane %v1112, 2
        %v1114 = vadd.f32 %v1112, %v1113
        %v1115 = vrot.slane %v1114, 1
        %v1116 = vadd.f32 %v1114, %v1115
        %v1117 = vsel %vm575, %v1109, 0.0
        %v1118 = vrot.slane %v1117, 4
        %v1119 = vadd.f32 %v1117, %v1118
        %v1120 = vrot.slane %v1119, 2
        %v1121 = vadd.f32 %v1119, %v1120
        %v1122 = vrot.slane %v1121, 1
        %v1123 = vadd.f32 %v1121, %v1122
        %v1124 = vpack.c.bf16 %v1116, %v1116
        %v1125 = vpack.c.bf16 %v1123, %v1123
        %v1126 = vld [vmem:[%s9] sm:$0xf]
        %v1127 = vld [vmem:[%s9 + $0x4] sm:$0xf]
        %v1128 = vld [vmem:[%s9 + $0x8] sm:$0xf]
        %v1129 = vld [vmem:[%s9 + $0xc] sm:$0xf]
        %v1130 = vld [vmem:[#allocation20] sm:$0xf]
        %v1131 = vld [vmem:[#allocation20 + $0x4] sm:$0xf]
        %v1132 = vld [vmem:[#allocation20 + $0x8] sm:$0xf]
        %v1133 = vld [vmem:[#allocation20 + $0xc] sm:$0xf]
        %v1138 = vunpack.c.l.b16 %v1130
        %v1139 = vunpack.c.l.b16 %v1131
        %v1140 = vunpack.c.l.b16 %v1132
        %v1141 = vunpack.c.l.b16 %v1133
        %v1142 = vpack.c.b16 %v1139, %v1138
        %v1143 = vpack.c.b16 %v1141, %v1140
        %1146 = vmatprep.subr.bf16.mxu0 0
        %1147 = vmatpush1.bf16.msra.mxu0 0
        %1148 = vmatprep.subr.bf16.mxu0 0
        %1149 = vmatpush1.bf16.msra.mxu0 0
        %1150 = vmatprep.subr.bf16.mxu0 0
        %1151 = vmatpush1.bf16.msra.mxu0 0
        %1152 = vmatprep.subr.bf16.mxu0 0
        %1153 = vmatpush1.bf16.msra.mxu0 0
        %1154 = vmatprep.subr.bf16.mxu0 0
        %1155 = vmatpush1.bf16.msra.mxu0 0
        %1156 = vmatprep.subr.bf16.mxu0 0
        %1157 = vmatpush1.bf16.msra.mxu0 0
        %1158 = vmatprep.subr.bf16.mxu0 0
        %1159 = vmatpush1.bf16.msra.mxu0 %v1143
        %1160 = vmatprep.subr.bf16.mxu0 0
        %1161 = vmatpush1.bf16.msra.mxu0 %v1142
        %1162 = vmatprep.subr.bf16.mxu0 0
        %1163 = vmatpush2.bf16.msra.mxu0 0
        %1164 = vmatprep.subr.bf16.mxu0 0
        %1165 = vmatpush2.bf16.msra.mxu0 0
        %1166 = vmatprep.subr.bf16.mxu0 0
        %1167 = vmatpush2.bf16.msra.mxu0 0
        %1168 = vmatprep.subr.bf16.mxu0 0
        %1169 = vmatpush2.bf16.msra.mxu0 0
        %1170 = vmatprep.subr.bf16.mxu0 0
        %1171 = vmatpush2.bf16.msra.mxu0 0
        %1172 = vmatprep.subr.bf16.mxu0 0
        %1173 = vmatpush2.bf16.msra.mxu0 0
        %1174 = vmatprep.subr.bf16.mxu0 0
        %1175 = vmatpush2.bf16.msra.mxu0 0
        %1176 = vmatprep.subr.bf16.mxu0 0
        %1177 = vmatpush2.bf16.msra.mxu0 0
        %1178 = vmatprep.mubr.bf16.mxu0 0
        %1179 = vmatmul.mubr.bf16.gmra.mxu0 %v918
        %v1180 = vpop.f32.mrf.mxu0
        %v1181 = vadd.f32 0.0, %v1180
        %v1182 = vpop.f32.mrf.mxu0
        %v1183 = vpop.f32.mrf.mxu0
        %v1184 = vpop.f32.mrf.mxu0
        %1185 = vdwg.mxu0
        %v1188 = vunpack.c.l.b16 %v1124
        %v1189 = vunpack.c.l.b16 %v1125
        %v1190 = vsel %vm1038, %v1189, %v1188
        %v1191 = vpack.c.b16 %v1190, %v1190
        %v1196 = vunpack.c.l.b16 %v1126
        %v1197 = vunpack.c.l.b16 %v1127
        %v1198 = vunpack.c.l.b16 %v1128
        %v1199 = vunpack.c.l.b16 %v1129
        %v1200 = vpack.c.b16 %v1197, %v1196
        %v1201 = vpack.c.b16 %v1199, %v1198
        %v1205 = vsel %vm575, %v1191, 0
        %1207 = vmatprep.subr.bf16.mxu0 0
        %1208 = vmatpush1.bf16.msra.mxu0 0
        %1209 = vmatprep.subr.bf16.mxu0 0
        %1210 = vmatpush1.bf16.msra.mxu0 0
        %1211 = vmatprep.subr.bf16.mxu0 0
        %1212 = vmatpush1.bf16.msra.mxu0 0
        %1213 = vmatprep.subr.bf16.mxu0 0
        %1214 = vmatpush1.bf16.msra.mxu0 0
        %1215 = vmatprep.subr.bf16.mxu0 0
        %1216 = vmatpush1.bf16.msra.mxu0 0
        %1217 = vmatprep.subr.bf16.mxu0 0
        %1218 = vmatpush1.bf16.msra.mxu0 0
        %1219 = vmatprep.subr.bf16.mxu0 0
        %1220 = vmatpush1.bf16.msra.mxu0 %v1201
        %1221 = vmatprep.subr.bf16.mxu0 0
        %1222 = vmatpush1.bf16.msra.mxu0 %v1200
        %1223 = vmatprep.subr.bf16.mxu0 0
        %1224 = vmatpush2.bf16.msra.mxu0 0
        %1225 = vmatprep.subr.bf16.mxu0 0
        %1226 = vmatpush2.bf16.msra.mxu0 0
        %1227 = vmatprep.subr.bf16.mxu0 0
        %1228 = vmatpush2.bf16.msra.mxu0 0
        %1229 = vmatprep.subr.bf16.mxu0 0
        %1230 = vmatpush2.bf16.msra.mxu0 0
        %1231 = vmatprep.subr.bf16.mxu0 0
        %1232 = vmatpush2.bf16.msra.mxu0 0
        %1233 = vmatprep.subr.bf16.mxu0 0
        %1234 = vmatpush2.bf16.msra.mxu0 0
        %1235 = vmatprep.subr.bf16.mxu0 0
        %1236 = vmatpush2.bf16.msra.mxu0 0
        %1237 = vmatprep.subr.bf16.mxu0 0
        %1238 = vmatpush2.bf16.msra.mxu0 0
        %1239 = vmatprep.mubr.bf16.mxu0 0
        %1240 = vmatmul.mubr.bf16.gmra.mxu0 %v1205
        %v1241 = vpop.f32.mrf.mxu0
        %v1242 = vadd.f32 %v1181, %v1241
        %v1243 = vpop.f32.mrf.mxu0
        %v1244 = vpop.f32.mrf.mxu0
        %v1245 = vpop.f32.mrf.mxu0
        %1246 = vdwg.mxu0
        %v1247 = vtanh.pop %v1242
        %1248 = vst.msk [vmem:[#allocation4] sm:$0x3] %vm713, %v1247
        %1249 = vst.msk [vmem:[%s533] sm:$0x3] %vm713, %v1247
        %v1250 = vld [vmem:[#allocation4] sm:$0x3]
        %s1251 = scalar_lea.vmem %s459, 2 [#allocation5]
        %v1252 = vld [vmem:[%s1251] sm:$0x3]
        %v1253 = vld [vmem:[#allocation2] sm:$0x3]
        %v1254 = vld [vmem:[#allocation3] sm:$0x3]
        %v1255 = vpack.c.bf16 %v1250, %v1250
        %v1256 = vld [vmem:[#allocation14] sm:$0xf]
        %v1257 = vld [vmem:[#allocation14 + $0x4] sm:$0xf]
        %v1258 = vld [vmem:[#allocation14 + $0x8] sm:$0xf]
        %v1259 = vld [vmem:[#allocation14 + $0xc] sm:$0xf]
        %v1264 = vunpack.c.l.b16 %v1256
        %v1265 = vunpack.c.l.b16 %v1257
        %v1266 = vunpack.c.l.b16 %v1258
        %v1267 = vunpack.c.l.b16 %v1259
        %v1268 = vpack.c.b16 %v1265, %v1264
        %v1269 = vpack.c.b16 %v1267, %v1266
        %v1273 = vsel %vm575, %v1255, 0
        %1275 = vmatprep.subr.bf16.mxu0 0
        %1276 = vmatpush1.bf16.msra.mxu0 0
        %1277 = vmatprep.subr.bf16.mxu0 0
        %1278 = vmatpush1.bf16.msra.mxu0 0
        %1279 = vmatprep.subr.bf16.mxu0 0
        %1280 = vmatpush1.bf16.msra.mxu0 0
        %1281 = vmatprep.subr.bf16.mxu0 0
        %1282 = vmatpush1.bf16.msra.mxu0 0
        %1283 = vmatprep.subr.bf16.mxu0 0
        %1284 = vmatpush1.bf16.msra.mxu0 0
        %1285 = vmatprep.subr.bf16.mxu0 0
        %1286 = vmatpush1.bf16.msra.mxu0 0
        %1287 = vmatprep.subr.bf16.mxu0 0
        %1288 = vmatpush1.bf16.msra.mxu0 %v1269
        %1289 = vmatprep.subr.bf16.mxu0 0
        %1290 = vmatpush1.bf16.msra.mxu0 %v1268
        %1291 = vmatprep.subr.bf16.mxu0 0
        %1292 = vmatpush2.bf16.msra.mxu0 0
        %1293 = vmatprep.subr.bf16.mxu0 0
        %1294 = vmatpush2.bf16.msra.mxu0 0
        %1295 = vmatprep.subr.bf16.mxu0 0
        %1296 = vmatpush2.bf16.msra.mxu0 0
        %1297 = vmatprep.subr.bf16.mxu0 0
        %1298 = vmatpush2.bf16.msra.mxu0 0
        %1299 = vmatprep.subr.bf16.mxu0 0
        %1300 = vmatpush2.bf16.msra.mxu0 0
        %1301 = vmatprep.subr.bf16.mxu0 0
        %1302 = vmatpush2.bf16.msra.mxu0 0
        %1303 = vmatprep.subr.bf16.mxu0 0
        %1304 = vmatpush2.bf16.msra.mxu0 0
        %1305 = vmatprep.subr.bf16.mxu0 0
        %1306 = vmatpush2.bf16.msra.mxu0 0
        %1307 = vmatprep.mubr.bf16.mxu0 0
        %1308 = vmatmul.mubr.bf16.gmra.mxu0 %v1273
        %v1309 = vpop.f32.mrf.mxu0
        %v1310 = vadd.f32 0.0, %v1309
        %v1311 = vpop.f32.mrf.mxu0
        %v1312 = vpop.f32.mrf.mxu0
        %v1313 = vpop.f32.mrf.mxu0
        %1314 = vdwg.mxu0
        %v1315 = vadd.f32 %v1252, %v1310
        %v1316 = vpack.c.bf16 %v1253, %v1253
        %v1317 = vld [vmem:[#allocation16] sm:$0xf]
        %v1318 = vld [vmem:[#allocation16 + $0x4] sm:$0xf]
        %v1319 = vld [vmem:[#allocation16 + $0x8] sm:$0xf]
        %v1320 = vld [vmem:[#allocation16 + $0xc] sm:$0xf]
        %v1325 = vunpack.c.l.b16 %v1317
        %v1326 = vunpack.c.l.b16 %v1318
        %v1327 = vunpack.c.l.b16 %v1319
        %v1328 = vunpack.c.l.b16 %v1320
        %v1329 = vpack.c.b16 %v1326, %v1325
        %v1330 = vpack.c.b16 %v1328, %v1327
        %v1334 = vsel %vm575, %v1316, 0
        %1336 = vmatprep.subr.bf16.mxu0 0
        %1337 = vmatpush1.bf16.msra.mxu0 0
        %1338 = vmatprep.subr.bf16.mxu0 0
        %1339 = vmatpush1.bf16.msra.mxu0 0
        %1340 = vmatprep.subr.bf16.mxu0 0
        %1341 = vmatpush1.bf16.msra.mxu0 0
        %1342 = vmatprep.subr.bf16.mxu0 0
        %1343 = vmatpush1.bf16.msra.mxu0 0
        %1344 = vmatprep.subr.bf16.mxu0 0
        %1345 = vmatpush1.bf16.msra.mxu0 0
        %1346 = vmatprep.subr.bf16.mxu0 0
        %1347 = vmatpush1.bf16.msra.mxu0 0
        %1348 = vmatprep.subr.bf16.mxu0 0
        %1349 = vmatpush1.bf16.msra.mxu0 %v1330
        %1350 = vmatprep.subr.bf16.mxu0 0
        %1351 = vmatpush1.bf16.msra.mxu0 %v1329
        %1352 = vmatprep.subr.bf16.mxu0 0
        %1353 = vmatpush2.bf16.msra.mxu0 0
        %1354 = vmatprep.subr.bf16.mxu0 0
        %1355 = vmatpush2.bf16.msra.mxu0 0
        %1356 = vmatprep.subr.bf16.mxu0 0
        %1357 = vmatpush2.bf16.msra.mxu0 0
        %1358 = vmatprep.subr.bf16.mxu0 0
        %1359 = vmatpush2.bf16.msra.mxu0 0
        %1360 = vmatprep.subr.bf16.mxu0 0
        %1361 = vmatpush2.bf16.msra.mxu0 0
        %1362 = vmatprep.subr.bf16.mxu0 0
        %1363 = vmatpush2.bf16.msra.mxu0 0
        %1364 = vmatprep.subr.bf16.mxu0 0
        %1365 = vmatpush2.bf16.msra.mxu0 0
        %1366 = vmatprep.subr.bf16.mxu0 0
        %1367 = vmatpush2.bf16.msra.mxu0 0
        %1368 = vmatprep.mubr.bf16.mxu0 0
        %1369 = vmatmul.mubr.bf16.gmra.mxu0 %v1334
        %v1370 = vpop.f32.mrf.mxu0
        %v1371 = vadd.f32 0.0, %v1370
        %v1372 = vpop.f32.mrf.mxu0
        %v1373 = vpop.f32.mrf.mxu0
        %v1374 = vpop.f32.mrf.mxu0
        %1375 = vdwg.mxu0
        %v1376 = vadd.f32 %v1315, %v1371
        %v1377 = vxor.u32 %v1376, 2147483648
        %v1378 = vmul.f32 %v1377, 1.442695
        %v1379 = vpow.pop %v1378
        %v1380 = vadd.f32 %v1379, 1.0
        %v1381 = vrcp.pop %v1380
        %v1382 = vmul.f32 1.0, %v1381
        %v1383 = vtanh.pop %v1376
        %1385 = vrot.lane.b32.xlu0 %v1254, 32
        %v1386 = vpop.permute.xlu0 %1385
        %v1388 = vmul.f32 %v1382, %v1386
        %1390 = vrot.lane.b32.xlu0 %v1383, 32
        %v1391 = vpop.permute.xlu0 %1390
        %v1393 = vmul.f32 %v1382, %v1391
        %1395 = vrot.lane.b32.xlu0 %v1393, 32
        %v1396 = vpop.permute.xlu0 %1395
        %v1398 = vadd.f32 %v1388, %v1396
        %v1399 = vtanh.pop %v1398
        %1401 = vrot.lane.b32.xlu0 %v1399, 32
        %v1402 = vpop.permute.xlu0 %1401
        %v1404 = vmul.f32 %v1382, %v1402
        %1406 = vrot.lane.b32.xlu0 %v1404, 64
        %v1407 = vpop.permute.xlu0 %1406
        %1409 = vst.msk [vmem:[#allocation2] sm:$0x3] %vm713, %v1407
        %1411 = vrot.lane.b32.xlu0 %v1398, 96
        %v1412 = vpop.permute.xlu0 %1411
        %1414 = vst.msk [vmem:[#allocation3] sm:$0x3] %vm713, %v1412
        %v1415 = vld [vmem:[%s720] sm:$0x1]
        %v1416 = vld [vmem:[%s722] sm:$0x3]
        %v1417 = vld [vmem:[%s724] sm:$0x3]
        %v1418 = vpack.c.bf16 %v1404, %v1404
        %v1419 = vld [vmem:[%s727] sm:$0xf]
        %v1420 = vld [vmem:[%s727 + $0x4] sm:$0xf]
        %v1421 = vld [vmem:[%s727 + $0x8] sm:$0xf]
        %v1422 = vld [vmem:[%s727 + $0xc] sm:$0xf]
        %1424 = vrot.lane.b32.xlu0 %v1418, 64
        %v1425 = vpop.permute.xlu0 %1424
        %v1430 = vunpack.c.l.b16 %v1419
        %v1431 = vunpack.c.l.b16 %v1420
        %v1432 = vunpack.c.l.b16 %v1421
        %v1433 = vunpack.c.l.b16 %v1422
        %v1434 = vpack.c.b16 %v1431, %v1430
        %v1435 = vpack.c.b16 %v1433, %v1432
        %v1439 = vsel %vm575, %v1425, 0
        %1441 = vmatprep.subr.bf16.mxu0 0
        %1442 = vmatpush1.bf16.msra.mxu0 0
        %1443 = vmatprep.subr.bf16.mxu0 0
        %1444 = vmatpush1.bf16.msra.mxu0 0
        %1445 = vmatprep.subr.bf16.mxu0 0
        %1446 = vmatpush1.bf16.msra.mxu0 0
        %1447 = vmatprep.subr.bf16.mxu0 0
        %1448 = vmatpush1.bf16.msra.mxu0 0
        %1449 = vmatprep.subr.bf16.mxu0 0
        %1450 = vmatpush1.bf16.msra.mxu0 0
        %1451 = vmatprep.subr.bf16.mxu0 0
        %1452 = vmatpush1.bf16.msra.mxu0 0
        %1453 = vmatprep.subr.bf16.mxu0 0
        %1454 = vmatpush1.bf16.msra.mxu0 %v1435
        %1455 = vmatprep.subr.bf16.mxu0 0
        %1456 = vmatpush1.bf16.msra.mxu0 %v1434
        %1457 = vmatprep.subr.bf16.mxu0 0
        %1458 = vmatpush2.bf16.msra.mxu0 0
        %1459 = vmatprep.subr.bf16.mxu0 0
        %1460 = vmatpush2.bf16.msra.mxu0 0
        %1461 = vmatprep.subr.bf16.mxu0 0
        %1462 = vmatpush2.bf16.msra.mxu0 0
        %1463 = vmatprep.subr.bf16.mxu0 0
        %1464 = vmatpush2.bf16.msra.mxu0 0
        %1465 = vmatprep.subr.bf16.mxu0 0
        %1466 = vmatpush2.bf16.msra.mxu0 0
        %1467 = vmatprep.subr.bf16.mxu0 0
        %1468 = vmatpush2.bf16.msra.mxu0 0
        %1469 = vmatprep.subr.bf16.mxu0 0
        %1470 = vmatpush2.bf16.msra.mxu0 0
        %1471 = vmatprep.subr.bf16.mxu0 0
        %1472 = vmatpush2.bf16.msra.mxu0 0
        %1473 = vmatprep.mubr.bf16.mxu0 0
        %1474 = vmatmul.mubr.bf16.gmra.mxu0 %v1439
        %v1475 = vpop.f32.mrf.mxu0
        %v1476 = vadd.f32 0.0, %v1475
        %v1477 = vpop.f32.mrf.mxu0
        %v1478 = vpop.f32.mrf.mxu0
        %v1479 = vpop.f32.mrf.mxu0
        %1480 = vdwg.mxu0
        %v1482 = vlaneseq
        %v1483 = vshrl.u32 %v1482, 7
        %v1484 = vsub.s32 0, %v1483
        %v1485 = vrot.slane %v1415, %v1484
        %v1487 = vadd.f32 %v1485, %v1476
        %v1488 = vpack.c.bf16 %v1416, %v1416
        %v1489 = vld [vmem:[%s798] sm:$0xf]
        %v1490 = vld [vmem:[%s798 + $0x4] sm:$0xf]
        %v1491 = vld [vmem:[%s798 + $0x8] sm:$0xf]
        %v1492 = vld [vmem:[%s798 + $0xc] sm:$0xf]
        %v1497 = vunpack.c.l.b16 %v1489
        %v1498 = vunpack.c.l.b16 %v1490
        %v1499 = vunpack.c.l.b16 %v1491
        %v1500 = vunpack.c.l.b16 %v1492
        %v1501 = vpack.c.b16 %v1498, %v1497
        %v1502 = vpack.c.b16 %v1500, %v1499
        %v1506 = vsel %vm575, %v1488, 0
        %1508 = vmatprep.subr.bf16.mxu0 0
        %1509 = vmatpush1.bf16.msra.mxu0 0
        %1510 = vmatprep.subr.bf16.mxu0 0
        %1511 = vmatpush1.bf16.msra.mxu0 0
        %1512 = vmatprep.subr.bf16.mxu0 0
        %1513 = vmatpush1.bf16.msra.mxu0 0
        %1514 = vmatprep.subr.bf16.mxu0 0
        %1515 = vmatpush1.bf16.msra.mxu0 0
        %1516 = vmatprep.subr.bf16.mxu0 0
        %1517 = vmatpush1.bf16.msra.mxu0 0
        %1518 = vmatprep.subr.bf16.mxu0 0
        %1519 = vmatpush1.bf16.msra.mxu0 0
        %1520 = vmatprep.subr.bf16.mxu0 0
        %1521 = vmatpush1.bf16.msra.mxu0 %v1502
        %1522 = vmatprep.subr.bf16.mxu0 0
        %1523 = vmatpush1.bf16.msra.mxu0 %v1501
        %1524 = vmatprep.subr.bf16.mxu0 0
        %1525 = vmatpush2.bf16.msra.mxu0 0
        %1526 = vmatprep.subr.bf16.mxu0 0
        %1527 = vmatpush2.bf16.msra.mxu0 0
        %1528 = vmatprep.subr.bf16.mxu0 0
        %1529 = vmatpush2.bf16.msra.mxu0 0
        %1530 = vmatprep.subr.bf16.mxu0 0
        %1531 = vmatpush2.bf16.msra.mxu0 0
        %1532 = vmatprep.subr.bf16.mxu0 0
        %1533 = vmatpush2.bf16.msra.mxu0 0
        %1534 = vmatprep.subr.bf16.mxu0 0
        %1535 = vmatpush2.bf16.msra.mxu0 0
        %1536 = vmatprep.subr.bf16.mxu0 0
        %1537 = vmatpush2.bf16.msra.mxu0 0
        %1538 = vmatprep.subr.bf16.mxu0 0
        %1539 = vmatpush2.bf16.msra.mxu0 0
        %1540 = vmatprep.mubr.bf16.mxu0 0
        %1541 = vmatmul.mubr.bf16.gmra.mxu0 %v1506
        %v1542 = vpop.f32.mrf.mxu0
        %v1543 = vadd.f32 0.0, %v1542
        %v1544 = vpop.f32.mrf.mxu0
        %v1545 = vpop.f32.mrf.mxu0
        %v1546 = vpop.f32.mrf.mxu0
        %1547 = vdwg.mxu0
        %v1548 = vadd.f32 %v1487, %v1543
        %v1549 = vxor.u32 %v1548, 2147483648
        %v1550 = vmul.f32 %v1549, 1.442695
        %v1551 = vpow.pop %v1550
        %v1552 = vadd.f32 %v1551, 1.0
        %v1553 = vrcp.pop %v1552
        %v1554 = vmul.f32 1.0, %v1553
        %v1555 = vtanh.pop %v1548
        %1557 = vrot.lane.b32.xlu0 %v1417, 32
        %v1558 = vpop.permute.xlu0 %1557
        %v1560 = vmul.f32 %v1554, %v1558
        %1562 = vrot.lane.b32.xlu0 %v1555, 32
        %v1563 = vpop.permute.xlu0 %1562
        %v1565 = vmul.f32 %v1554, %v1563
        %1567 = vrot.lane.b32.xlu0 %v1565, 32
        %v1568 = vpop.permute.xlu0 %1567
        %v1570 = vadd.f32 %v1560, %v1568
        %v1571 = vtanh.pop %v1570
        %1573 = vrot.lane.b32.xlu0 %v1571, 32
        %v1574 = vpop.permute.xlu0 %1573
        %v1576 = vmul.f32 %v1554, %v1574
        %1578 = vrot.lane.b32.xlu0 %v1576, 64
        %v1579 = vpop.permute.xlu0 %1578
        %1581 = vst.msk [vmem:[%s722] sm:$0x3] %vm713, %v1579
        %1583 = vrot.lane.b32.xlu0 %v1570, 96
        %v1584 = vpop.permute.xlu0 %1583
        %1586 = vst.msk [vmem:[%s724] sm:$0x3] %vm713, %v1584
        %v1587 = vpack.c.bf16 %v1576, %v1576
        %v1588 = vld [vmem:[#allocation19] sm:$0xf]
        %v1589 = vld [vmem:[#allocation19 + $0x4] sm:$0xf]
        %v1590 = vld [vmem:[#allocation19 + $0x8] sm:$0xf]
        %v1591 = vld [vmem:[#allocation19 + $0xc] sm:$0xf]
        %1593 = vrot.lane.b32.xlu0 %v1587, 64
        %v1594 = vpop.permute.xlu0 %1593
        %v1599 = vunpack.c.l.b16 %v1588
        %v1600 = vunpack.c.l.b16 %v1589
        %v1601 = vunpack.c.l.b16 %v1590
        %v1602 = vunpack.c.l.b16 %v1591
        %v1603 = vpack.c.b16 %v1600, %v1599
        %v1604 = vpack.c.b16 %v1602, %v1601
        %v1608 = vsel %vm575, %v1594, 0
        %1610 = vmatprep.subr.bf16.mxu0 0
        %1611 = vmatpush1.bf16.msra.mxu0 0
        %1612 = vmatprep.subr.bf16.mxu0 0
        %1613 = vmatpush1.bf16.msra.mxu0 0
        %1614 = vmatprep.subr.bf16.mxu0 0
        %1615 = vmatpush1.bf16.msra.mxu0 0
        %1616 = vmatprep.subr.bf16.mxu0 0
        %1617 = vmatpush1.bf16.msra.mxu0 0
        %1618 = vmatprep.subr.bf16.mxu0 0
        %1619 = vmatpush1.bf16.msra.mxu0 0
        %1620 = vmatprep.subr.bf16.mxu0 0
        %1621 = vmatpush1.bf16.msra.mxu0 0
        %1622 = vmatprep.subr.bf16.mxu0 0
        %1623 = vmatpush1.bf16.msra.mxu0 %v1604
        %1624 = vmatprep.subr.bf16.mxu0 0
        %1625 = vmatpush1.bf16.msra.mxu0 %v1603
        %1626 = vmatprep.subr.bf16.mxu0 0
        %1627 = vmatpush2.bf16.msra.mxu0 0
        %1628 = vmatprep.subr.bf16.mxu0 0
        %1629 = vmatpush2.bf16.msra.mxu0 0
        %1630 = vmatprep.subr.bf16.mxu0 0
        %1631 = vmatpush2.bf16.msra.mxu0 0
        %1632 = vmatprep.subr.bf16.mxu0 0
        %1633 = vmatpush2.bf16.msra.mxu0 0
        %1634 = vmatprep.subr.bf16.mxu0 0
        %1635 = vmatpush2.bf16.msra.mxu0 0
        %1636 = vmatprep.subr.bf16.mxu0 0
        %1637 = vmatpush2.bf16.msra.mxu0 0
        %1638 = vmatprep.subr.bf16.mxu0 0
        %1639 = vmatpush2.bf16.msra.mxu0 0
        %1640 = vmatprep.subr.bf16.mxu0 0
        %1641 = vmatpush2.bf16.msra.mxu0 0
        %1642 = vmatprep.mubr.bf16.mxu0 0
        %1643 = vmatmul.mubr.bf16.gmra.mxu0 %v1608
        %v1644 = vpop.f32.mrf.mxu0
        %v1645 = vadd.f32 0.0, %v1644
        %v1646 = vpop.f32.mrf.mxu0
        %v1647 = vpop.f32.mrf.mxu0
        %v1648 = vpop.f32.mrf.mxu0
        %1649 = vdwg.mxu0
        %v1652 = vunpack.c.l.s4 1966171168
        %v1653 = vunpack.c.0.s8 %v1652
        %v1654 = vlaneseq
        %v1655 = vshrl.u32 %v1654, 7
        %v1656 = vsub.s32 %v1653, %v1655
        %v1657 = vrot.slane %v1645, %v1656
        %v1658 = vcombine.high %v1657, %v1657
        %v1660 = vunpack.c.l.s4 1966171168
        %v1661 = vunpack.c.0.s8 %v1660
        %v1662 = vlaneseq
        %v1663 = vshrl.u32 %v1662, 7
        %v1664 = vsub.s32 %v1661, %v1663
        %v1665 = vrot.slane %v1657, %v1664
        %v1667 = vunpack.c.l.s4 1966171168
        %v1668 = vunpack.c.0.s8 %v1667
        %v1669 = vlaneseq
        %v1670 = vshrl.u32 %v1669, 7
        %v1671 = vsub.s32 %v1668, %v1670
        %v1672 = vrot.slane %v1658, %v1671
        %v1673 = vlaneseq
        %v1674 = vshrl.u32 %v1673, 7
        %v1675 = vsub.s32 0, %v1674
        %v1676 = vrot.slane %v1665, %v1675
        %v1677 = vlaneseq
        %v1678 = vshrl.u32 %v1677, 7
        %v1679 = vsub.s32 0, %v1678
        %v1680 = vrot.slane %v1672, %v1679
        %v1683 = vmul.f32 %v551, %v1676
        %v1684 = vmul.f32 %v552, %v1680
        %v1685 = vsel %vm575, %v1683, 0.0
        %1686 = vadd.xlane.f32.xlu0 %v1685
        %v1687 = vpop.xlane.xlu0 %1686
        %v1688 = vsel %vm575, %v1684, 0.0
        %1689 = vadd.xlane.f32.xlu0 %v1688
        %v1690 = vpop.xlane.xlu0 %1689
        %v1691 = vadd.f32 %v1687, %v1008
        %v1692 = vadd.f32 %v1690, %v1015
        %1695 = vset.pattern.permute.xlu0 0
        %1696 = vperm.xlu0 %1695, %v1691
        %v1697 = vpop.permute.xlu0 %1696
        %1698 = vset.pattern.permute.xlu0 0
        %1699 = vperm.xlu0 %1698, %v1692
        %v1700 = vpop.permute.xlu0 %1699
        %v1701 = vlaneseq
        %v1702 = vshrl.u32 %v1701, 7
        %v1703 = vsub.s32 %v1029, %v1702
        %v1704 = vrot.slane %v1697, %v1703
        %v1705 = vlaneseq
        %v1706 = vshrl.u32 %v1705, 7
        %v1707 = vsub.s32 %v1029, %v1706
        %v1708 = vrot.slane %v1700, %v1707
        %v1709 = vsel %vm1038, %v1708, %v1704
        %v1711 = vsel %vm1041, %v1709, -inf
        %1712 = vmax.xlane.f32.xlu0 %v1711
        %v1713 = vpop.xlane.xlu0 %1712
        %v1715 = vlaneseq
        %v1716 = vshrl.u32 %v1715, 7
        %v1717 = vsub.s32 0, %v1716
        %v1718 = vrot.slane %v1713, %v1717
        %v1719 = vlaneseq
        %v1720 = vshrl.u32 %v1719, 7
        %v1721 = vsub.s32 1, %v1720
        %v1722 = vrot.slane %v1713, %v1721
        %v1725 = vsub.f32 %v1691, %v1718
        %v1726 = vsub.f32 %v1692, %v1722
        %v1727 = vmul.f32 %v1725, 1.442695
        %v1728 = vpow.pop %v1727
        %v1729 = vmul.f32 %v1726, 1.442695
        %v1730 = vpow.pop %v1729
        %1733 = vset.pattern.permute.xlu0 0
        %1734 = vperm.xlu0 %1733, %v1728
        %v1735 = vpop.permute.xlu0 %1734
        %1736 = vset.pattern.permute.xlu0 0
        %1737 = vperm.xlu0 %1736, %v1730
        %v1738 = vpop.permute.xlu0 %1737
        %v1739 = vlaneseq
        %v1740 = vshrl.u32 %v1739, 7
        %v1741 = vsub.s32 %v1029, %v1740
        %v1742 = vrot.slane %v1735, %v1741
        %v1743 = vlaneseq
        %v1744 = vshrl.u32 %v1743, 7
        %v1745 = vsub.s32 %v1029, %v1744
        %v1746 = vrot.slane %v1738, %v1745
        %v1747 = vsel %vm1038, %v1746, %v1742
        %v1749 = vsel %vm1041, %v1747, 0.0
        %1750 = vadd.xlane.f32.xlu0 %v1749
        %v1751 = vpop.xlane.xlu0 %1750
        %v1753 = vlaneseq
        %v1754 = vshrl.u32 %v1753, 7
        %v1755 = vsub.s32 0, %v1754
        %v1756 = vrot.slane %v1751, %v1755
        %v1757 = vlaneseq
        %v1758 = vshrl.u32 %v1757, 7
        %v1759 = vsub.s32 1, %v1758
        %v1760 = vrot.slane %v1751, %v1759
        %v1763 = vrcp.pop %v1756
        %v1764 = vmul.f32 %v1728, %v1763
        %v1765 = vrcp.pop %v1760
        %v1766 = vmul.f32 %v1730, %v1765
        %1768 = vset.pattern.permute.xlu0 0
        %1769 = vperm.xlu0 %1768, %v1764
        %v1770 = vpop.permute.xlu0 %1769
        %1773 = vset.pattern.permute.xlu0 0
        %1774 = vperm.xlu0 %1773, %v1766
        %v1775 = vpop.permute.xlu0 %1774
        %v1777 = vmul.f32 %v1770, %v551
        %v1778 = vmul.f32 %v1775, %v552
        %v1779 = vsel %vm575, %v1777, 0.0
        %v1780 = vrot.slane %v1779, 4
        %v1781 = vadd.f32 %v1779, %v1780
        %v1782 = vrot.slane %v1781, 2
        %v1783 = vadd.f32 %v1781, %v1782
        %v1784 = vrot.slane %v1783, 1
        %v1785 = vadd.f32 %v1783, %v1784
        %v1786 = vsel %vm575, %v1778, 0.0
        %v1787 = vrot.slane %v1786, 4
        %v1788 = vadd.f32 %v1786, %v1787
        %v1789 = vrot.slane %v1788, 2
        %v1790 = vadd.f32 %v1788, %v1789
        %v1791 = vrot.slane %v1790, 1
        %v1792 = vadd.f32 %v1790, %v1791
        %v1793 = vpack.c.bf16 %v1785, %v1785
        %v1794 = vpack.c.bf16 %v1792, %v1792
        %v1795 = vld [vmem:[%s9] sm:$0xf]
        %v1796 = vld [vmem:[%s9 + $0x4] sm:$0xf]
        %v1797 = vld [vmem:[%s9 + $0x8] sm:$0xf]
        %v1798 = vld [vmem:[%s9 + $0xc] sm:$0xf]
        %v1799 = vld [vmem:[#allocation20] sm:$0xf]
        %v1800 = vld [vmem:[#allocation20 + $0x4] sm:$0xf]
        %v1801 = vld [vmem:[#allocation20 + $0x8] sm:$0xf]
        %v1802 = vld [vmem:[#allocation20 + $0xc] sm:$0xf]
        %v1807 = vunpack.c.l.b16 %v1799
        %v1808 = vunpack.c.l.b16 %v1800
        %v1809 = vunpack.c.l.b16 %v1801
        %v1810 = vunpack.c.l.b16 %v1802
        %v1811 = vpack.c.b16 %v1808, %v1807
        %v1812 = vpack.c.b16 %v1810, %v1809
        %1815 = vmatprep.subr.bf16.mxu0 0
        %1816 = vmatpush1.bf16.msra.mxu0 0
        %1817 = vmatprep.subr.bf16.mxu0 0
        %1818 = vmatpush1.bf16.msra.mxu0 0
        %1819 = vmatprep.subr.bf16.mxu0 0
        %1820 = vmatpush1.bf16.msra.mxu0 0
        %1821 = vmatprep.subr.bf16.mxu0 0
        %1822 = vmatpush1.bf16.msra.mxu0 0
        %1823 = vmatprep.subr.bf16.mxu0 0
        %1824 = vmatpush1.bf16.msra.mxu0 0
        %1825 = vmatprep.subr.bf16.mxu0 0
        %1826 = vmatpush1.bf16.msra.mxu0 0
        %1827 = vmatprep.subr.bf16.mxu0 0
        %1828 = vmatpush1.bf16.msra.mxu0 %v1812
        %1829 = vmatprep.subr.bf16.mxu0 0
        %1830 = vmatpush1.bf16.msra.mxu0 %v1811
        %1831 = vmatprep.subr.bf16.mxu0 0
        %1832 = vmatpush2.bf16.msra.mxu0 0
        %1833 = vmatprep.subr.bf16.mxu0 0
        %1834 = vmatpush2.bf16.msra.mxu0 0
        %1835 = vmatprep.subr.bf16.mxu0 0
        %1836 = vmatpush2.bf16.msra.mxu0 0
        %1837 = vmatprep.subr.bf16.mxu0 0
        %1838 = vmatpush2.bf16.msra.mxu0 0
        %1839 = vmatprep.subr.bf16.mxu0 0
        %1840 = vmatpush2.bf16.msra.mxu0 0
        %1841 = vmatprep.subr.bf16.mxu0 0
        %1842 = vmatpush2.bf16.msra.mxu0 0
        %1843 = vmatprep.subr.bf16.mxu0 0
        %1844 = vmatpush2.bf16.msra.mxu0 0
        %1845 = vmatprep.subr.bf16.mxu0 0
        %1846 = vmatpush2.bf16.msra.mxu0 0
        %1847 = vmatprep.mubr.bf16.mxu0 0
        %1848 = vmatmul.mubr.bf16.gmra.mxu0 %v1608
        %v1849 = vpop.f32.mrf.mxu0
        %v1850 = vadd.f32 0.0, %v1849
        %v1851 = vpop.f32.mrf.mxu0
        %v1852 = vpop.f32.mrf.mxu0
        %v1853 = vpop.f32.mrf.mxu0
        %1854 = vdwg.mxu0
        %v1857 = vunpack.c.l.b16 %v1793
        %v1858 = vunpack.c.l.b16 %v1794
        %v1859 = vsel %vm1038, %v1858, %v1857
        %v1860 = vpack.c.b16 %v1859, %v1859
        %v1865 = vunpack.c.l.b16 %v1795
        %v1866 = vunpack.c.l.b16 %v1796
        %v1867 = vunpack.c.l.b16 %v1797
        %v1868 = vunpack.c.l.b16 %v1798
        %v1869 = vpack.c.b16 %v1866, %v1865
        %v1870 = vpack.c.b16 %v1868, %v1867
        %v1874 = vsel %vm575, %v1860, 0
        %1876 = vmatprep.subr.bf16.mxu0 0
        %1877 = vmatpush1.bf16.msra.mxu0 0
        %1878 = vmatprep.subr.bf16.mxu0 0
        %1879 = vmatpush1.bf16.msra.mxu0 0
        %1880 = vmatprep.subr.bf16.mxu0 0
        %1881 = vmatpush1.bf16.msra.mxu0 0
        %1882 = vmatprep.subr.bf16.mxu0 0
        %1883 = vmatpush1.bf16.msra.mxu0 0
        %1884 = vmatprep.subr.bf16.mxu0 0
        %1885 = vmatpush1.bf16.msra.mxu0 0
        %1886 = vmatprep.subr.bf16.mxu0 0
        %1887 = vmatpush1.bf16.msra.mxu0 0
        %1888 = vmatprep.subr.bf16.mxu0 0
        %1889 = vmatpush1.bf16.msra.mxu0 %v1870
        %1890 = vmatprep.subr.bf16.mxu0 0
        %1891 = vmatpush1.bf16.msra.mxu0 %v1869
        %1892 = vmatprep.subr.bf16.mxu0 0
        %1893 = vmatpush2.bf16.msra.mxu0 0
        %1894 = vmatprep.subr.bf16.mxu0 0
        %1895 = vmatpush2.bf16.msra.mxu0 0
        %1896 = vmatprep.subr.bf16.mxu0 0
        %1897 = vmatpush2.bf16.msra.mxu0 0
        %1898 = vmatprep.subr.bf16.mxu0 0
        %1899 = vmatpush2.bf16.msra.mxu0 0
        %1900 = vmatprep.subr.bf16.mxu0 0
        %1901 = vmatpush2.bf16.msra.mxu0 0
        %1902 = vmatprep.subr.bf16.mxu0 0
        %1903 = vmatpush2.bf16.msra.mxu0 0
        %1904 = vmatprep.subr.bf16.mxu0 0
        %1905 = vmatpush2.bf16.msra.mxu0 0
        %1906 = vmatprep.subr.bf16.mxu0 0
        %1907 = vmatpush2.bf16.msra.mxu0 0
        %1908 = vmatprep.mubr.bf16.mxu0 0
        %1909 = vmatmul.mubr.bf16.gmra.mxu0 %v1874
        %v1910 = vpop.f32.mrf.mxu0
        %v1911 = vadd.f32 %v1850, %v1910
        %v1912 = vpop.f32.mrf.mxu0
        %v1913 = vpop.f32.mrf.mxu0
        %v1914 = vpop.f32.mrf.mxu0
        %1915 = vdwg.mxu0
        %v1916 = vtanh.pop %v1911
        %1917 = vst.msk [vmem:[#allocation4] sm:$0x3] %vm713, %v1916
        %s1918 = scalar_lea.vmem %s533, 2 [#allocation22]
        %1919 = vst.msk [vmem:[%s1918] sm:$0x3] %vm713, %v1916
        %v1920 = vld [vmem:[#allocation4] sm:$0x3]
        %s1921 = scalar_lea.vmem %s459, 4 [#allocation5]
        %v1922 = vld [vmem:[%s1921] sm:$0x3]
        %v1923 = vld [vmem:[#allocation2] sm:$0x3]
        %v1924 = vld [vmem:[#allocation3] sm:$0x3]
        %v1925 = vpack.c.bf16 %v1920, %v1920
        %v1926 = vld [vmem:[#allocation14] sm:$0xf]
        %v1927 = vld [vmem:[#allocation14 + $0x4] sm:$0xf]
        %v1928 = vld [vmem:[#allocation14 + $0x8] sm:$0xf]
        %v1929 = vld [vmem:[#allocation14 + $0xc] sm:$0xf]
        %v1934 = vunpack.c.l.b16 %v1926
        %v1935 = vunpack.c.l.b16 %v1927
        %v1936 = vunpack.c.l.b16 %v1928
        %v1937 = vunpack.c.l.b16 %v1929
        %v1938 = vpack.c.b16 %v1935, %v1934
        %v1939 = vpack.c.b16 %v1937, %v1936
        %v1943 = vsel %vm575, %v1925, 0
        %1945 = vmatprep.subr.bf16.mxu0 0
        %1946 = vmatpush1.bf16.msra.mxu0 0
        %1947 = vmatprep.subr.bf16.mxu0 0
        %1948 = vmatpush1.bf16.msra.mxu0 0
        %1949 = vmatprep.subr.bf16.mxu0 0
        %1950 = vmatpush1.bf16.msra.mxu0 0
        %1951 = vmatprep.subr.bf16.mxu0 0
        %1952 = vmatpush1.bf16.msra.mxu0 0
        %1953 = vmatprep.subr.bf16.mxu0 0
        %1954 = vmatpush1.bf16.msra.mxu0 0
        %1955 = vmatprep.subr.bf16.mxu0 0
        %1956 = vmatpush1.bf16.msra.mxu0 0
        %1957 = vmatprep.subr.bf16.mxu0 0
        %1958 = vmatpush1.bf16.msra.mxu0 %v1939
        %1959 = vmatprep.subr.bf16.mxu0 0
        %1960 = vmatpush1.bf16.msra.mxu0 %v1938
        %1961 = vmatprep.subr.bf16.mxu0 0
        %1962 = vmatpush2.bf16.msra.mxu0 0
        %1963 = vmatprep.subr.bf16.mxu0 0
        %1964 = vmatpush2.bf16.msra.mxu0 0
        %1965 = vmatprep.subr.bf16.mxu0 0
        %1966 = vmatpush2.bf16.msra.mxu0 0
        %1967 = vmatprep.subr.bf16.mxu0 0
        %1968 = vmatpush2.bf16.msra.mxu0 0
        %1969 = vmatprep.subr.bf16.mxu0 0
        %1970 = vmatpush2.bf16.msra.mxu0 0
        %1971 = vmatprep.subr.bf16.mxu0 0
        %1972 = vmatpush2.bf16.msra.mxu0 0
        %1973 = vmatprep.subr.bf16.mxu0 0
        %1974 = vmatpush2.bf16.msra.mxu0 0
        %1975 = vmatprep.subr.bf16.mxu0 0
        %1976 = vmatpush2.bf16.msra.mxu0 0
        %1977 = vmatprep.mubr.bf16.mxu0 0
        %1978 = vmatmul.mubr.bf16.gmra.mxu0 %v1943
        %v1979 = vpop.f32.mrf.mxu0
        %v1980 = vadd.f32 0.0, %v1979
        %v1981 = vpop.f32.mrf.mxu0
        %v1982 = vpop.f32.mrf.mxu0
        %v1983 = vpop.f32.mrf.mxu0
        %1984 = vdwg.mxu0
        %v1985 = vadd.f32 %v1922, %v1980
        %v1986 = vpack.c.bf16 %v1923, %v1923
        %v1987 = vld [vmem:[#allocation16] sm:$0xf]
        %v1988 = vld [vmem:[#allocation16 + $0x4] sm:$0xf]
        %v1989 = vld [vmem:[#allocation16 + $0x8] sm:$0xf]
        %v1990 = vld [vmem:[#allocation16 + $0xc] sm:$0xf]
        %v1995 = vunpack.c.l.b16 %v1987
        %v1996 = vunpack.c.l.b16 %v1988
        %v1997 = vunpack.c.l.b16 %v1989
        %v1998 = vunpack.c.l.b16 %v1990
        %v1999 = vpack.c.b16 %v1996, %v1995
        %v2000 = vpack.c.b16 %v1998, %v1997
        %v2004 = vsel %vm575, %v1986, 0
        %2006 = vmatprep.subr.bf16.mxu0 0
        %2007 = vmatpush1.bf16.msra.mxu0 0
        %2008 = vmatprep.subr.bf16.mxu0 0
        %2009 = vmatpush1.bf16.msra.mxu0 0
        %2010 = vmatprep.subr.bf16.mxu0 0
        %2011 = vmatpush1.bf16.msra.mxu0 0
        %2012 = vmatprep.subr.bf16.mxu0 0
        %2013 = vmatpush1.bf16.msra.mxu0 0
        %2014 = vmatprep.subr.bf16.mxu0 0
        %2015 = vmatpush1.bf16.msra.mxu0 0
        %2016 = vmatprep.subr.bf16.mxu0 0
        %2017 = vmatpush1.bf16.msra.mxu0 0
        %2018 = vmatprep.subr.bf16.mxu0 0
        %2019 = vmatpush1.bf16.msra.mxu0 %v2000
        %2020 = vmatprep.subr.bf16.mxu0 0
        %2021 = vmatpush1.bf16.msra.mxu0 %v1999
        %2022 = vmatprep.subr.bf16.mxu0 0
        %2023 = vmatpush2.bf16.msra.mxu0 0
        %2024 = vmatprep.subr.bf16.mxu0 0
        %2025 = vmatpush2.bf16.msra.mxu0 0
        %2026 = vmatprep.subr.bf16.mxu0 0
        %2027 = vmatpush2.bf16.msra.mxu0 0
        %2028 = vmatprep.subr.bf16.mxu0 0
        %2029 = vmatpush2.bf16.msra.mxu0 0
        %2030 = vmatprep.subr.bf16.mxu0 0
        %2031 = vmatpush2.bf16.msra.mxu0 0
        %2032 = vmatprep.subr.bf16.mxu0 0
        %2033 = vmatpush2.bf16.msra.mxu0 0
        %2034 = vmatprep.subr.bf16.mxu0 0
        %2035 = vmatpush2.bf16.msra.mxu0 0
        %2036 = vmatprep.subr.bf16.mxu0 0
        %2037 = vmatpush2.bf16.msra.mxu0 0
        %2038 = vmatprep.mubr.bf16.mxu0 0
        %2039 = vmatmul.mubr.bf16.gmra.mxu0 %v2004
        %v2040 = vpop.f32.mrf.mxu0
        %v2041 = vadd.f32 0.0, %v2040
        %v2042 = vpop.f32.mrf.mxu0
        %v2043 = vpop.f32.mrf.mxu0
        %v2044 = vpop.f32.mrf.mxu0
        %2045 = vdwg.mxu0
        %v2046 = vadd.f32 %v1985, %v2041
        %v2047 = vxor.u32 %v2046, 2147483648
        %v2048 = vmul.f32 %v2047, 1.442695
        %v2049 = vpow.pop %v2048
        %v2050 = vadd.f32 %v2049, 1.0
        %v2051 = vrcp.pop %v2050
        %v2052 = vmul.f32 1.0, %v2051
        %v2053 = vtanh.pop %v2046
        %2055 = vrot.lane.b32.xlu0 %v1924, 32
        %v2056 = vpop.permute.xlu0 %2055
        %v2058 = vmul.f32 %v2052, %v2056
        %2060 = vrot.lane.b32.xlu0 %v2053, 32
        %v2061 = vpop.permute.xlu0 %2060
        %v2063 = vmul.f32 %v2052, %v2061
        %2065 = vrot.lane.b32.xlu0 %v2063, 32
        %v2066 = vpop.permute.xlu0 %2065
        %v2068 = vadd.f32 %v2058, %v2066
        %v2069 = vtanh.pop %v2068
        %2071 = vrot.lane.b32.xlu0 %v2069, 32
        %v2072 = vpop.permute.xlu0 %2071
        %v2074 = vmul.f32 %v2052, %v2072
        %2076 = vrot.lane.b32.xlu0 %v2074, 64
        %v2077 = vpop.permute.xlu0 %2076
        %2079 = vst.msk [vmem:[#allocation2] sm:$0x3] %vm713, %v2077
        %2081 = vrot.lane.b32.xlu0 %v2068, 96
        %v2082 = vpop.permute.xlu0 %2081
        %2084 = vst.msk [vmem:[#allocation3] sm:$0x3] %vm713, %v2082
        %v2085 = vld [vmem:[%s720] sm:$0x1]
        %v2086 = vld [vmem:[%s722] sm:$0x3]
        %v2087 = vld [vmem:[%s724] sm:$0x3]
        %v2088 = vpack.c.bf16 %v2074, %v2074
        %v2089 = vld [vmem:[%s727] sm:$0xf]
        %v2090 = vld [vmem:[%s727 + $0x4] sm:$0xf]
        %v2091 = vld [vmem:[%s727 + $0x8] sm:$0xf]
        %v2092 = vld [vmem:[%s727 + $0xc] sm:$0xf]
        %2094 = vrot.lane.b32.xlu0 %v2088, 64
        %v2095 = vpop.permute.xlu0 %2094
        %v2100 = vunpack.c.l.b16 %v2089
        %v2101 = vunpack.c.l.b16 %v2090
        %v2102 = vunpack.c.l.b16 %v2091
        %v2103 = vunpack.c.l.b16 %v2092
        %v2104 = vpack.c.b16 %v2101, %v2100
        %v2105 = vpack.c.b16 %v2103, %v2102
        %v2109 = vsel %vm575, %v2095, 0
        %2111 = vmatprep.subr.bf16.mxu0 0
        %2112 = vmatpush1.bf16.msra.mxu0 0
        %2113 = vmatprep.subr.bf16.mxu0 0
        %2114 = vmatpush1.bf16.msra.mxu0 0
        %2115 = vmatprep.subr.bf16.mxu0 0
        %2116 = vmatpush1.bf16.msra.mxu0 0
        %2117 = vmatprep.subr.bf16.mxu0 0
        %2118 = vmatpush1.bf16.msra.mxu0 0
        %2119 = vmatprep.subr.bf16.mxu0 0
        %2120 = vmatpush1.bf16.msra.mxu0 0
        %2121 = vmatprep.subr.bf16.mxu0 0
        %2122 = vmatpush1.bf16.msra.mxu0 0
        %2123 = vmatprep.subr.bf16.mxu0 0
        %2124 = vmatpush1.bf16.msra.mxu0 %v2105
        %2125 = vmatprep.subr.bf16.mxu0 0
        %2126 = vmatpush1.bf16.msra.mxu0 %v2104
        %2127 = vmatprep.subr.bf16.mxu0 0
        %2128 = vmatpush2.bf16.msra.mxu0 0
        %2129 = vmatprep.subr.bf16.mxu0 0
        %2130 = vmatpush2.bf16.msra.mxu0 0
        %2131 = vmatprep.subr.bf16.mxu0 0
        %2132 = vmatpush2.bf16.msra.mxu0 0
        %2133 = vmatprep.subr.bf16.mxu0 0
        %2134 = vmatpush2.bf16.msra.mxu0 0
        %2135 = vmatprep.subr.bf16.mxu0 0
        %2136 = vmatpush2.bf16.msra.mxu0 0
        %2137 = vmatprep.subr.bf16.mxu0 0
        %2138 = vmatpush2.bf16.msra.mxu0 0
        %2139 = vmatprep.subr.bf16.mxu0 0
        %2140 = vmatpush2.bf16.msra.mxu0 0
        %2141 = vmatprep.subr.bf16.mxu0 0
        %2142 = vmatpush2.bf16.msra.mxu0 0
        %2143 = vmatprep.mubr.bf16.mxu0 0
        %2144 = vmatmul.mubr.bf16.gmra.mxu0 %v2109
        %v2145 = vpop.f32.mrf.mxu0
        %v2146 = vadd.f32 0.0, %v2145
        %v2147 = vpop.f32.mrf.mxu0
        %v2148 = vpop.f32.mrf.mxu0
        %v2149 = vpop.f32.mrf.mxu0
        %2150 = vdwg.mxu0
        %v2152 = vlaneseq
        %v2153 = vshrl.u32 %v2152, 7
        %v2154 = vsub.s32 0, %v2153
        %v2155 = vrot.slane %v2085, %v2154
        %v2157 = vadd.f32 %v2155, %v2146
        %v2158 = vpack.c.bf16 %v2086, %v2086
        %v2159 = vld [vmem:[%s798] sm:$0xf]
        %v2160 = vld [vmem:[%s798 + $0x4] sm:$0xf]
        %v2161 = vld [vmem:[%s798 + $0x8] sm:$0xf]
        %v2162 = vld [vmem:[%s798 + $0xc] sm:$0xf]
        %v2167 = vunpack.c.l.b16 %v2159
        %v2168 = vunpack.c.l.b16 %v2160
        %v2169 = vunpack.c.l.b16 %v2161
        %v2170 = vunpack.c.l.b16 %v2162
        %v2171 = vpack.c.b16 %v2168, %v2167
        %v2172 = vpack.c.b16 %v2170, %v2169
        %v2176 = vsel %vm575, %v2158, 0
        %2178 = vmatprep.subr.bf16.mxu0 0
        %2179 = vmatpush1.bf16.msra.mxu0 0
        %2180 = vmatprep.subr.bf16.mxu0 0
        %2181 = vmatpush1.bf16.msra.mxu0 0
        %2182 = vmatprep.subr.bf16.mxu0 0
        %2183 = vmatpush1.bf16.msra.mxu0 0
        %2184 = vmatprep.subr.bf16.mxu0 0
        %2185 = vmatpush1.bf16.msra.mxu0 0
        %2186 = vmatprep.subr.bf16.mxu0 0
        %2187 = vmatpush1.bf16.msra.mxu0 0
        %2188 = vmatprep.subr.bf16.mxu0 0
        %2189 = vmatpush1.bf16.msra.mxu0 0
        %2190 = vmatprep.subr.bf16.mxu0 0
        %2191 = vmatpush1.bf16.msra.mxu0 %v2172
        %2192 = vmatprep.subr.bf16.mxu0 0
        %2193 = vmatpush1.bf16.msra.mxu0 %v2171
        %2194 = vmatprep.subr.bf16.mxu0 0
        %2195 = vmatpush2.bf16.msra.mxu0 0
        %2196 = vmatprep.subr.bf16.mxu0 0
        %2197 = vmatpush2.bf16.msra.mxu0 0
        %2198 = vmatprep.subr.bf16.mxu0 0
        %2199 = vmatpush2.bf16.msra.mxu0 0
        %2200 = vmatprep.subr.bf16.mxu0 0
        %2201 = vmatpush2.bf16.msra.mxu0 0
        %2202 = vmatprep.subr.bf16.mxu0 0
        %2203 = vmatpush2.bf16.msra.mxu0 0
        %2204 = vmatprep.subr.bf16.mxu0 0
        %2205 = vmatpush2.bf16.msra.mxu0 0
        %2206 = vmatprep.subr.bf16.mxu0 0
        %2207 = vmatpush2.bf16.msra.mxu0 0
        %2208 = vmatprep.subr.bf16.mxu0 0
        %2209 = vmatpush2.bf16.msra.mxu0 0
        %2210 = vmatprep.mubr.bf16.mxu0 0
        %2211 = vmatmul.mubr.bf16.gmra.mxu0 %v2176
        %v2212 = vpop.f32.mrf.mxu0
        %v2213 = vadd.f32 0.0, %v2212
        %v2214 = vpop.f32.mrf.mxu0
        %v2215 = vpop.f32.mrf.mxu0
        %v2216 = vpop.f32.mrf.mxu0
        %2217 = vdwg.mxu0
        %v2218 = vadd.f32 %v2157, %v2213
        %v2219 = vxor.u32 %v2218, 2147483648
        %v2220 = vmul.f32 %v2219, 1.442695
        %v2221 = vpow.pop %v2220
        %v2222 = vadd.f32 %v2221, 1.0
        %v2223 = vrcp.pop %v2222
        %v2224 = vmul.f32 1.0, %v2223
        %v2225 = vtanh.pop %v2218
        %2227 = vrot.lane.b32.xlu0 %v2087, 32
        %v2228 = vpop.permute.xlu0 %2227
        %v2230 = vmul.f32 %v2224, %v2228
        %2232 = vrot.lane.b32.xlu0 %v2225, 32
        %v2233 = vpop.permute.xlu0 %2232
        %v2235 = vmul.f32 %v2224, %v2233
        %2237 = vrot.lane.b32.xlu0 %v2235, 32
        %v2238 = vpop.permute.xlu0 %2237
        %v2240 = vadd.f32 %v2230, %v2238
        %v2241 = vtanh.pop %v2240
        %2243 = vrot.lane.b32.xlu0 %v2241, 32
        %v2244 = vpop.permute.xlu0 %2243
        %v2246 = vmul.f32 %v2224, %v2244
        %2248 = vrot.lane.b32.xlu0 %v2246, 64
        %v2249 = vpop.permute.xlu0 %2248
        %2251 = vst.msk [vmem:[%s722] sm:$0x3] %vm713, %v2249
        %2253 = vrot.lane.b32.xlu0 %v2240, 96
        %v2254 = vpop.permute.xlu0 %2253
        %2256 = vst.msk [vmem:[%s724] sm:$0x3] %vm713, %v2254
        %v2257 = vpack.c.bf16 %v2246, %v2246
        %v2258 = vld [vmem:[#allocation19] sm:$0xf]
        %v2259 = vld [vmem:[#allocation19 + $0x4] sm:$0xf]
        %v2260 = vld [vmem:[#allocation19 + $0x8] sm:$0xf]
        %v2261 = vld [vmem:[#allocation19 + $0xc] sm:$0xf]
        %2263 = vrot.lane.b32.xlu0 %v2257, 64
        %v2264 = vpop.permute.xlu0 %2263
        %v2269 = vunpack.c.l.b16 %v2258
        %v2270 = vunpack.c.l.b16 %v2259
        %v2271 = vunpack.c.l.b16 %v2260
        %v2272 = vunpack.c.l.b16 %v2261
        %v2273 = vpack.c.b16 %v2270, %v2269
        %v2274 = vpack.c.b16 %v2272, %v2271
        %v2278 = vsel %vm575, %v2264, 0
        %2280 = vmatprep.subr.bf16.mxu0 0
        %2281 = vmatpush1.bf16.msra.mxu0 0
        %2282 = vmatprep.subr.bf16.mxu0 0
        %2283 = vmatpush1.bf16.msra.mxu0 0
        %2284 = vmatprep.subr.bf16.mxu0 0
        %2285 = vmatpush1.bf16.msra.mxu0 0
        %2286 = vmatprep.subr.bf16.mxu0 0
        %2287 = vmatpush1.bf16.msra.mxu0 0
        %2288 = vmatprep.subr.bf16.mxu0 0
        %2289 = vmatpush1.bf16.msra.mxu0 0
        %2290 = vmatprep.subr.bf16.mxu0 0
        %2291 = vmatpush1.bf16.msra.mxu0 0
        %2292 = vmatprep.subr.bf16.mxu0 0
        %2293 = vmatpush1.bf16.msra.mxu0 %v2274
        %2294 = vmatprep.subr.bf16.mxu0 0
        %2295 = vmatpush1.bf16.msra.mxu0 %v2273
        %2296 = vmatprep.subr.bf16.mxu0 0
        %2297 = vmatpush2.bf16.msra.mxu0 0
        %2298 = vmatprep.subr.bf16.mxu0 0
        %2299 = vmatpush2.bf16.msra.mxu0 0
        %2300 = vmatprep.subr.bf16.mxu0 0
        %2301 = vmatpush2.bf16.msra.mxu0 0
        %2302 = vmatprep.subr.bf16.mxu0 0
        %2303 = vmatpush2.bf16.msra.mxu0 0
        %2304 = vmatprep.subr.bf16.mxu0 0
        %2305 = vmatpush2.bf16.msra.mxu0 0
        %2306 = vmatprep.subr.bf16.mxu0 0
        %2307 = vmatpush2.bf16.msra.mxu0 0
        %2308 = vmatprep.subr.bf16.mxu0 0
        %2309 = vmatpush2.bf16.msra.mxu0 0
        %2310 = vmatprep.subr.bf16.mxu0 0
        %2311 = vmatpush2.bf16.msra.mxu0 0
        %2312 = vmatprep.mubr.bf16.mxu0 0
        %2313 = vmatmul.mubr.bf16.gmra.mxu0 %v2278
        %v2314 = vpop.f32.mrf.mxu0
        %v2315 = vadd.f32 0.0, %v2314
        %v2316 = vpop.f32.mrf.mxu0
        %v2317 = vpop.f32.mrf.mxu0
        %v2318 = vpop.f32.mrf.mxu0
        %2319 = vdwg.mxu0
        %v2322 = vunpack.c.l.s4 1966171168
        %v2323 = vunpack.c.0.s8 %v2322
        %v2324 = vlaneseq
        %v2325 = vshrl.u32 %v2324, 7
        %v2326 = vsub.s32 %v2323, %v2325
        %v2327 = vrot.slane %v2315, %v2326
        %v2328 = vcombine.high %v2327, %v2327
        %v2330 = vunpack.c.l.s4 1966171168
        %v2331 = vunpack.c.0.s8 %v2330
        %v2332 = vlaneseq
        %v2333 = vshrl.u32 %v2332, 7
        %v2334 = vsub.s32 %v2331, %v2333
        %v2335 = vrot.slane %v2327, %v2334
        %v2337 = vunpack.c.l.s4 1966171168
        %v2338 = vunpack.c.0.s8 %v2337
        %v2339 = vlaneseq
        %v2340 = vshrl.u32 %v2339, 7
        %v2341 = vsub.s32 %v2338, %v2340
        %v2342 = vrot.slane %v2328, %v2341
        %v2343 = vlaneseq
        %v2344 = vshrl.u32 %v2343, 7
        %v2345 = vsub.s32 0, %v2344
        %v2346 = vrot.slane %v2335, %v2345
        %v2347 = vlaneseq
        %v2348 = vshrl.u32 %v2347, 7
        %v2349 = vsub.s32 0, %v2348
        %v2350 = vrot.slane %v2342, %v2349
        %v2353 = vmul.f32 %v551, %v2346
        %v2354 = vmul.f32 %v552, %v2350
        %v2355 = vsel %vm575, %v2353, 0.0
        %2356 = vadd.xlane.f32.xlu0 %v2355
        %v2357 = vpop.xlane.xlu0 %2356
        %v2358 = vsel %vm575, %v2354, 0.0
        %2359 = vadd.xlane.f32.xlu0 %v2358
        %v2360 = vpop.xlane.xlu0 %2359
        %v2361 = vadd.f32 %v2357, %v1008
        %v2362 = vadd.f32 %v2360, %v1015
        %2365 = vset.pattern.permute.xlu0 0
        %2366 = vperm.xlu0 %2365, %v2361
        %v2367 = vpop.permute.xlu0 %2366
        %2368 = vset.pattern.permute.xlu0 0
        %2369 = vperm.xlu0 %2368, %v2362
        %v2370 = vpop.permute.xlu0 %2369
        %v2371 = vlaneseq
        %v2372 = vshrl.u32 %v2371, 7
        %v2373 = vsub.s32 %v1029, %v2372
        %v2374 = vrot.slane %v2367, %v2373
        %v2375 = vlaneseq
        %v2376 = vshrl.u32 %v2375, 7
        %v2377 = vsub.s32 %v1029, %v2376
        %v2378 = vrot.slane %v2370, %v2377
        %v2379 = vsel %vm1038, %v2378, %v2374
        %v2381 = vsel %vm1041, %v2379, -inf
        %2382 = vmax.xlane.f32.xlu0 %v2381
        %v2383 = vpop.xlane.xlu0 %2382
        %v2385 = vlaneseq
        %v2386 = vshrl.u32 %v2385, 7
        %v2387 = vsub.s32 0, %v2386
        %v2388 = vrot.slane %v2383, %v2387
        %v2389 = vlaneseq
        %v2390 = vshrl.u32 %v2389, 7
        %v2391 = vsub.s32 1, %v2390
        %v2392 = vrot.slane %v2383, %v2391
        %v2395 = vsub.f32 %v2361, %v2388
        %v2396 = vsub.f32 %v2362, %v2392
        %v2397 = vmul.f32 %v2395, 1.442695
        %v2398 = vpow.pop %v2397
        %v2399 = vmul.f32 %v2396, 1.442695
        %v2400 = vpow.pop %v2399
        %2403 = vset.pattern.permute.xlu0 0
        %2404 = vperm.xlu0 %2403, %v2398
        %v2405 = vpop.permute.xlu0 %2404
        %2406 = vset.pattern.permute.xlu0 0
        %2407 = vperm.xlu0 %2406, %v2400
        %v2408 = vpop.permute.xlu0 %2407
        %v2409 = vlaneseq
        %v2410 = vshrl.u32 %v2409, 7
        %v2411 = vsub.s32 %v1029, %v2410
        %v2412 = vrot.slane %v2405, %v2411
        %v2413 = vlaneseq
        %v2414 = vshrl.u32 %v2413, 7
        %v2415 = vsub.s32 %v1029, %v2414
        %v2416 = vrot.slane %v2408, %v2415
        %v2417 = vsel %vm1038, %v2416, %v2412
        %v2419 = vsel %vm1041, %v2417, 0.0
        %2420 = vadd.xlane.f32.xlu0 %v2419
        %v2421 = vpop.xlane.xlu0 %2420
        %v2423 = vlaneseq
        %v2424 = vshrl.u32 %v2423, 7
        %v2425 = vsub.s32 0, %v2424
        %v2426 = vrot.slane %v2421, %v2425
        %v2427 = vlaneseq
        %v2428 = vshrl.u32 %v2427, 7
        %v2429 = vsub.s32 1, %v2428
        %v2430 = vrot.slane %v2421, %v2429
        %v2433 = vrcp.pop %v2426
        %v2434 = vmul.f32 %v2398, %v2433
        %v2435 = vrcp.pop %v2430
        %v2436 = vmul.f32 %v2400, %v2435
        %2438 = vset.pattern.permute.xlu0 0
        %2439 = vperm.xlu0 %2438, %v2434
        %v2440 = vpop.permute.xlu0 %2439
        %2443 = vset.pattern.permute.xlu0 0
        %2444 = vperm.xlu0 %2443, %v2436
        %v2445 = vpop.permute.xlu0 %2444
        %v2447 = vmul.f32 %v2440, %v551
        %v2448 = vmul.f32 %v2445, %v552
        %v2449 = vsel %vm575, %v2447, 0.0
        %v2450 = vrot.slane %v2449, 4
        %v2451 = vadd.f32 %v2449, %v2450
        %v2452 = vrot.slane %v2451, 2
        %v2453 = vadd.f32 %v2451, %v2452
        %v2454 = vrot.slane %v2453, 1
        %v2455 = vadd.f32 %v2453, %v2454
        %v2456 = vsel %vm575, %v2448, 0.0
        %v2457 = vrot.slane %v2456, 4
        %v2458 = vadd.f32 %v2456, %v2457
        %v2459 = vrot.slane %v2458, 2
        %v2460 = vadd.f32 %v2458, %v2459
        %v2461 = vrot.slane %v2460, 1
        %v2462 = vadd.f32 %v2460, %v2461
        %v2463 = vpack.c.bf16 %v2455, %v2455
        %v2464 = vpack.c.bf16 %v2462, %v2462
        %v2465 = vld [vmem:[%s9] sm:$0xf]
        %v2466 = vld [vmem:[%s9 + $0x4] sm:$0xf]
        %v2467 = vld [vmem:[%s9 + $0x8] sm:$0xf]
        %v2468 = vld [vmem:[%s9 + $0xc] sm:$0xf]
        %v2469 = vld [vmem:[#allocation20] sm:$0xf]
        %v2470 = vld [vmem:[#allocation20 + $0x4] sm:$0xf]
        %v2471 = vld [vmem:[#allocation20 + $0x8] sm:$0xf]
        %v2472 = vld [vmem:[#allocation20 + $0xc] sm:$0xf]
        %v2477 = vunpack.c.l.b16 %v2469
        %v2478 = vunpack.c.l.b16 %v2470
        %v2479 = vunpack.c.l.b16 %v2471
        %v2480 = vunpack.c.l.b16 %v2472
        %v2481 = vpack.c.b16 %v2478, %v2477
        %v2482 = vpack.c.b16 %v2480, %v2479
        %2485 = vmatprep.subr.bf16.mxu0 0
        %2486 = vmatpush1.bf16.msra.mxu0 0
        %2487 = vmatprep.subr.bf16.mxu0 0
        %2488 = vmatpush1.bf16.msra.mxu0 0
        %2489 = vmatprep.subr.bf16.mxu0 0
        %2490 = vmatpush1.bf16.msra.mxu0 0
        %2491 = vmatprep.subr.bf16.mxu0 0
        %2492 = vmatpush1.bf16.msra.mxu0 0
        %2493 = vmatprep.subr.bf16.mxu0 0
        %2494 = vmatpush1.bf16.msra.mxu0 0
        %2495 = vmatprep.subr.bf16.mxu0 0
        %2496 = vmatpush1.bf16.msra.mxu0 0
        %2497 = vmatprep.subr.bf16.mxu0 0
        %2498 = vmatpush1.bf16.msra.mxu0 %v2482
        %2499 = vmatprep.subr.bf16.mxu0 0
        %2500 = vmatpush1.bf16.msra.mxu0 %v2481
        %2501 = vmatprep.subr.bf16.mxu0 0
        %2502 = vmatpush2.bf16.msra.mxu0 0
        %2503 = vmatprep.subr.bf16.mxu0 0
        %2504 = vmatpush2.bf16.msra.mxu0 0
        %2505 = vmatprep.subr.bf16.mxu0 0
        %2506 = vmatpush2.bf16.msra.mxu0 0
        %2507 = vmatprep.subr.bf16.mxu0 0
        %2508 = vmatpush2.bf16.msra.mxu0 0
        %2509 = vmatprep.subr.bf16.mxu0 0
        %2510 = vmatpush2.bf16.msra.mxu0 0
        %2511 = vmatprep.subr.bf16.mxu0 0
        %2512 = vmatpush2.bf16.msra.mxu0 0
        %2513 = vmatprep.subr.bf16.mxu0 0
        %2514 = vmatpush2.bf16.msra.mxu0 0
        %2515 = vmatprep.subr.bf16.mxu0 0
        %2516 = vmatpush2.bf16.msra.mxu0 0
        %2517 = vmatprep.mubr.bf16.mxu0 0
        %2518 = vmatmul.mubr.bf16.gmra.mxu0 %v2278
        %v2519 = vpop.f32.mrf.mxu0
        %v2520 = vadd.f32 0.0, %v2519
        %v2521 = vpop.f32.mrf.mxu0
        %v2522 = vpop.f32.mrf.mxu0
        %v2523 = vpop.f32.mrf.mxu0
        %2524 = vdwg.mxu0
        %v2527 = vunpack.c.l.b16 %v2463
        %v2528 = vunpack.c.l.b16 %v2464
        %v2529 = vsel %vm1038, %v2528, %v2527
        %v2530 = vpack.c.b16 %v2529, %v2529
        %v2535 = vunpack.c.l.b16 %v2465
        %v2536 = vunpack.c.l.b16 %v2466
        %v2537 = vunpack.c.l.b16 %v2467
        %v2538 = vunpack.c.l.b16 %v2468
        %v2539 = vpack.c.b16 %v2536, %v2535
        %v2540 = vpack.c.b16 %v2538, %v2537
        %v2544 = vsel %vm575, %v2530, 0
        %2546 = vmatprep.subr.bf16.mxu0 0
        %2547 = vmatpush1.bf16.msra.mxu0 0
        %2548 = vmatprep.subr.bf16.mxu0 0
        %2549 = vmatpush1.bf16.msra.mxu0 0
        %2550 = vmatprep.subr.bf16.mxu0 0
        %2551 = vmatpush1.bf16.msra.mxu0 0
        %2552 = vmatprep.subr.bf16.mxu0 0
        %2553 = vmatpush1.bf16.msra.mxu0 0
        %2554 = vmatprep.subr.bf16.mxu0 0
        %2555 = vmatpush1.bf16.msra.mxu0 0
        %2556 = vmatprep.subr.bf16.mxu0 0
        %2557 = vmatpush1.bf16.msra.mxu0 0
        %2558 = vmatprep.subr.bf16.mxu0 0
        %2559 = vmatpush1.bf16.msra.mxu0 %v2540
        %2560 = vmatprep.subr.bf16.mxu0 0
        %2561 = vmatpush1.bf16.msra.mxu0 %v2539
        %2562 = vmatprep.subr.bf16.mxu0 0
        %2563 = vmatpush2.bf16.msra.mxu0 0
        %2564 = vmatprep.subr.bf16.mxu0 0
        %2565 = vmatpush2.bf16.msra.mxu0 0
        %2566 = vmatprep.subr.bf16.mxu0 0
        %2567 = vmatpush2.bf16.msra.mxu0 0
        %2568 = vmatprep.subr.bf16.mxu0 0
        %2569 = vmatpush2.bf16.msra.mxu0 0
        %2570 = vmatprep.subr.bf16.mxu0 0
        %2571 = vmatpush2.bf16.msra.mxu0 0
        %2572 = vmatprep.subr.bf16.mxu0 0
        %2573 = vmatpush2.bf16.msra.mxu0 0
        %2574 = vmatprep.subr.bf16.mxu0 0
        %2575 = vmatpush2.bf16.msra.mxu0 0
        %2576 = vmatprep.subr.bf16.mxu0 0
        %2577 = vmatpush2.bf16.msra.mxu0 0
        %2578 = vmatprep.mubr.bf16.mxu0 0
        %2579 = vmatmul.mubr.bf16.gmra.mxu0 %v2544
        %v2580 = vpop.f32.mrf.mxu0
        %v2581 = vadd.f32 %v2520, %v2580
        %v2582 = vpop.f32.mrf.mxu0
        %v2583 = vpop.f32.mrf.mxu0
        %v2584 = vpop.f32.mrf.mxu0
        %2585 = vdwg.mxu0
        %v2586 = vtanh.pop %v2581
        %2587 = vst.msk [vmem:[#allocation4] sm:$0x3] %vm713, %v2586
        %s2588 = scalar_lea.vmem %s533, 4 [#allocation22]
        %2589 = vst.msk [vmem:[%s2588] sm:$0x3] %vm713, %v2586
        %v2590 = vld [vmem:[#allocation4] sm:$0x3]
        %s2591 = scalar_lea.vmem %s459, 6 [#allocation5]
        %v2592 = vld [vmem:[%s2591] sm:$0x3]
        %v2593 = vld [vmem:[#allocation2] sm:$0x3]
        %v2594 = vld [vmem:[#allocation3] sm:$0x3]
        %v2595 = vpack.c.bf16 %v2590, %v2590
        %v2596 = vld [vmem:[#allocation14] sm:$0xf]
        %v2597 = vld [vmem:[#allocation14 + $0x4] sm:$0xf]
        %v2598 = vld [vmem:[#allocation14 + $0x8] sm:$0xf]
        %v2599 = vld [vmem:[#allocation14 + $0xc] sm:$0xf]
        %v2604 = vunpack.c.l.b16 %v2596
        %v2605 = vunpack.c.l.b16 %v2597
        %v2606 = vunpack.c.l.b16 %v2598
        %v2607 = vunpack.c.l.b16 %v2599
        %v2608 = vpack.c.b16 %v2605, %v2604
        %v2609 = vpack.c.b16 %v2607, %v2606
        %v2613 = vsel %vm575, %v2595, 0
        %2615 = vmatprep.subr.bf16.mxu0 0
        %2616 = vmatpush1.bf16.msra.mxu0 0
        %2617 = vmatprep.subr.bf16.mxu0 0
        %2618 = vmatpush1.bf16.msra.mxu0 0
        %2619 = vmatprep.subr.bf16.mxu0 0
        %2620 = vmatpush1.bf16.msra.mxu0 0
        %2621 = vmatprep.subr.bf16.mxu0 0
        %2622 = vmatpush1.bf16.msra.mxu0 0
        %2623 = vmatprep.subr.bf16.mxu0 0
        %2624 = vmatpush1.bf16.msra.mxu0 0
        %2625 = vmatprep.subr.bf16.mxu0 0
        %2626 = vmatpush1.bf16.msra.mxu0 0
        %2627 = vmatprep.subr.bf16.mxu0 0
        %2628 = vmatpush1.bf16.msra.mxu0 %v2609
        %2629 = vmatprep.subr.bf16.mxu0 0
        %2630 = vmatpush1.bf16.msra.mxu0 %v2608
        %2631 = vmatprep.subr.bf16.mxu0 0
        %2632 = vmatpush2.bf16.msra.mxu0 0
        %2633 = vmatprep.subr.bf16.mxu0 0
        %2634 = vmatpush2.bf16.msra.mxu0 0
        %2635 = vmatprep.subr.bf16.mxu0 0
        %2636 = vmatpush2.bf16.msra.mxu0 0
        %2637 = vmatprep.subr.bf16.mxu0 0
        %2638 = vmatpush2.bf16.msra.mxu0 0
        %2639 = vmatprep.subr.bf16.mxu0 0
        %2640 = vmatpush2.bf16.msra.mxu0 0
        %2641 = vmatprep.subr.bf16.mxu0 0
        %2642 = vmatpush2.bf16.msra.mxu0 0
        %2643 = vmatprep.subr.bf16.mxu0 0
        %2644 = vmatpush2.bf16.msra.mxu0 0
        %2645 = vmatprep.subr.bf16.mxu0 0
        %2646 = vmatpush2.bf16.msra.mxu0 0
        %2647 = vmatprep.mubr.bf16.mxu0 0
        %2648 = vmatmul.mubr.bf16.gmra.mxu0 %v2613
        %v2649 = vpop.f32.mrf.mxu0
        %v2650 = vadd.f32 0.0, %v2649
        %v2651 = vpop.f32.mrf.mxu0
        %v2652 = vpop.f32.mrf.mxu0
        %v2653 = vpop.f32.mrf.mxu0
        %2654 = vdwg.mxu0
        %v2655 = vadd.f32 %v2592, %v2650
        %v2656 = vpack.c.bf16 %v2593, %v2593
        %v2657 = vld [vmem:[#allocation16] sm:$0xf]
        %v2658 = vld [vmem:[#allocation16 + $0x4] sm:$0xf]
        %v2659 = vld [vmem:[#allocation16 + $0x8] sm:$0xf]
        %v2660 = vld [vmem:[#allocation16 + $0xc] sm:$0xf]
        %v2665 = vunpack.c.l.b16 %v2657
        %v2666 = vunpack.c.l.b16 %v2658
        %v2667 = vunpack.c.l.b16 %v2659
        %v2668 = vunpack.c.l.b16 %v2660
        %v2669 = vpack.c.b16 %v2666, %v2665
        %v2670 = vpack.c.b16 %v2668, %v2667
        %v2674 = vsel %vm575, %v2656, 0
        %2676 = vmatprep.subr.bf16.mxu0 0
        %2677 = vmatpush1.bf16.msra.mxu0 0
        %2678 = vmatprep.subr.bf16.mxu0 0
        %2679 = vmatpush1.bf16.msra.mxu0 0
        %2680 = vmatprep.subr.bf16.mxu0 0
        %2681 = vmatpush1.bf16.msra.mxu0 0
        %2682 = vmatprep.subr.bf16.mxu0 0
        %2683 = vmatpush1.bf16.msra.mxu0 0
        %2684 = vmatprep.subr.bf16.mxu0 0
        %2685 = vmatpush1.bf16.msra.mxu0 0
        %2686 = vmatprep.subr.bf16.mxu0 0
        %2687 = vmatpush1.bf16.msra.mxu0 0
        %2688 = vmatprep.subr.bf16.mxu0 0
        %2689 = vmatpush1.bf16.msra.mxu0 %v2670
        %2690 = vmatprep.subr.bf16.mxu0 0
        %2691 = vmatpush1.bf16.msra.mxu0 %v2669
        %2692 = vmatprep.subr.bf16.mxu0 0
        %2693 = vmatpush2.bf16.msra.mxu0 0
        %2694 = vmatprep.subr.bf16.mxu0 0
        %2695 = vmatpush2.bf16.msra.mxu0 0
        %2696 = vmatprep.subr.bf16.mxu0 0
        %2697 = vmatpush2.bf16.msra.mxu0 0
        %2698 = vmatprep.subr.bf16.mxu0 0
        %2699 = vmatpush2.bf16.msra.mxu0 0
        %2700 = vmatprep.subr.bf16.mxu0 0
        %2701 = vmatpush2.bf16.msra.mxu0 0
        %2702 = vmatprep.subr.bf16.mxu0 0
        %2703 = vmatpush2.bf16.msra.mxu0 0
        %2704 = vmatprep.subr.bf16.mxu0 0
        %2705 = vmatpush2.bf16.msra.mxu0 0
        %2706 = vmatprep.subr.bf16.mxu0 0
        %2707 = vmatpush2.bf16.msra.mxu0 0
        %2708 = vmatprep.mubr.bf16.mxu0 0
        %2709 = vmatmul.mubr.bf16.gmra.mxu0 %v2674
        %v2710 = vpop.f32.mrf.mxu0
        %v2711 = vadd.f32 0.0, %v2710
        %v2712 = vpop.f32.mrf.mxu0
        %v2713 = vpop.f32.mrf.mxu0
        %v2714 = vpop.f32.mrf.mxu0
        %2715 = vdwg.mxu0
        %v2716 = vadd.f32 %v2655, %v2711
        %v2717 = vxor.u32 %v2716, 2147483648
        %v2718 = vmul.f32 %v2717, 1.442695
        %v2719 = vpow.pop %v2718
        %v2720 = vadd.f32 %v2719, 1.0
        %v2721 = vrcp.pop %v2720
        %v2722 = vmul.f32 1.0, %v2721
        %v2723 = vtanh.pop %v2716
        %2725 = vrot.lane.b32.xlu0 %v2594, 32
        %v2726 = vpop.permute.xlu0 %2725
        %v2728 = vmul.f32 %v2722, %v2726
        %2730 = vrot.lane.b32.xlu0 %v2723, 32
        %v2731 = vpop.permute.xlu0 %2730
        %v2733 = vmul.f32 %v2722, %v2731
        %2735 = vrot.lane.b32.xlu0 %v2733, 32
        %v2736 = vpop.permute.xlu0 %2735
        %v2738 = vadd.f32 %v2728, %v2736
        %v2739 = vtanh.pop %v2738
        %2741 = vrot.lane.b32.xlu0 %v2739, 32
        %v2742 = vpop.permute.xlu0 %2741
        %v2744 = vmul.f32 %v2722, %v2742
        %2746 = vrot.lane.b32.xlu0 %v2744, 64
        %v2747 = vpop.permute.xlu0 %2746
        %2749 = vst.msk [vmem:[#allocation2] sm:$0x3] %vm713, %v2747
        %2751 = vrot.lane.b32.xlu0 %v2738, 96
        %v2752 = vpop.permute.xlu0 %2751
        %2754 = vst.msk [vmem:[#allocation3] sm:$0x3] %vm713, %v2752
        %v2755 = vld [vmem:[%s720] sm:$0x1]
        %v2756 = vld [vmem:[%s722] sm:$0x3]
        %v2757 = vld [vmem:[%s724] sm:$0x3]
        %v2758 = vpack.c.bf16 %v2744, %v2744
        %v2759 = vld [vmem:[%s727] sm:$0xf]
        %v2760 = vld [vmem:[%s727 + $0x4] sm:$0xf]
        %v2761 = vld [vmem:[%s727 + $0x8] sm:$0xf]
        %v2762 = vld [vmem:[%s727 + $0xc] sm:$0xf]
        %2764 = vrot.lane.b32.xlu0 %v2758, 64
        %v2765 = vpop.permute.xlu0 %2764
        %v2770 = vunpack.c.l.b16 %v2759
        %v2771 = vunpack.c.l.b16 %v2760
        %v2772 = vunpack.c.l.b16 %v2761
        %v2773 = vunpack.c.l.b16 %v2762
        %v2774 = vpack.c.b16 %v2771, %v2770
        %v2775 = vpack.c.b16 %v2773, %v2772
        %v2779 = vsel %vm575, %v2765, 0
        %2781 = vmatprep.subr.bf16.mxu0 0
        %2782 = vmatpush1.bf16.msra.mxu0 0
        %2783 = vmatprep.subr.bf16.mxu0 0
        %2784 = vmatpush1.bf16.msra.mxu0 0
        %2785 = vmatprep.subr.bf16.mxu0 0
        %2786 = vmatpush1.bf16.msra.mxu0 0
        %2787 = vmatprep.subr.bf16.mxu0 0
        %2788 = vmatpush1.bf16.msra.mxu0 0
        %2789 = vmatprep.subr.bf16.mxu0 0
        %2790 = vmatpush1.bf16.msra.mxu0 0
        %2791 = vmatprep.subr.bf16.mxu0 0
        %2792 = vmatpush1.bf16.msra.mxu0 0
        %2793 = vmatprep.subr.bf16.mxu0 0
        %2794 = vmatpush1.bf16.msra.mxu0 %v2775
        %2795 = vmatprep.subr.bf16.mxu0 0
        %2796 = vmatpush1.bf16.msra.mxu0 %v2774
        %2797 = vmatprep.subr.bf16.mxu0 0
        %2798 = vmatpush2.bf16.msra.mxu0 0
        %2799 = vmatprep.subr.bf16.mxu0 0
        %2800 = vmatpush2.bf16.msra.mxu0 0
        %2801 = vmatprep.subr.bf16.mxu0 0
        %2802 = vmatpush2.bf16.msra.mxu0 0
        %2803 = vmatprep.subr.bf16.mxu0 0
        %2804 = vmatpush2.bf16.msra.mxu0 0
        %2805 = vmatprep.subr.bf16.mxu0 0
        %2806 = vmatpush2.bf16.msra.mxu0 0
        %2807 = vmatprep.subr.bf16.mxu0 0
        %2808 = vmatpush2.bf16.msra.mxu0 0
        %2809 = vmatprep.subr.bf16.mxu0 0
        %2810 = vmatpush2.bf16.msra.mxu0 0
        %2811 = vmatprep.subr.bf16.mxu0 0
        %2812 = vmatpush2.bf16.msra.mxu0 0
        %2813 = vmatprep.mubr.bf16.mxu0 0
        %2814 = vmatmul.mubr.bf16.gmra.mxu0 %v2779
        %v2815 = vpop.f32.mrf.mxu0
        %v2816 = vadd.f32 0.0, %v2815
        %v2817 = vpop.f32.mrf.mxu0
        %v2818 = vpop.f32.mrf.mxu0
        %v2819 = vpop.f32.mrf.mxu0
        %2820 = vdwg.mxu0
        %v2822 = vlaneseq
        %v2823 = vshrl.u32 %v2822, 7
        %v2824 = vsub.s32 0, %v2823
        %v2825 = vrot.slane %v2755, %v2824
        %v2827 = vadd.f32 %v2825, %v2816
        %v2828 = vpack.c.bf16 %v2756, %v2756
        %v2829 = vld [vmem:[%s798] sm:$0xf]
        %v2830 = vld [vmem:[%s798 + $0x4] sm:$0xf]
        %v2831 = vld [vmem:[%s798 + $0x8] sm:$0xf]
        %v2832 = vld [vmem:[%s798 + $0xc] sm:$0xf]
        %v2837 = vunpack.c.l.b16 %v2829
        %v2838 = vunpack.c.l.b16 %v2830
        %v2839 = vunpack.c.l.b16 %v2831
        %v2840 = vunpack.c.l.b16 %v2832
        %v2841 = vpack.c.b16 %v2838, %v2837
        %v2842 = vpack.c.b16 %v2840, %v2839
        %v2846 = vsel %vm575, %v2828, 0
        %2848 = vmatprep.subr.bf16.mxu0 0
        %2849 = vmatpush1.bf16.msra.mxu0 0
        %2850 = vmatprep.subr.bf16.mxu0 0
        %2851 = vmatpush1.bf16.msra.mxu0 0
        %2852 = vmatprep.subr.bf16.mxu0 0
        %2853 = vmatpush1.bf16.msra.mxu0 0
        %2854 = vmatprep.subr.bf16.mxu0 0
        %2855 = vmatpush1.bf16.msra.mxu0 0
        %2856 = vmatprep.subr.bf16.mxu0 0
        %2857 = vmatpush1.bf16.msra.mxu0 0
        %2858 = vmatprep.subr.bf16.mxu0 0
        %2859 = vmatpush1.bf16.msra.mxu0 0
        %2860 = vmatprep.subr.bf16.mxu0 0
        %2861 = vmatpush1.bf16.msra.mxu0 %v2842
        %2862 = vmatprep.subr.bf16.mxu0 0
        %2863 = vmatpush1.bf16.msra.mxu0 %v2841
        %2864 = vmatprep.subr.bf16.mxu0 0
        %2865 = vmatpush2.bf16.msra.mxu0 0
        %2866 = vmatprep.subr.bf16.mxu0 0
        %2867 = vmatpush2.bf16.msra.mxu0 0
        %2868 = vmatprep.subr.bf16.mxu0 0
        %2869 = vmatpush2.bf16.msra.mxu0 0
        %2870 = vmatprep.subr.bf16.mxu0 0
        %2871 = vmatpush2.bf16.msra.mxu0 0
        %2872 = vmatprep.subr.bf16.mxu0 0
        %2873 = vmatpush2.bf16.msra.mxu0 0
        %2874 = vmatprep.subr.bf16.mxu0 0
        %2875 = vmatpush2.bf16.msra.mxu0 0
        %2876 = vmatprep.subr.bf16.mxu0 0
        %2877 = vmatpush2.bf16.msra.mxu0 0
        %2878 = vmatprep.subr.bf16.mxu0 0
        %2879 = vmatpush2.bf16.msra.mxu0 0
        %2880 = vmatprep.mubr.bf16.mxu0 0
        %2881 = vmatmul.mubr.bf16.gmra.mxu0 %v2846
        %v2882 = vpop.f32.mrf.mxu0
        %v2883 = vadd.f32 0.0, %v2882
        %v2884 = vpop.f32.mrf.mxu0
        %v2885 = vpop.f32.mrf.mxu0
        %v2886 = vpop.f32.mrf.mxu0
        %2887 = vdwg.mxu0
        %v2888 = vadd.f32 %v2827, %v2883
        %v2889 = vxor.u32 %v2888, 2147483648
        %v2890 = vmul.f32 %v2889, 1.442695
        %v2891 = vpow.pop %v2890
        %v2892 = vadd.f32 %v2891, 1.0
        %v2893 = vrcp.pop %v2892
        %v2894 = vmul.f32 1.0, %v2893
        %v2895 = vtanh.pop %v2888
        %2897 = vrot.lane.b32.xlu0 %v2757, 32
        %v2898 = vpop.permute.xlu0 %2897
        %v2900 = vmul.f32 %v2894, %v2898
        %2902 = vrot.lane.b32.xlu0 %v2895, 32
        %v2903 = vpop.permute.xlu0 %2902
        %v2905 = vmul.f32 %v2894, %v2903
        %2907 = vrot.lane.b32.xlu0 %v2905, 32
        %v2908 = vpop.permute.xlu0 %2907
        %v2910 = vadd.f32 %v2900, %v2908
        %v2911 = vtanh.pop %v2910
        %2913 = vrot.lane.b32.xlu0 %v2911, 32
        %v2914 = vpop.permute.xlu0 %2913
        %v2916 = vmul.f32 %v2894, %v2914
        %2918 = vrot.lane.b32.xlu0 %v2916, 64
        %v2919 = vpop.permute.xlu0 %2918
        %2921 = vst.msk [vmem:[%s722] sm:$0x3] %vm713, %v2919
        %2923 = vrot.lane.b32.xlu0 %v2910, 96
        %v2924 = vpop.permute.xlu0 %2923
        %2926 = vst.msk [vmem:[%s724] sm:$0x3] %vm713, %v2924
        %v2927 = vpack.c.bf16 %v2916, %v2916
        %v2928 = vld [vmem:[#allocation19] sm:$0xf]
        %v2929 = vld [vmem:[#allocation19 + $0x4] sm:$0xf]
        %v2930 = vld [vmem:[#allocation19 + $0x8] sm:$0xf]
        %v2931 = vld [vmem:[#allocation19 + $0xc] sm:$0xf]
        %2933 = vrot.lane.b32.xlu0 %v2927, 64
        %v2934 = vpop.permute.xlu0 %2933
        %v2939 = vunpack.c.l.b16 %v2928
        %v2940 = vunpack.c.l.b16 %v2929
        %v2941 = vunpack.c.l.b16 %v2930
        %v2942 = vunpack.c.l.b16 %v2931
        %v2943 = vpack.c.b16 %v2940, %v2939
        %v2944 = vpack.c.b16 %v2942, %v2941
        %v2948 = vsel %vm575, %v2934, 0
        %2950 = vmatprep.subr.bf16.mxu0 0
        %2951 = vmatpush1.bf16.msra.mxu0 0
        %2952 = vmatprep.subr.bf16.mxu0 0
        %2953 = vmatpush1.bf16.msra.mxu0 0
        %2954 = vmatprep.subr.bf16.mxu0 0
        %2955 = vmatpush1.bf16.msra.mxu0 0
        %2956 = vmatprep.subr.bf16.mxu0 0
        %2957 = vmatpush1.bf16.msra.mxu0 0
        %2958 = vmatprep.subr.bf16.mxu0 0
        %2959 = vmatpush1.bf16.msra.mxu0 0
        %2960 = vmatprep.subr.bf16.mxu0 0
        %2961 = vmatpush1.bf16.msra.mxu0 0
        %2962 = vmatprep.subr.bf16.mxu0 0
        %2963 = vmatpush1.bf16.msra.mxu0 %v2944
        %2964 = vmatprep.subr.bf16.mxu0 0
        %2965 = vmatpush1.bf16.msra.mxu0 %v2943
        %2966 = vmatprep.subr.bf16.mxu0 0
        %2967 = vmatpush2.bf16.msra.mxu0 0
        %2968 = vmatprep.subr.bf16.mxu0 0
        %2969 = vmatpush2.bf16.msra.mxu0 0
        %2970 = vmatprep.subr.bf16.mxu0 0
        %2971 = vmatpush2.bf16.msra.mxu0 0
        %2972 = vmatprep.subr.bf16.mxu0 0
        %2973 = vmatpush2.bf16.msra.mxu0 0
        %2974 = vmatprep.subr.bf16.mxu0 0
        %2975 = vmatpush2.bf16.msra.mxu0 0
        %2976 = vmatprep.subr.bf16.mxu0 0
        %2977 = vmatpush2.bf16.msra.mxu0 0
        %2978 = vmatprep.subr.bf16.mxu0 0
        %2979 = vmatpush2.bf16.msra.mxu0 0
        %2980 = vmatprep.subr.bf16.mxu0 0
        %2981 = vmatpush2.bf16.msra.mxu0 0
        %2982 = vmatprep.mubr.bf16.mxu0 0
        %2983 = vmatmul.mubr.bf16.gmra.mxu0 %v2948
        %v2984 = vpop.f32.mrf.mxu0
        %v2985 = vadd.f32 0.0, %v2984
        %v2986 = vpop.f32.mrf.mxu0
        %v2987 = vpop.f32.mrf.mxu0
        %v2988 = vpop.f32.mrf.mxu0
        %2989 = vdwg.mxu0
        %v2992 = vunpack.c.l.s4 1966171168
        %v2993 = vunpack.c.0.s8 %v2992
        %v2994 = vlaneseq
        %v2995 = vshrl.u32 %v2994, 7
        %v2996 = vsub.s32 %v2993, %v2995
        %v2997 = vrot.slane %v2985, %v2996
        %v2998 = vcombine.high %v2997, %v2997
        %v3000 = vunpack.c.l.s4 1966171168
        %v3001 = vunpack.c.0.s8 %v3000
        %v3002 = vlaneseq
        %v3003 = vshrl.u32 %v3002, 7
        %v3004 = vsub.s32 %v3001, %v3003
        %v3005 = vrot.slane %v2997, %v3004
        %v3007 = vunpack.c.l.s4 1966171168
        %v3008 = vunpack.c.0.s8 %v3007
        %v3009 = vlaneseq
        %v3010 = vshrl.u32 %v3009, 7
        %v3011 = vsub.s32 %v3008, %v3010
        %v3012 = vrot.slane %v2998, %v3011
        %v3013 = vlaneseq
        %v3014 = vshrl.u32 %v3013, 7
        %v3015 = vsub.s32 0, %v3014
        %v3016 = vrot.slane %v3005, %v3015
        %v3017 = vlaneseq
        %v3018 = vshrl.u32 %v3017, 7
        %v3019 = vsub.s32 0, %v3018
        %v3020 = vrot.slane %v3012, %v3019
        %v3023 = vmul.f32 %v551, %v3016
        %v3024 = vmul.f32 %v552, %v3020
        %v3025 = vsel %vm575, %v3023, 0.0
        %3026 = vadd.xlane.f32.xlu0 %v3025
        %v3027 = vpop.xlane.xlu0 %3026
        %v3028 = vsel %vm575, %v3024, 0.0
        %3029 = vadd.xlane.f32.xlu0 %v3028
        %v3030 = vpop.xlane.xlu0 %3029
        %v3031 = vadd.f32 %v3027, %v1008
        %v3032 = vadd.f32 %v3030, %v1015
        %3035 = vset.pattern.permute.xlu0 0
        %3036 = vperm.xlu0 %3035, %v3031
        %v3037 = vpop.permute.xlu0 %3036
        %3038 = vset.pattern.permute.xlu0 0
        %3039 = vperm.xlu0 %3038, %v3032
        %v3040 = vpop.permute.xlu0 %3039
        %v3041 = vlaneseq
        %v3042 = vshrl.u32 %v3041, 7
        %v3043 = vsub.s32 %v1029, %v3042
        %v3044 = vrot.slane %v3037, %v3043
        %v3045 = vlaneseq
        %v3046 = vshrl.u32 %v3045, 7
        %v3047 = vsub.s32 %v1029, %v3046
        %v3048 = vrot.slane %v3040, %v3047
        %v3049 = vsel %vm1038, %v3048, %v3044
        %v3051 = vsel %vm1041, %v3049, -inf
        %3052 = vmax.xlane.f32.xlu0 %v3051
        %v3053 = vpop.xlane.xlu0 %3052
        %v3055 = vlaneseq
        %v3056 = vshrl.u32 %v3055, 7
        %v3057 = vsub.s32 0, %v3056
        %v3058 = vrot.slane %v3053, %v3057
        %v3059 = vlaneseq
        %v3060 = vshrl.u32 %v3059, 7
        %v3061 = vsub.s32 1, %v3060
        %v3062 = vrot.slane %v3053, %v3061
        %v3065 = vsub.f32 %v3031, %v3058
        %v3066 = vsub.f32 %v3032, %v3062
        %v3067 = vmul.f32 %v3065, 1.442695
        %v3068 = vpow.pop %v3067
        %v3069 = vmul.f32 %v3066, 1.442695
        %v3070 = vpow.pop %v3069
        %3073 = vset.pattern.permute.xlu0 0
        %3074 = vperm.xlu0 %3073, %v3068
        %v3075 = vpop.permute.xlu0 %3074
        %3076 = vset.pattern.permute.xlu0 0
        %3077 = vperm.xlu0 %3076, %v3070
        %v3078 = vpop.permute.xlu0 %3077
        %v3079 = vlaneseq
        %v3080 = vshrl.u32 %v3079, 7
        %v3081 = vsub.s32 %v1029, %v3080
        %v3082 = vrot.slane %v3075, %v3081
        %v3083 = vlaneseq
        %v3084 = vshrl.u32 %v3083, 7
        %v3085 = vsub.s32 %v1029, %v3084
        %v3086 = vrot.slane %v3078, %v3085
        %v3087 = vsel %vm1038, %v3086, %v3082
        %v3089 = vsel %vm1041, %v3087, 0.0
        %3090 = vadd.xlane.f32.xlu0 %v3089
        %v3091 = vpop.xlane.xlu0 %3090
        %v3093 = vlaneseq
        %v3094 = vshrl.u32 %v3093, 7
        %v3095 = vsub.s32 0, %v3094
        %v3096 = vrot.slane %v3091, %v3095
        %v3097 = vlaneseq
        %v3098 = vshrl.u32 %v3097, 7
        %v3099 = vsub.s32 1, %v3098
        %v3100 = vrot.slane %v3091, %v3099
        %v3103 = vrcp.pop %v3096
        %v3104 = vmul.f32 %v3068, %v3103
        %v3105 = vrcp.pop %v3100
        %v3106 = vmul.f32 %v3070, %v3105
        %3108 = vset.pattern.permute.xlu0 0
        %3109 = vperm.xlu0 %3108, %v3104
        %v3110 = vpop.permute.xlu0 %3109
        %3113 = vset.pattern.permute.xlu0 0
        %3114 = vperm.xlu0 %3113, %v3106
        %v3115 = vpop.permute.xlu0 %3114
        %v3117 = vmul.f32 %v3110, %v551
        %v3118 = vmul.f32 %v3115, %v552
        %v3119 = vsel %vm575, %v3117, 0.0
        %v3120 = vrot.slane %v3119, 4
        %v3121 = vadd.f32 %v3119, %v3120
        %v3122 = vrot.slane %v3121, 2
        %v3123 = vadd.f32 %v3121, %v3122
        %v3124 = vrot.slane %v3123, 1
        %v3125 = vadd.f32 %v3123, %v3124
        %v3126 = vsel %vm575, %v3118, 0.0
        %v3127 = vrot.slane %v3126, 4
        %v3128 = vadd.f32 %v3126, %v3127
        %v3129 = vrot.slane %v3128, 2
        %v3130 = vadd.f32 %v3128, %v3129
        %v3131 = vrot.slane %v3130, 1
        %v3132 = vadd.f32 %v3130, %v3131
        %v3133 = vpack.c.bf16 %v3125, %v3125
        %v3134 = vpack.c.bf16 %v3132, %v3132
        %v3135 = vld [vmem:[%s9] sm:$0xf]
        %v3136 = vld [vmem:[%s9 + $0x4] sm:$0xf]
        %v3137 = vld [vmem:[%s9 + $0x8] sm:$0xf]
        %v3138 = vld [vmem:[%s9 + $0xc] sm:$0xf]
        %v3139 = vld [vmem:[#allocation20] sm:$0xf]
        %v3140 = vld [vmem:[#allocation20 + $0x4] sm:$0xf]
        %v3141 = vld [vmem:[#allocation20 + $0x8] sm:$0xf]
        %v3142 = vld [vmem:[#allocation20 + $0xc] sm:$0xf]
        %v3147 = vunpack.c.l.b16 %v3139
        %v3148 = vunpack.c.l.b16 %v3140
        %v3149 = vunpack.c.l.b16 %v3141
        %v3150 = vunpack.c.l.b16 %v3142
        %v3151 = vpack.c.b16 %v3148, %v3147
        %v3152 = vpack.c.b16 %v3150, %v3149
        %3155 = vmatprep.subr.bf16.mxu0 0
        %3156 = vmatpush1.bf16.msra.mxu0 0
        %3157 = vmatprep.subr.bf16.mxu0 0
        %3158 = vmatpush1.bf16.msra.mxu0 0
        %3159 = vmatprep.subr.bf16.mxu0 0
        %3160 = vmatpush1.bf16.msra.mxu0 0
        %3161 = vmatprep.subr.bf16.mxu0 0
        %3162 = vmatpush1.bf16.msra.mxu0 0
        %3163 = vmatprep.subr.bf16.mxu0 0
        %3164 = vmatpush1.bf16.msra.mxu0 0
        %3165 = vmatprep.subr.bf16.mxu0 0
        %3166 = vmatpush1.bf16.msra.mxu0 0
        %3167 = vmatprep.subr.bf16.mxu0 0
        %3168 = vmatpush1.bf16.msra.mxu0 %v3152
        %3169 = vmatprep.subr.bf16.mxu0 0
        %3170 = vmatpush1.bf16.msra.mxu0 %v3151
        %3171 = vmatprep.subr.bf16.mxu0 0
        %3172 = vmatpush2.bf16.msra.mxu0 0
        %3173 = vmatprep.subr.bf16.mxu0 0
        %3174 = vmatpush2.bf16.msra.mxu0 0
        %3175 = vmatprep.subr.bf16.mxu0 0
        %3176 = vmatpush2.bf16.msra.mxu0 0
        %3177 = vmatprep.subr.bf16.mxu0 0
        %3178 = vmatpush2.bf16.msra.mxu0 0
        %3179 = vmatprep.subr.bf16.mxu0 0
        %3180 = vmatpush2.bf16.msra.mxu0 0
        %3181 = vmatprep.subr.bf16.mxu0 0
        %3182 = vmatpush2.bf16.msra.mxu0 0
        %3183 = vmatprep.subr.bf16.mxu0 0
        %3184 = vmatpush2.bf16.msra.mxu0 0
        %3185 = vmatprep.subr.bf16.mxu0 0
        %3186 = vmatpush2.bf16.msra.mxu0 0
        %3187 = vmatprep.mubr.bf16.mxu0 0
        %3188 = vmatmul.mubr.bf16.gmra.mxu0 %v2948
        %v3189 = vpop.f32.mrf.mxu0
        %v3190 = vadd.f32 0.0, %v3189
        %v3191 = vpop.f32.mrf.mxu0
        %v3192 = vpop.f32.mrf.mxu0
        %v3193 = vpop.f32.mrf.mxu0
        %3194 = vdwg.mxu0
        %v3197 = vunpack.c.l.b16 %v3133
        %v3198 = vunpack.c.l.b16 %v3134
        %v3199 = vsel %vm1038, %v3198, %v3197
        %v3200 = vpack.c.b16 %v3199, %v3199
        %v3205 = vunpack.c.l.b16 %v3135
        %v3206 = vunpack.c.l.b16 %v3136
        %v3207 = vunpack.c.l.b16 %v3137
        %v3208 = vunpack.c.l.b16 %v3138
        %v3209 = vpack.c.b16 %v3206, %v3205
        %v3210 = vpack.c.b16 %v3208, %v3207
        %v3214 = vsel %vm575, %v3200, 0
        %3216 = vmatprep.subr.bf16.mxu0 0
        %3217 = vmatpush1.bf16.msra.mxu0 0
        %3218 = vmatprep.subr.bf16.mxu0 0
        %3219 = vmatpush1.bf16.msra.mxu0 0
        %3220 = vmatprep.subr.bf16.mxu0 0
        %3221 = vmatpush1.bf16.msra.mxu0 0
        %3222 = vmatprep.subr.bf16.mxu0 0
        %3223 = vmatpush1.bf16.msra.mxu0 0
        %3224 = vmatprep.subr.bf16.mxu0 0
        %3225 = vmatpush1.bf16.msra.mxu0 0
        %3226 = vmatprep.subr.bf16.mxu0 0
        %3227 = vmatpush1.bf16.msra.mxu0 0
        %3228 = vmatprep.subr.bf16.mxu0 0
        %3229 = vmatpush1.bf16.msra.mxu0 %v3210
        %3230 = vmatprep.subr.bf16.mxu0 0
        %3231 = vmatpush1.bf16.msra.mxu0 %v3209
        %3232 = vmatprep.subr.bf16.mxu0 0
        %3233 = vmatpush2.bf16.msra.mxu0 0
        %3234 = vmatprep.subr.bf16.mxu0 0
        %3235 = vmatpush2.bf16.msra.mxu0 0
        %3236 = vmatprep.subr.bf16.mxu0 0
        %3237 = vmatpush2.bf16.msra.mxu0 0
        %3238 = vmatprep.subr.bf16.mxu0 0
        %3239 = vmatpush2.bf16.msra.mxu0 0
        %3240 = vmatprep.subr.bf16.mxu0 0
        %3241 = vmatpush2.bf16.msra.mxu0 0
        %3242 = vmatprep.subr.bf16.mxu0 0
        %3243 = vmatpush2.bf16.msra.mxu0 0
        %3244 = vmatprep.subr.bf16.mxu0 0
        %3245 = vmatpush2.bf16.msra.mxu0 0
        %3246 = vmatprep.subr.bf16.mxu0 0
        %3247 = vmatpush2.bf16.msra.mxu0 0
        %3248 = vmatprep.mubr.bf16.mxu0 0
        %3249 = vmatmul.mubr.bf16.gmra.mxu0 %v3214
        %v3250 = vpop.f32.mrf.mxu0
        %v3251 = vadd.f32 %v3190, %v3250
        %v3252 = vpop.f32.mrf.mxu0
        %v3253 = vpop.f32.mrf.mxu0
        %v3254 = vpop.f32.mrf.mxu0
        %3255 = vdwg.mxu0
        %v3256 = vtanh.pop %v3251
        %3257 = vst.msk [vmem:[#allocation4] sm:$0x3] %vm713, %v3256
        %s3258 = scalar_lea.vmem %s533, 6 [#allocation22]
        %3259 = vst.msk [vmem:[%s3258] sm:$0x3] %vm713, %v3256
        %s3260 = sand.u32 %s277, 1
        %s3261 = scalar_lea.sflag [#allocation7], %s3260
        %s3262 = sand.u32 %s277, 1
        %s3263 = smul.addr %s3262, 8
        %s3264 = scalar_lea.vmem [#allocation22], %s3263
        // Predicated region
        $region109: #{tpu_custom_call.1} parent=63 // pred_check
          %p3265 = pneg %p287
        $region110: #{tpu_custom_call.1} parent=63 // pred_check_branch
          %3267 = sbr.rel (%p3265) target = $region112
        $region111: #{tpu_custom_call.1} parent=63 // pred_region
          %s3268 = smul.u32 4, %s33
          %s3270 = ssub.s32 128, 128
          %3271 = vsyncadd %s3261, %s3270
          %s3272 = smul.addr %s3268, 32
          %s3273 = scalar_lea.hbm %s11, %s3272
          %s3274 = sshll.u32 %s3264, 4
          %s3275 = int_to_ptr.vmem [resolvable:$true] %s3274
          %3280 = dma.vmem_to_hbm [thread:$0]  %s3275, 128, %s3273, %s3261, 32, 32, 2
        $region112: #{tpu_custom_call.1} parent=63 // pred_fallthru
          _
      $region64: #{tpu_custom_call.1} parent=5 // pred_fallthru
        _
      %p3281 = scmp.le.s32.totalorder 2, %s28
      // Predicated region
      $region113: #{tpu_custom_call.1} parent=5 // pred_check
        %p3282 = pneg %p3281
      $region114: #{tpu_custom_call.1} parent=5 // pred_check_branch
        %3284 = sbr.rel (%p3282) target = $region116
      $region115: #{tpu_custom_call.1} parent=5 // pred_region
        %s3285 = ssub.s32 %s28, 2
        // Predicated region
        $region117: #{tpu_custom_call.1} parent=115 // pred_check
          %p3286 = pneg %p293
        $region118: #{tpu_custom_call.1} parent=115 // pred_check_branch
          %3288 = sbr.rel (%p3286) target = $region120
        $region119: #{tpu_custom_call.1} parent=115 // pred_region
          %s3289 = sand.u32 %s278, 1
          %s3290 = scalar_lea.sflag [#allocation7], %s3289
          %s3291 = sand.u32 %s278, 1
          %s3292 = smul.addr %s3291, 8
          %s3293 = scalar_lea.vmem [#allocation22], %s3292
          %3294 = dma.done %s3290, 128
        $region120: #{tpu_custom_call.1} parent=115 // pred_fallthru
          _
      $region116: #{tpu_custom_call.1} parent=5 // pred_fallthru
        _
    $region6: #{tpu_custom_call.1} parent=1 // loop_footer
      %s32 = sadd.s32 1, %s28
    $region7: #{tpu_custom_call.1} parent=1 // loop_footer_branch
      %27 = sbr.rel target = $region3
    $region8: #{tpu_custom_call.1} parent=1 // loop_exit
      _
    %3295 = vsyncpa [#allocation6], 1
    %s3296 = scalar_lea.sflag [#allocation6], 1
    %3297 = vsyncpa %s3296, 1
    %3298 = vsyncpa [#allocation9], 1
    %3299 = vsyncpa [#allocation12], 1
    %3300 = vsyncpa [#allocation15], 1
    %3301 = vsyncpa [#allocation18], 1
    %3302 = vsyncpa [#allocation21], 1
    %3303 = vsyncpa [#allocation7], 1
    %s3304 = scalar_lea.sflag [#allocation7], 1
    %3305 = vsyncpa %s3304, 1

</llo_original>
